<compile_context>
chip_gen: v7x
topology: tpu7x:2x2x1
jax: 0.10.0
libtpu: 0.0.40
codegen_flags: <defaults>
</compile_context>

<pallas_src>
import functools

import jax
import jax.numpy as jnp
from jax.experimental import pallas as pl
from jax.experimental.pallas import tpu as pltpu


# ----------------------------- fused Pallas kernel -----------------------------

def _fused_forward_kernel(*refs, N, T, shifts_per_block, has_down, n_blocks):
    it = iter(refs)
    x_ref = next(it)          # (N*T, C*H*W)  flattened frames
    sw_ref = next(it)         # (C*H*W, E)    spatial projection weight
    sb_ref = next(it)         # (1, E)
    blocks = []
    for i in range(n_blocks):
        w1 = next(it)         # (Kv, C_in, C_out)   valid taps only
        b1 = next(it)         # (1, C_out)
        w2 = next(it)         # (Kv, C_out, C_out)
        b2 = next(it)         # (1, C_out)
        wd = bd = None
        if has_down[i]:
            wd = next(it)     # (C_in, C_out)       1x1 downsample
            bd = next(it)     # (1, C_out)
        blocks.append((w1, b1, w2, b2, wd, bd))
    rw_ref = next(it)         # (C_last, out_dim)
    rb_ref = next(it)         # (1, out_dim)
    o_ref = next(it)          # (N*T, out_dim)

    M = N * T
    f32 = jnp.float32

    # ---- hoisted per-shift causal validity masks (shared by all blocks) -----
    # Flat row r = n*T + t.  Row r is valid for shift s iff t >= s (the source
    # row r - s then belongs to the same batch); otherwise the conv tap reads
    # the zero left-padding -> masked to 0.
    all_shifts = sorted({s for sh in shifts_per_block for s in sh if s > 0})
    row = jax.lax.broadcasted_iota(jnp.int32, (M, 1), 0)
    masks = {}
    for s in all_shifts:
        valid = None
        for n in range(N):
            ok = (row >= n * T + s) & (row < (n + 1) * T)
            valid = ok if valid is None else (valid | ok)
        masks[s] = valid.astype(f32)

    def shift_rows(p, s):
        # out[r] = p[r - s] for r >= s, 0 otherwise; mask zeroes rows whose
        # source would cross a batch boundary == exact causal left padding.
        c = p.shape[1]
        shifted = jnp.concatenate(
            [jnp.zeros((s, c), f32), p[:M - s, :]], axis=0)
        return shifted * masks[s]

    def causal_conv(h, w_ref, b_ref, shifts, relu):
        # Dilated causal Conv1d:  y[t] = b + sum_j w_j @ h[t - s_j]  (h[<0]=0).
        # Shift is applied AFTER the channel matmul (it commutes with the
        # right multiplication), so shifts act on the narrower C_out arrays.
        acc = None
        for j, s in enumerate(shifts):
            p = jnp.dot(h, w_ref[j], preferred_element_type=f32)
            if s > 0:
                p = shift_rows(p, s)
            acc = p if acc is None else acc + p
        acc = acc + b_ref[...]
        if relu:
            acc = jnp.maximum(acc, 0.0)
        return acc

    # ---- spatial stage: flatten + Linear projection --------------------------
    # TODO(synk): the frozen ResNet-50 "ir" Backbone (my_res50 / .pth checkpoint)
    # is not available here; its per-frame embedding is approximated by this
    # flatten + Linear(C*H*W -> embedding_dim) projection.
    h = jnp.dot(x_ref[...], sw_ref[...], preferred_element_type=f32) + sb_ref[...]

    # ---- temporal stage: TCN (eval mode: conv->relu->conv, residual, relu) ---
    for i, (w1, b1, w2, b2, wd, bd) in enumerate(blocks):
        shifts = shifts_per_block[i]
        out = causal_conv(h, w1, b1, shifts, relu=True)
        out = causal_conv(out, w2, b2, shifts, relu=False)
        if wd is not None:             # 1x1 conv downsample on residual path
            res = jnp.dot(h, wd[...], preferred_element_type=f32) + bd[...]
        else:
            res = h
        h = jnp.maximum(out + res, 0.0)

    # ---- regressor ------------------------------------------------------------
    o = jnp.dot(h, rw_ref[...], preferred_element_type=f32) + rb_ref[...]
    o_ref[...] = o.astype(o_ref.dtype)


# ----------------------------- wrapper -----------------------------

def _full_spec(a):
    zeros = (0,) * a.ndim
    return pl.BlockSpec(a.shape, lambda i, zeros=zeros: zeros)


def my_2d1d_forward(x, params):
    """x: (num_batches, length, channel, width, height) -> (N, L, output_dim)."""
    N, T, C, H, W = x.shape
    xf = x.reshape(N * T, C * H * W)

    n_blocks = len(params["tcn"])
    K = params["tcn"][0]["w1"].shape[0]
    out_dim = params["reg_w"].shape[1]

    inputs = [xf, params["spatial_w"], params["spatial_b"].reshape(1, -1)]
    has_down = []
    shifts_per_block = []
    for i, blk in enumerate(params["tcn"]):
        d = 2 ** i                                   # TCN dilation schedule
        # Keep only taps whose causal shift lands inside the sequence; taps
        # that read exclusively the zero padding contribute nothing.
        k_min = next(k for k in range(K) if (K - 1 - k) * d < T)
        shifts = tuple((K - 1 - k) * d for k in range(k_min, K))
        shifts_per_block.append(shifts)
        inputs += [blk["w1"][k_min:], blk["b1"].reshape(1, -1),
                   blk["w2"][k_min:], blk["b2"].reshape(1, -1)]
        if blk["w_down"] is not None:
            inputs += [blk["w_down"], blk["b_down"].reshape(1, -1)]
            has_down.append(True)
        else:
            has_down.append(False)
    inputs += [params["reg_w"], params["reg_b"].reshape(1, -1)]

    kern = functools.partial(
        _fused_forward_kernel, N=N, T=T,
        shifts_per_block=tuple(shifts_per_block),
        has_down=tuple(has_down), n_blocks=n_blocks)

    out = pl.pallas_call(
        kern,
        out_shape=jax.ShapeDtypeStruct((N * T, out_dim), x.dtype),
        grid=(1,),
        in_specs=[_full_spec(a) for a in inputs],
        out_specs=pl.BlockSpec((N * T, out_dim), lambda i: (0, 0)),
        compiler_params=pltpu.CompilerParams(
            dimension_semantics=("arbitrary",)),
    )(*inputs)
    return out.reshape(N, T, out_dim)


# ----------------------------- params init -----------------------------

def init_params(key, *, in_feat, embedding_dim, channels, kernel_size,
                output_dim):
    keys = jax.random.split(key, 4 + 4 * len(channels))
    ki = iter(keys)
    p = {
        "spatial_w": 0.02 * jax.random.normal(next(ki), (in_feat, embedding_dim),
                                              jnp.float32),
        "spatial_b": jnp.zeros((embedding_dim,), jnp.float32),
        "tcn": [],
        "reg_w": 0.1 * jax.random.normal(next(ki), (embedding_dim // 4,
                                                    output_dim), jnp.float32),
        "reg_b": jnp.zeros((output_dim,), jnp.float32),
    }
    c_prev = embedding_dim
    for c_out in channels:
        blk = {
            "w1": 0.1 * jax.random.normal(next(ki),
                                          (kernel_size, c_prev, c_out),
                                          jnp.float32),
            "b1": jnp.zeros((c_out,), jnp.float32),
            "w2": 0.1 * jax.random.normal(next(ki),
                                          (kernel_size, c_out, c_out),
                                          jnp.float32),
            "b2": jnp.zeros((c_out,), jnp.float32),
        }
        if c_prev != c_out:
            blk["w_down"] = 0.1 * jax.random.normal(next(ki), (c_prev, c_out),
                                                    jnp.float32)
            blk["b_down"] = jnp.zeros((c_out,), jnp.float32)
        else:
            blk["w_down"] = None
            blk["b_down"] = None
        p["tcn"].append(blk)
        c_prev = c_out
    return p


# ----------------------------- main -----------------------------

if __name__ == "__main__":
    # x: (num_batches=2, length=8, channel=3, width=16, height=16)
    N, T, C, H, W = 2, 8, 3, 16, 16
    embedding_dim = 32
    channels = [32, 16, 16, 8]          # channels[-1] == embedding_dim // 4
    kernel_size = 5
    output_dim = 1

    key = jax.random.PRNGKey(0)
    kx, kp = jax.random.split(key)
    x = jax.random.normal(kx, (N, T, C, H, W), jnp.float32)
    params = init_params(kp, in_feat=C * H * W, embedding_dim=embedding_dim,
                         channels=channels, kernel_size=kernel_size,
                         output_dim=output_dim)

    out = my_2d1d_forward(x, params)
    jax.block_until_ready(out)
    assert out.shape == (N, T, output_dim), out.shape
    print("KERNEL_OK")
</pallas_src>

<mosaic_0001>
module attributes {stable_mosaic.version = 11 : i64} {
  func.func @_fused_forward_kernel(%arg0: i32, %arg1: memref<16x768xf32, #tpu.memory_space<vmem>>, %arg2: memref<768x32xf32, #tpu.memory_space<vmem>>, %arg3: memref<1x32xf32, #tpu.memory_space<vmem>>, %arg4: memref<5x32x32xf32, #tpu.memory_space<vmem>>, %arg5: memref<1x32xf32, #tpu.memory_space<vmem>>, %arg6: memref<5x32x32xf32, #tpu.memory_space<vmem>>, %arg7: memref<1x32xf32, #tpu.memory_space<vmem>>, %arg8: memref<4x32x16xf32, #tpu.memory_space<vmem>>, %arg9: memref<1x16xf32, #tpu.memory_space<vmem>>, %arg10: memref<4x16x16xf32, #tpu.memory_space<vmem>>, %arg11: memref<1x16xf32, #tpu.memory_space<vmem>>, %arg12: memref<32x16xf32, #tpu.memory_space<vmem>>, %arg13: memref<1x16xf32, #tpu.memory_space<vmem>>, %arg14: memref<2x16x16xf32, #tpu.memory_space<vmem>>, %arg15: memref<1x16xf32, #tpu.memory_space<vmem>>, %arg16: memref<2x16x16xf32, #tpu.memory_space<vmem>>, %arg17: memref<1x16xf32, #tpu.memory_space<vmem>>, %arg18: memref<1x16x8xf32, #tpu.memory_space<vmem>>, %arg19: memref<1x8xf32, #tpu.memory_space<vmem>>, %arg20: memref<1x8x8xf32, #tpu.memory_space<vmem>>, %arg21: memref<1x8xf32, #tpu.memory_space<vmem>>, %arg22: memref<16x8xf32, #tpu.memory_space<vmem>>, %arg23: memref<1x8xf32, #tpu.memory_space<vmem>>, %arg24: memref<8x1xf32, #tpu.memory_space<vmem>>, %arg25: memref<1x1xf32, #tpu.memory_space<vmem>>, %arg26: memref<16x1xf32, #tpu.memory_space<vmem>>) attributes {dimension_semantics = [#tpu.dimension_semantics<arbitrary>], iteration_bounds = array<i64: 1>, scalar_prefetch = 0 : i64, scratch_operands = 0 : i64, tpu.core_type = #tpu.core_type<tc>, window_params = [{pipeline_mode = #tpu.pipeline_mode<synchronous>, transform_indices = @transform_0, window_bounds = array<i64: 16, 768>}, {pipeline_mode = #tpu.pipeline_mode<synchronous>, transform_indices = @transform_1, window_bounds = array<i64: 768, 32>}, {pipeline_mode = #tpu.pipeline_mode<synchronous>, transform_indices = @transform_2, window_bounds = array<i64: 1, 32>}, {pipeline_mode = #tpu.pipeline_mode<synchronous>, transform_indices = @transform_3, window_bounds = array<i64: 5, 32, 32>}, {pipeline_mode = #tpu.pipeline_mode<synchronous>, transform_indices = @transform_4, window_bounds = array<i64: 1, 32>}, {pipeline_mode = #tpu.pipeline_mode<synchronous>, transform_indices = @transform_5, window_bounds = array<i64: 5, 32, 32>}, {pipeline_mode = #tpu.pipeline_mode<synchronous>, transform_indices = @transform_6, window_bounds = array<i64: 1, 32>}, {pipeline_mode = #tpu.pipeline_mode<synchronous>, transform_indices = @transform_7, window_bounds = array<i64: 4, 32, 16>}, {pipeline_mode = #tpu.pipeline_mode<synchronous>, transform_indices = @transform_8, window_bounds = array<i64: 1, 16>}, {pipeline_mode = #tpu.pipeline_mode<synchronous>, transform_indices = @transform_9, window_bounds = array<i64: 4, 16, 16>}, {pipeline_mode = #tpu.pipeline_mode<synchronous>, transform_indices = @transform_10, window_bounds = array<i64: 1, 16>}, {pipeline_mode = #tpu.pipeline_mode<synchronous>, transform_indices = @transform_11, window_bounds = array<i64: 32, 16>}, {pipeline_mode = #tpu.pipeline_mode<synchronous>, transform_indices = @transform_12, window_bounds = array<i64: 1, 16>}, {pipeline_mode = #tpu.pipeline_mode<synchronous>, transform_indices = @transform_13, window_bounds = array<i64: 2, 16, 16>}, {pipeline_mode = #tpu.pipeline_mode<synchronous>, transform_indices = @transform_14, window_bounds = array<i64: 1, 16>}, {pipeline_mode = #tpu.pipeline_mode<synchronous>, transform_indices = @transform_15, window_bounds = array<i64: 2, 16, 16>}, {pipeline_mode = #tpu.pipeline_mode<synchronous>, transform_indices = @transform_16, window_bounds = array<i64: 1, 16>}, {pipeline_mode = #tpu.pipeline_mode<synchronous>, transform_indices = @transform_17, window_bounds = array<i64: 1, 16, 8>}, {pipeline_mode = #tpu.pipeline_mode<synchronous>, transform_indices = @transform_18, window_bounds = array<i64: 1, 8>}, {pipeline_mode = #tpu.pipeline_mode<synchronous>, transform_indices = @transform_19, window_bounds = array<i64: 1, 8, 8>}, {pipeline_mode = #tpu.pipeline_mode<synchronous>, transform_indices = @transform_20, window_bounds = array<i64: 1, 8>}, {pipeline_mode = #tpu.pipeline_mode<synchronous>, transform_indices = @transform_21, window_bounds = array<i64: 16, 8>}, {pipeline_mode = #tpu.pipeline_mode<synchronous>, transform_indices = @transform_22, window_bounds = array<i64: 1, 8>}, {pipeline_mode = #tpu.pipeline_mode<synchronous>, transform_indices = @transform_23, window_bounds = array<i64: 8, 1>}, {pipeline_mode = #tpu.pipeline_mode<synchronous>, transform_indices = @transform_24, window_bounds = array<i64: 1, 1>}, {pipeline_mode = #tpu.pipeline_mode<synchronous>, transform_indices = @transform_25, window_bounds = array<i64: 16, 1>}]} {
    %0 = tpu.iota {dimensions = array<i32: 0>} : vector<16x1xi32>
    %c1_i32 = arith.constant 1 : i32
    %1 = vector.broadcast %c1_i32 : i32 to vector<16x1xi32>
    %2 = arith.cmpi sge, %0, %1 : vector<16x1xi32>
    %c8_i32 = arith.constant 8 : i32
    %3 = vector.broadcast %c8_i32 : i32 to vector<16x1xi32>
    %4 = arith.cmpi slt, %0, %3 : vector<16x1xi32>
    %5 = arith.andi %2, %4 : vector<16x1xi1>
    %c9_i32 = arith.constant 9 : i32
    %6 = vector.broadcast %c9_i32 : i32 to vector<16x1xi32>
    %7 = arith.cmpi sge, %0, %6 : vector<16x1xi32>
    %c16_i32 = arith.constant 16 : i32
    %8 = vector.broadcast %c16_i32 : i32 to vector<16x1xi32>
    %9 = arith.cmpi slt, %0, %8 : vector<16x1xi32>
    %10 = arith.andi %7, %9 : vector<16x1xi1>
    %11 = arith.ori %5, %10 : vector<16x1xi1>
    %12 = arith.extui %11 : vector<16x1xi1> to vector<16x1xi32>
    %13 = arith.sitofp %12 : vector<16x1xi32> to vector<16x1xf32>
    %c2_i32 = arith.constant 2 : i32
    %14 = vector.broadcast %c2_i32 : i32 to vector<16x1xi32>
    %15 = arith.cmpi sge, %0, %14 : vector<16x1xi32>
    %c8_i32_0 = arith.constant 8 : i32
    %16 = vector.broadcast %c8_i32_0 : i32 to vector<16x1xi32>
    %17 = arith.cmpi slt, %0, %16 : vector<16x1xi32>
    %18 = arith.andi %15, %17 : vector<16x1xi1>
    %c10_i32 = arith.constant 10 : i32
    %19 = vector.broadcast %c10_i32 : i32 to vector<16x1xi32>
    %20 = arith.cmpi sge, %0, %19 : vector<16x1xi32>
    %c16_i32_1 = arith.constant 16 : i32
    %21 = vector.broadcast %c16_i32_1 : i32 to vector<16x1xi32>
    %22 = arith.cmpi slt, %0, %21 : vector<16x1xi32>
    %23 = arith.andi %20, %22 : vector<16x1xi1>
    %24 = arith.ori %18, %23 : vector<16x1xi1>
    %25 = arith.extui %24 : vector<16x1xi1> to vector<16x1xi32>
    %26 = arith.sitofp %25 : vector<16x1xi32> to vector<16x1xf32>
    %c3_i32 = arith.constant 3 : i32
    %27 = vector.broadcast %c3_i32 : i32 to vector<16x1xi32>
    %28 = arith.cmpi sge, %0, %27 : vector<16x1xi32>
    %c8_i32_2 = arith.constant 8 : i32
    %29 = vector.broadcast %c8_i32_2 : i32 to vector<16x1xi32>
    %30 = arith.cmpi slt, %0, %29 : vector<16x1xi32>
    %31 = arith.andi %28, %30 : vector<16x1xi1>
    %c11_i32 = arith.constant 11 : i32
    %32 = vector.broadcast %c11_i32 : i32 to vector<16x1xi32>
    %33 = arith.cmpi sge, %0, %32 : vector<16x1xi32>
    %c16_i32_3 = arith.constant 16 : i32
    %34 = vector.broadcast %c16_i32_3 : i32 to vector<16x1xi32>
    %35 = arith.cmpi slt, %0, %34 : vector<16x1xi32>
    %36 = arith.andi %33, %35 : vector<16x1xi1>
    %37 = arith.ori %31, %36 : vector<16x1xi1>
    %38 = arith.extui %37 : vector<16x1xi1> to vector<16x1xi32>
    %39 = arith.sitofp %38 : vector<16x1xi32> to vector<16x1xf32>
    %c4_i32 = arith.constant 4 : i32
    %40 = vector.broadcast %c4_i32 : i32 to vector<16x1xi32>
    %41 = arith.cmpi sge, %0, %40 : vector<16x1xi32>
    %c8_i32_4 = arith.constant 8 : i32
    %42 = vector.broadcast %c8_i32_4 : i32 to vector<16x1xi32>
    %43 = arith.cmpi slt, %0, %42 : vector<16x1xi32>
    %44 = arith.andi %41, %43 : vector<16x1xi1>
    %c12_i32 = arith.constant 12 : i32
    %45 = vector.broadcast %c12_i32 : i32 to vector<16x1xi32>
    %46 = arith.cmpi sge, %0, %45 : vector<16x1xi32>
    %c16_i32_5 = arith.constant 16 : i32
    %47 = vector.broadcast %c16_i32_5 : i32 to vector<16x1xi32>
    %48 = arith.cmpi slt, %0, %47 : vector<16x1xi32>
    %49 = arith.andi %46, %48 : vector<16x1xi1>
    %50 = arith.ori %44, %49 : vector<16x1xi1>
    %51 = arith.extui %50 : vector<16x1xi1> to vector<16x1xi32>
    %52 = arith.sitofp %51 : vector<16x1xi32> to vector<16x1xf32>
    %c6_i32 = arith.constant 6 : i32
    %53 = vector.broadcast %c6_i32 : i32 to vector<16x1xi32>
    %54 = arith.cmpi sge, %0, %53 : vector<16x1xi32>
    %c8_i32_6 = arith.constant 8 : i32
    %55 = vector.broadcast %c8_i32_6 : i32 to vector<16x1xi32>
    %56 = arith.cmpi slt, %0, %55 : vector<16x1xi32>
    %57 = arith.andi %54, %56 : vector<16x1xi1>
    %c14_i32 = arith.constant 14 : i32
    %58 = vector.broadcast %c14_i32 : i32 to vector<16x1xi32>
    %59 = arith.cmpi sge, %0, %58 : vector<16x1xi32>
    %c16_i32_7 = arith.constant 16 : i32
    %60 = vector.broadcast %c16_i32_7 : i32 to vector<16x1xi32>
    %61 = arith.cmpi slt, %0, %60 : vector<16x1xi32>
    %62 = arith.andi %59, %61 : vector<16x1xi1>
    %63 = arith.ori %57, %62 : vector<16x1xi1>
    %64 = arith.extui %63 : vector<16x1xi1> to vector<16x1xi32>
    %65 = arith.sitofp %64 : vector<16x1xi32> to vector<16x1xf32>
    %c0 = arith.constant 0 : index
    %c0_8 = arith.constant 0 : index
    %66 = vector.load %arg1[%c0, %c0_8] : memref<16x768xf32, #tpu.memory_space<vmem>>, vector<16x768xf32>
    %c0_9 = arith.constant 0 : index
    %c0_10 = arith.constant 0 : index
    %67 = vector.load %arg2[%c0_9, %c0_10] : memref<768x32xf32, #tpu.memory_space<vmem>>, vector<768x32xf32>
    %cst = arith.constant dense<0.000000e+00> : vector<16x32xf32>
    %68 = tpu.matmul %66, %67, %cst {dimension_numbers = #tpu.dot_dimension_numbers<[1], [0], [0], [1], [0, 0, 1, 1], [], []>} : vector<16x768xf32>, vector<768x32xf32>, vector<16x32xf32> -> vector<16x32xf32>
    %c0_11 = arith.constant 0 : index
    %c0_12 = arith.constant 0 : index
    %69 = vector.load %arg3[%c0_11, %c0_12] : memref<1x32xf32, #tpu.memory_space<vmem>>, vector<1x32xf32>
    %70 = vector.broadcast %69 : vector<1x32xf32> to vector<16x32xf32>
    %71 = arith.addf %68, %70 : vector<16x32xf32>
    %c0_13 = arith.constant 0 : index
    %c0_14 = arith.constant 0 : index
    %c0_15 = arith.constant 0 : index
    %72 = vector.load %arg4[%c0_13, %c0_14, %c0_15] : memref<5x32x32xf32, #tpu.memory_space<vmem>>, vector<1x32x32xf32>
    %73 = vector.shape_cast %72 : vector<1x32x32xf32> to vector<32x32xf32>
    %cst_16 = arith.constant dense<0.000000e+00> : vector<16x32xf32>
    %74 = tpu.matmul %71, %73, %cst_16 {dimension_numbers = #tpu.dot_dimension_numbers<[1], [0], [0], [1], [0, 0, 1, 1], [], []>} : vector<16x32xf32>, vector<32x32xf32>, vector<16x32xf32> -> vector<16x32xf32>
    %cst_17 = arith.constant 0.000000e+00 : f32
    %75 = vector.broadcast %cst_17 : f32 to vector<4x32xf32>
    %76 = vector.extract_strided_slice %74 {offsets = [0, 0], sizes = [12, 32], strides = [1, 1]} : vector<16x32xf32> to vector<12x32xf32>
    %77 = tpu.concatenate %75, %76 in 0 : vector<4x32xf32>, vector<12x32xf32> -> vector<16x32xf32>
    %78 = vector.broadcast %52 : vector<16x1xf32> to vector<16x32xf32>
    %79 = arith.mulf %77, %78 : vector<16x32xf32>
    %c1 = arith.constant 1 : index
    %c0_18 = arith.constant 0 : index
    %c0_19 = arith.constant 0 : index
    %80 = vector.load %arg4[%c1, %c0_18, %c0_19] : memref<5x32x32xf32, #tpu.memory_space<vmem>>, vector<1x32x32xf32>
    %81 = vector.shape_cast %80 : vector<1x32x32xf32> to vector<32x32xf32>
    %cst_20 = arith.constant dense<0.000000e+00> : vector<16x32xf32>
    %82 = tpu.matmul %71, %81, %cst_20 {dimension_numbers = #tpu.dot_dimension_numbers<[1], [0], [0], [1], [0, 0, 1, 1], [], []>} : vector<16x32xf32>, vector<32x32xf32>, vector<16x32xf32> -> vector<16x32xf32>
    %cst_21 = arith.constant 0.000000e+00 : f32
    %83 = vector.broadcast %cst_21 : f32 to vector<3x32xf32>
    %84 = vector.extract_strided_slice %82 {offsets = [0, 0], sizes = [13, 32], strides = [1, 1]} : vector<16x32xf32> to vector<13x32xf32>
    %85 = tpu.concatenate %83, %84 in 0 : vector<3x32xf32>, vector<13x32xf32> -> vector<16x32xf32>
    %86 = vector.broadcast %39 : vector<16x1xf32> to vector<16x32xf32>
    %87 = arith.mulf %85, %86 : vector<16x32xf32>
    %88 = arith.addf %79, %87 : vector<16x32xf32>
    %c2 = arith.constant 2 : index
    %c0_22 = arith.constant 0 : index
    %c0_23 = arith.constant 0 : index
    %89 = vector.load %arg4[%c2, %c0_22, %c0_23] : memref<5x32x32xf32, #tpu.memory_space<vmem>>, vector<1x32x32xf32>
    %90 = vector.shape_cast %89 : vector<1x32x32xf32> to vector<32x32xf32>
    %cst_24 = arith.constant dense<0.000000e+00> : vector<16x32xf32>
    %91 = tpu.matmul %71, %90, %cst_24 {dimension_numbers = #tpu.dot_dimension_numbers<[1], [0], [0], [1], [0, 0, 1, 1], [], []>} : vector<16x32xf32>, vector<32x32xf32>, vector<16x32xf32> -> vector<16x32xf32>
    %cst_25 = arith.constant 0.000000e+00 : f32
    %92 = vector.broadcast %cst_25 : f32 to vector<2x32xf32>
    %93 = vector.extract_strided_slice %91 {offsets = [0, 0], sizes = [14, 32], strides = [1, 1]} : vector<16x32xf32> to vector<14x32xf32>
    %94 = tpu.concatenate %92, %93 in 0 : vector<2x32xf32>, vector<14x32xf32> -> vector<16x32xf32>
    %95 = vector.broadcast %26 : vector<16x1xf32> to vector<16x32xf32>
    %96 = arith.mulf %94, %95 : vector<16x32xf32>
    %97 = arith.addf %88, %96 : vector<16x32xf32>
    %c3 = arith.constant 3 : index
    %c0_26 = arith.constant 0 : index
    %c0_27 = arith.constant 0 : index
    %98 = vector.load %arg4[%c3, %c0_26, %c0_27] : memref<5x32x32xf32, #tpu.memory_space<vmem>>, vector<1x32x32xf32>
    %99 = vector.shape_cast %98 : vector<1x32x32xf32> to vector<32x32xf32>
    %cst_28 = arith.constant dense<0.000000e+00> : vector<16x32xf32>
    %100 = tpu.matmul %71, %99, %cst_28 {dimension_numbers = #tpu.dot_dimension_numbers<[1], [0], [0], [1], [0, 0, 1, 1], [], []>} : vector<16x32xf32>, vector<32x32xf32>, vector<16x32xf32> -> vector<16x32xf32>
    %cst_29 = arith.constant 0.000000e+00 : f32
    %101 = vector.broadcast %cst_29 : f32 to vector<1x32xf32>
    %102 = vector.extract_strided_slice %100 {offsets = [0, 0], sizes = [15, 32], strides = [1, 1]} : vector<16x32xf32> to vector<15x32xf32>
    %103 = tpu.concatenate %101, %102 in 0 : vector<1x32xf32>, vector<15x32xf32> -> vector<16x32xf32>
    %104 = vector.broadcast %13 : vector<16x1xf32> to vector<16x32xf32>
    %105 = arith.mulf %103, %104 : vector<16x32xf32>
    %106 = arith.addf %97, %105 : vector<16x32xf32>
    %c4 = arith.constant 4 : index
    %c0_30 = arith.constant 0 : index
    %c0_31 = arith.constant 0 : index
    %107 = vector.load %arg4[%c4, %c0_30, %c0_31] : memref<5x32x32xf32, #tpu.memory_space<vmem>>, vector<1x32x32xf32>
    %108 = vector.shape_cast %107 : vector<1x32x32xf32> to vector<32x32xf32>
    %cst_32 = arith.constant dense<0.000000e+00> : vector<16x32xf32>
    %109 = tpu.matmul %71, %108, %cst_32 {dimension_numbers = #tpu.dot_dimension_numbers<[1], [0], [0], [1], [0, 0, 1, 1], [], []>} : vector<16x32xf32>, vector<32x32xf32>, vector<16x32xf32> -> vector<16x32xf32>
    %110 = arith.addf %106, %109 : vector<16x32xf32>
    %c0_33 = arith.constant 0 : index
    %c0_34 = arith.constant 0 : index
    %111 = vector.load %arg5[%c0_33, %c0_34] : memref<1x32xf32, #tpu.memory_space<vmem>>, vector<1x32xf32>
    %112 = vector.broadcast %111 : vector<1x32xf32> to vector<16x32xf32>
    %113 = arith.addf %110, %112 : vector<16x32xf32>
    %cst_35 = arith.constant 0.000000e+00 : f32
    %114 = vector.broadcast %cst_35 : f32 to vector<16x32xf32>
    %115 = arith.maximumf %113, %114 : vector<16x32xf32>
    %c0_36 = arith.constant 0 : index
    %c0_37 = arith.constant 0 : index
    %c0_38 = arith.constant 0 : index
    %116 = vector.load %arg6[%c0_36, %c0_37, %c0_38] : memref<5x32x32xf32, #tpu.memory_space<vmem>>, vector<1x32x32xf32>
    %117 = vector.shape_cast %116 : vector<1x32x32xf32> to vector<32x32xf32>
    %cst_39 = arith.constant dense<0.000000e+00> : vector<16x32xf32>
    %118 = tpu.matmul %115, %117, %cst_39 {dimension_numbers = #tpu.dot_dimension_numbers<[1], [0], [0], [1], [0, 0, 1, 1], [], []>} : vector<16x32xf32>, vector<32x32xf32>, vector<16x32xf32> -> vector<16x32xf32>
    %cst_40 = arith.constant 0.000000e+00 : f32
    %119 = vector.broadcast %cst_40 : f32 to vector<4x32xf32>
    %120 = vector.extract_strided_slice %118 {offsets = [0, 0], sizes = [12, 32], strides = [1, 1]} : vector<16x32xf32> to vector<12x32xf32>
    %121 = tpu.concatenate %119, %120 in 0 : vector<4x32xf32>, vector<12x32xf32> -> vector<16x32xf32>
    %122 = vector.broadcast %52 : vector<16x1xf32> to vector<16x32xf32>
    %123 = arith.mulf %121, %122 : vector<16x32xf32>
    %c1_41 = arith.constant 1 : index
    %c0_42 = arith.constant 0 : index
    %c0_43 = arith.constant 0 : index
    %124 = vector.load %arg6[%c1_41, %c0_42, %c0_43] : memref<5x32x32xf32, #tpu.memory_space<vmem>>, vector<1x32x32xf32>
    %125 = vector.shape_cast %124 : vector<1x32x32xf32> to vector<32x32xf32>
    %cst_44 = arith.constant dense<0.000000e+00> : vector<16x32xf32>
    %126 = tpu.matmul %115, %125, %cst_44 {dimension_numbers = #tpu.dot_dimension_numbers<[1], [0], [0], [1], [0, 0, 1, 1], [], []>} : vector<16x32xf32>, vector<32x32xf32>, vector<16x32xf32> -> vector<16x32xf32>
    %cst_45 = arith.constant 0.000000e+00 : f32
    %127 = vector.broadcast %cst_45 : f32 to vector<3x32xf32>
    %128 = vector.extract_strided_slice %126 {offsets = [0, 0], sizes = [13, 32], strides = [1, 1]} : vector<16x32xf32> to vector<13x32xf32>
    %129 = tpu.concatenate %127, %128 in 0 : vector<3x32xf32>, vector<13x32xf32> -> vector<16x32xf32>
    %130 = vector.broadcast %39 : vector<16x1xf32> to vector<16x32xf32>
    %131 = arith.mulf %129, %130 : vector<16x32xf32>
    %132 = arith.addf %123, %131 : vector<16x32xf32>
    %c2_46 = arith.constant 2 : index
    %c0_47 = arith.constant 0 : index
    %c0_48 = arith.constant 0 : index
    %133 = vector.load %arg6[%c2_46, %c0_47, %c0_48] : memref<5x32x32xf32, #tpu.memory_space<vmem>>, vector<1x32x32xf32>
    %134 = vector.shape_cast %133 : vector<1x32x32xf32> to vector<32x32xf32>
    %cst_49 = arith.constant dense<0.000000e+00> : vector<16x32xf32>
    %135 = tpu.matmul %115, %134, %cst_49 {dimension_numbers = #tpu.dot_dimension_numbers<[1], [0], [0], [1], [0, 0, 1, 1], [], []>} : vector<16x32xf32>, vector<32x32xf32>, vector<16x32xf32> -> vector<16x32xf32>
    %cst_50 = arith.constant 0.000000e+00 : f32
    %136 = vector.broadcast %cst_50 : f32 to vector<2x32xf32>
    %137 = vector.extract_strided_slice %135 {offsets = [0, 0], sizes = [14, 32], strides = [1, 1]} : vector<16x32xf32> to vector<14x32xf32>
    %138 = tpu.concatenate %136, %137 in 0 : vector<2x32xf32>, vector<14x32xf32> -> vector<16x32xf32>
    %139 = vector.broadcast %26 : vector<16x1xf32> to vector<16x32xf32>
    %140 = arith.mulf %138, %139 : vector<16x32xf32>
    %141 = arith.addf %132, %140 : vector<16x32xf32>
    %c3_51 = arith.constant 3 : index
    %c0_52 = arith.constant 0 : index
    %c0_53 = arith.constant 0 : index
    %142 = vector.load %arg6[%c3_51, %c0_52, %c0_53] : memref<5x32x32xf32, #tpu.memory_space<vmem>>, vector<1x32x32xf32>
    %143 = vector.shape_cast %142 : vector<1x32x32xf32> to vector<32x32xf32>
    %cst_54 = arith.constant dense<0.000000e+00> : vector<16x32xf32>
    %144 = tpu.matmul %115, %143, %cst_54 {dimension_numbers = #tpu.dot_dimension_numbers<[1], [0], [0], [1], [0, 0, 1, 1], [], []>} : vector<16x32xf32>, vector<32x32xf32>, vector<16x32xf32> -> vector<16x32xf32>
    %cst_55 = arith.constant 0.000000e+00 : f32
    %145 = vector.broadcast %cst_55 : f32 to vector<1x32xf32>
    %146 = vector.extract_strided_slice %144 {offsets = [0, 0], sizes = [15, 32], strides = [1, 1]} : vector<16x32xf32> to vector<15x32xf32>
    %147 = tpu.concatenate %145, %146 in 0 : vector<1x32xf32>, vector<15x32xf32> -> vector<16x32xf32>
    %148 = vector.broadcast %13 : vector<16x1xf32> to vector<16x32xf32>
    %149 = arith.mulf %147, %148 : vector<16x32xf32>
    %150 = arith.addf %141, %149 : vector<16x32xf32>
    %c4_56 = arith.constant 4 : index
    %c0_57 = arith.constant 0 : index
    %c0_58 = arith.constant 0 : index
    %151 = vector.load %arg6[%c4_56, %c0_57, %c0_58] : memref<5x32x32xf32, #tpu.memory_space<vmem>>, vector<1x32x32xf32>
    %152 = vector.shape_cast %151 : vector<1x32x32xf32> to vector<32x32xf32>
    %cst_59 = arith.constant dense<0.000000e+00> : vector<16x32xf32>
    %153 = tpu.matmul %115, %152, %cst_59 {dimension_numbers = #tpu.dot_dimension_numbers<[1], [0], [0], [1], [0, 0, 1, 1], [], []>} : vector<16x32xf32>, vector<32x32xf32>, vector<16x32xf32> -> vector<16x32xf32>
    %154 = arith.addf %150, %153 : vector<16x32xf32>
    %c0_60 = arith.constant 0 : index
    %c0_61 = arith.constant 0 : index
    %155 = vector.load %arg7[%c0_60, %c0_61] : memref<1x32xf32, #tpu.memory_space<vmem>>, vector<1x32xf32>
    %156 = vector.broadcast %155 : vector<1x32xf32> to vector<16x32xf32>
    %157 = arith.addf %154, %156 : vector<16x32xf32>
    %158 = arith.addf %157, %71 : vector<16x32xf32>
    %cst_62 = arith.constant 0.000000e+00 : f32
    %159 = vector.broadcast %cst_62 : f32 to vector<16x32xf32>
    %160 = arith.maximumf %158, %159 : vector<16x32xf32>
    %c0_63 = arith.constant 0 : index
    %c0_64 = arith.constant 0 : index
    %c0_65 = arith.constant 0 : index
    %161 = vector.load %arg8[%c0_63, %c0_64, %c0_65] : memref<4x32x16xf32, #tpu.memory_space<vmem>>, vector<1x32x16xf32>
    %162 = vector.shape_cast %161 : vector<1x32x16xf32> to vector<32x16xf32>
    %cst_66 = arith.constant dense<0.000000e+00> : vector<16x16xf32>
    %163 = tpu.matmul %160, %162, %cst_66 {dimension_numbers = #tpu.dot_dimension_numbers<[1], [0], [0], [1], [0, 0, 1, 1], [], []>} : vector<16x32xf32>, vector<32x16xf32>, vector<16x16xf32> -> vector<16x16xf32>
    %cst_67 = arith.constant 0.000000e+00 : f32
    %164 = vector.broadcast %cst_67 : f32 to vector<6x16xf32>
    %165 = vector.extract_strided_slice %163 {offsets = [0, 0], sizes = [10, 16], strides = [1, 1]} : vector<16x16xf32> to vector<10x16xf32>
    %166 = tpu.concatenate %164, %165 in 0 : vector<6x16xf32>, vector<10x16xf32> -> vector<16x16xf32>
    %167 = vector.broadcast %65 : vector<16x1xf32> to vector<16x16xf32>
    %168 = arith.mulf %166, %167 : vector<16x16xf32>
    %c1_68 = arith.constant 1 : index
    %c0_69 = arith.constant 0 : index
    %c0_70 = arith.constant 0 : index
    %169 = vector.load %arg8[%c1_68, %c0_69, %c0_70] : memref<4x32x16xf32, #tpu.memory_space<vmem>>, vector<1x32x16xf32>
    %170 = vector.shape_cast %169 : vector<1x32x16xf32> to vector<32x16xf32>
    %cst_71 = arith.constant dense<0.000000e+00> : vector<16x16xf32>
    %171 = tpu.matmul %160, %170, %cst_71 {dimension_numbers = #tpu.dot_dimension_numbers<[1], [0], [0], [1], [0, 0, 1, 1], [], []>} : vector<16x32xf32>, vector<32x16xf32>, vector<16x16xf32> -> vector<16x16xf32>
    %cst_72 = arith.constant 0.000000e+00 : f32
    %172 = vector.broadcast %cst_72 : f32 to vector<4x16xf32>
    %173 = vector.extract_strided_slice %171 {offsets = [0, 0], sizes = [12, 16], strides = [1, 1]} : vector<16x16xf32> to vector<12x16xf32>
    %174 = tpu.concatenate %172, %173 in 0 : vector<4x16xf32>, vector<12x16xf32> -> vector<16x16xf32>
    %175 = vector.broadcast %52 : vector<16x1xf32> to vector<16x16xf32>
    %176 = arith.mulf %174, %175 : vector<16x16xf32>
    %177 = arith.addf %168, %176 : vector<16x16xf32>
    %c2_73 = arith.constant 2 : index
    %c0_74 = arith.constant 0 : index
    %c0_75 = arith.constant 0 : index
    %178 = vector.load %arg8[%c2_73, %c0_74, %c0_75] : memref<4x32x16xf32, #tpu.memory_space<vmem>>, vector<1x32x16xf32>
    %179 = vector.shape_cast %178 : vector<1x32x16xf32> to vector<32x16xf32>
    %cst_76 = arith.constant dense<0.000000e+00> : vector<16x16xf32>
    %180 = tpu.matmul %160, %179, %cst_76 {dimension_numbers = #tpu.dot_dimension_numbers<[1], [0], [0], [1], [0, 0, 1, 1], [], []>} : vector<16x32xf32>, vector<32x16xf32>, vector<16x16xf32> -> vector<16x16xf32>
    %cst_77 = arith.constant 0.000000e+00 : f32
    %181 = vector.broadcast %cst_77 : f32 to vector<2x16xf32>
    %182 = vector.extract_strided_slice %180 {offsets = [0, 0], sizes = [14, 16], strides = [1, 1]} : vector<16x16xf32> to vector<14x16xf32>
    %183 = tpu.concatenate %181, %182 in 0 : vector<2x16xf32>, vector<14x16xf32> -> vector<16x16xf32>
    %184 = vector.broadcast %26 : vector<16x1xf32> to vector<16x16xf32>
    %185 = arith.mulf %183, %184 : vector<16x16xf32>
    %186 = arith.addf %177, %185 : vector<16x16xf32>
    %c3_78 = arith.constant 3 : index
    %c0_79 = arith.constant 0 : index
    %c0_80 = arith.constant 0 : index
    %187 = vector.load %arg8[%c3_78, %c0_79, %c0_80] : memref<4x32x16xf32, #tpu.memory_space<vmem>>, vector<1x32x16xf32>
    %188 = vector.shape_cast %187 : vector<1x32x16xf32> to vector<32x16xf32>
    %cst_81 = arith.constant dense<0.000000e+00> : vector<16x16xf32>
    %189 = tpu.matmul %160, %188, %cst_81 {dimension_numbers = #tpu.dot_dimension_numbers<[1], [0], [0], [1], [0, 0, 1, 1], [], []>} : vector<16x32xf32>, vector<32x16xf32>, vector<16x16xf32> -> vector<16x16xf32>
    %190 = arith.addf %186, %189 : vector<16x16xf32>
    %c0_82 = arith.constant 0 : index
    %c0_83 = arith.constant 0 : index
    %191 = vector.load %arg9[%c0_82, %c0_83] : memref<1x16xf32, #tpu.memory_space<vmem>>, vector<1x16xf32>
    %192 = vector.broadcast %191 : vector<1x16xf32> to vector<16x16xf32>
    %193 = arith.addf %190, %192 : vector<16x16xf32>
    %cst_84 = arith.constant 0.000000e+00 : f32
    %194 = vector.broadcast %cst_84 : f32 to vector<16x16xf32>
    %195 = arith.maximumf %193, %194 : vector<16x16xf32>
    %c0_85 = arith.constant 0 : index
    %c0_86 = arith.constant 0 : index
    %c0_87 = arith.constant 0 : index
    %196 = vector.load %arg10[%c0_85, %c0_86, %c0_87] : memref<4x16x16xf32, #tpu.memory_space<vmem>>, vector<1x16x16xf32>
    %197 = vector.shape_cast %196 : vector<1x16x16xf32> to vector<16x16xf32>
    %cst_88 = arith.constant dense<0.000000e+00> : vector<16x16xf32>
    %198 = tpu.matmul %195, %197, %cst_88 {dimension_numbers = #tpu.dot_dimension_numbers<[1], [0], [0], [1], [0, 0, 1, 1], [], []>} : vector<16x16xf32>, vector<16x16xf32>, vector<16x16xf32> -> vector<16x16xf32>
    %cst_89 = arith.constant 0.000000e+00 : f32
    %199 = vector.broadcast %cst_89 : f32 to vector<6x16xf32>
    %200 = vector.extract_strided_slice %198 {offsets = [0, 0], sizes = [10, 16], strides = [1, 1]} : vector<16x16xf32> to vector<10x16xf32>
    %201 = tpu.concatenate %199, %200 in 0 : vector<6x16xf32>, vector<10x16xf32> -> vector<16x16xf32>
    %202 = vector.broadcast %65 : vector<16x1xf32> to vector<16x16xf32>
    %203 = arith.mulf %201, %202 : vector<16x16xf32>
    %c1_90 = arith.constant 1 : index
    %c0_91 = arith.constant 0 : index
    %c0_92 = arith.constant 0 : index
    %204 = vector.load %arg10[%c1_90, %c0_91, %c0_92] : memref<4x16x16xf32, #tpu.memory_space<vmem>>, vector<1x16x16xf32>
    %205 = vector.shape_cast %204 : vector<1x16x16xf32> to vector<16x16xf32>
    %cst_93 = arith.constant dense<0.000000e+00> : vector<16x16xf32>
    %206 = tpu.matmul %195, %205, %cst_93 {dimension_numbers = #tpu.dot_dimension_numbers<[1], [0], [0], [1], [0, 0, 1, 1], [], []>} : vector<16x16xf32>, vector<16x16xf32>, vector<16x16xf32> -> vector<16x16xf32>
    %cst_94 = arith.constant 0.000000e+00 : f32
    %207 = vector.broadcast %cst_94 : f32 to vector<4x16xf32>
    %208 = vector.extract_strided_slice %206 {offsets = [0, 0], sizes = [12, 16], strides = [1, 1]} : vector<16x16xf32> to vector<12x16xf32>
    %209 = tpu.concatenate %207, %208 in 0 : vector<4x16xf32>, vector<12x16xf32> -> vector<16x16xf32>
    %210 = vector.broadcast %52 : vector<16x1xf32> to vector<16x16xf32>
    %211 = arith.mulf %209, %210 : vector<16x16xf32>
    %212 = arith.addf %203, %211 : vector<16x16xf32>
    %c2_95 = arith.constant 2 : index
    %c0_96 = arith.constant 0 : index
    %c0_97 = arith.constant 0 : index
    %213 = vector.load %arg10[%c2_95, %c0_96, %c0_97] : memref<4x16x16xf32, #tpu.memory_space<vmem>>, vector<1x16x16xf32>
    %214 = vector.shape_cast %213 : vector<1x16x16xf32> to vector<16x16xf32>
    %cst_98 = arith.constant dense<0.000000e+00> : vector<16x16xf32>
    %215 = tpu.matmul %195, %214, %cst_98 {dimension_numbers = #tpu.dot_dimension_numbers<[1], [0], [0], [1], [0, 0, 1, 1], [], []>} : vector<16x16xf32>, vector<16x16xf32>, vector<16x16xf32> -> vector<16x16xf32>
    %cst_99 = arith.constant 0.000000e+00 : f32
    %216 = vector.broadcast %cst_99 : f32 to vector<2x16xf32>
    %217 = vector.extract_strided_slice %215 {offsets = [0, 0], sizes = [14, 16], strides = [1, 1]} : vector<16x16xf32> to vector<14x16xf32>
    %218 = tpu.concatenate %216, %217 in 0 : vector<2x16xf32>, vector<14x16xf32> -> vector<16x16xf32>
    %219 = vector.broadcast %26 : vector<16x1xf32> to vector<16x16xf32>
    %220 = arith.mulf %218, %219 : vector<16x16xf32>
    %221 = arith.addf %212, %220 : vector<16x16xf32>
    %c3_100 = arith.constant 3 : index
    %c0_101 = arith.constant 0 : index
    %c0_102 = arith.constant 0 : index
    %222 = vector.load %arg10[%c3_100, %c0_101, %c0_102] : memref<4x16x16xf32, #tpu.memory_space<vmem>>, vector<1x16x16xf32>
    %223 = vector.shape_cast %222 : vector<1x16x16xf32> to vector<16x16xf32>
    %cst_103 = arith.constant dense<0.000000e+00> : vector<16x16xf32>
    %224 = tpu.matmul %195, %223, %cst_103 {dimension_numbers = #tpu.dot_dimension_numbers<[1], [0], [0], [1], [0, 0, 1, 1], [], []>} : vector<16x16xf32>, vector<16x16xf32>, vector<16x16xf32> -> vector<16x16xf32>
    %225 = arith.addf %221, %224 : vector<16x16xf32>
    %c0_104 = arith.constant 0 : index
    %c0_105 = arith.constant 0 : index
    %226 = vector.load %arg11[%c0_104, %c0_105] : memref<1x16xf32, #tpu.memory_space<vmem>>, vector<1x16xf32>
    %227 = vector.broadcast %226 : vector<1x16xf32> to vector<16x16xf32>
    %228 = arith.addf %225, %227 : vector<16x16xf32>
    %c0_106 = arith.constant 0 : index
    %c0_107 = arith.constant 0 : index
    %229 = vector.load %arg12[%c0_106, %c0_107] : memref<32x16xf32, #tpu.memory_space<vmem>>, vector<32x16xf32>
    %cst_108 = arith.constant dense<0.000000e+00> : vector<16x16xf32>
    %230 = tpu.matmul %160, %229, %cst_108 {dimension_numbers = #tpu.dot_dimension_numbers<[1], [0], [0], [1], [0, 0, 1, 1], [], []>} : vector<16x32xf32>, vector<32x16xf32>, vector<16x16xf32> -> vector<16x16xf32>
    %c0_109 = arith.constant 0 : index
    %c0_110 = arith.constant 0 : index
    %231 = vector.load %arg13[%c0_109, %c0_110] : memref<1x16xf32, #tpu.memory_space<vmem>>, vector<1x16xf32>
    %232 = vector.broadcast %231 : vector<1x16xf32> to vector<16x16xf32>
    %233 = arith.addf %230, %232 : vector<16x16xf32>
    %234 = arith.addf %228, %233 : vector<16x16xf32>
    %cst_111 = arith.constant 0.000000e+00 : f32
    %235 = vector.broadcast %cst_111 : f32 to vector<16x16xf32>
    %236 = arith.maximumf %234, %235 : vector<16x16xf32>
    %c0_112 = arith.constant 0 : index
    %c0_113 = arith.constant 0 : index
    %c0_114 = arith.constant 0 : index
    %237 = vector.load %arg14[%c0_112, %c0_113, %c0_114] : memref<2x16x16xf32, #tpu.memory_space<vmem>>, vector<1x16x16xf32>
    %238 = vector.shape_cast %237 : vector<1x16x16xf32> to vector<16x16xf32>
    %cst_115 = arith.constant dense<0.000000e+00> : vector<16x16xf32>
    %239 = tpu.matmul %236, %238, %cst_115 {dimension_numbers = #tpu.dot_dimension_numbers<[1], [0], [0], [1], [0, 0, 1, 1], [], []>} : vector<16x16xf32>, vector<16x16xf32>, vector<16x16xf32> -> vector<16x16xf32>
    %cst_116 = arith.constant 0.000000e+00 : f32
    %240 = vector.broadcast %cst_116 : f32 to vector<4x16xf32>
    %241 = vector.extract_strided_slice %239 {offsets = [0, 0], sizes = [12, 16], strides = [1, 1]} : vector<16x16xf32> to vector<12x16xf32>
    %242 = tpu.concatenate %240, %241 in 0 : vector<4x16xf32>, vector<12x16xf32> -> vector<16x16xf32>
    %243 = vector.broadcast %52 : vector<16x1xf32> to vector<16x16xf32>
    %244 = arith.mulf %242, %243 : vector<16x16xf32>
    %c1_117 = arith.constant 1 : index
    %c0_118 = arith.constant 0 : index
    %c0_119 = arith.constant 0 : index
    %245 = vector.load %arg14[%c1_117, %c0_118, %c0_119] : memref<2x16x16xf32, #tpu.memory_space<vmem>>, vector<1x16x16xf32>
    %246 = vector.shape_cast %245 : vector<1x16x16xf32> to vector<16x16xf32>
    %cst_120 = arith.constant dense<0.000000e+00> : vector<16x16xf32>
    %247 = tpu.matmul %236, %246, %cst_120 {dimension_numbers = #tpu.dot_dimension_numbers<[1], [0], [0], [1], [0, 0, 1, 1], [], []>} : vector<16x16xf32>, vector<16x16xf32>, vector<16x16xf32> -> vector<16x16xf32>
    %248 = arith.addf %244, %247 : vector<16x16xf32>
    %c0_121 = arith.constant 0 : index
    %c0_122 = arith.constant 0 : index
    %249 = vector.load %arg15[%c0_121, %c0_122] : memref<1x16xf32, #tpu.memory_space<vmem>>, vector<1x16xf32>
    %250 = vector.broadcast %249 : vector<1x16xf32> to vector<16x16xf32>
    %251 = arith.addf %248, %250 : vector<16x16xf32>
    %cst_123 = arith.constant 0.000000e+00 : f32
    %252 = vector.broadcast %cst_123 : f32 to vector<16x16xf32>
    %253 = arith.maximumf %251, %252 : vector<16x16xf32>
    %c0_124 = arith.constant 0 : index
    %c0_125 = arith.constant 0 : index
    %c0_126 = arith.constant 0 : index
    %254 = vector.load %arg16[%c0_124, %c0_125, %c0_126] : memref<2x16x16xf32, #tpu.memory_space<vmem>>, vector<1x16x16xf32>
    %255 = vector.shape_cast %254 : vector<1x16x16xf32> to vector<16x16xf32>
    %cst_127 = arith.constant dense<0.000000e+00> : vector<16x16xf32>
    %256 = tpu.matmul %253, %255, %cst_127 {dimension_numbers = #tpu.dot_dimension_numbers<[1], [0], [0], [1], [0, 0, 1, 1], [], []>} : vector<16x16xf32>, vector<16x16xf32>, vector<16x16xf32> -> vector<16x16xf32>
    %cst_128 = arith.constant 0.000000e+00 : f32
    %257 = vector.broadcast %cst_128 : f32 to vector<4x16xf32>
    %258 = vector.extract_strided_slice %256 {offsets = [0, 0], sizes = [12, 16], strides = [1, 1]} : vector<16x16xf32> to vector<12x16xf32>
    %259 = tpu.concatenate %257, %258 in 0 : vector<4x16xf32>, vector<12x16xf32> -> vector<16x16xf32>
    %260 = vector.broadcast %52 : vector<16x1xf32> to vector<16x16xf32>
    %261 = arith.mulf %259, %260 : vector<16x16xf32>
    %c1_129 = arith.constant 1 : index
    %c0_130 = arith.constant 0 : index
    %c0_131 = arith.constant 0 : index
    %262 = vector.load %arg16[%c1_129, %c0_130, %c0_131] : memref<2x16x16xf32, #tpu.memory_space<vmem>>, vector<1x16x16xf32>
    %263 = vector.shape_cast %262 : vector<1x16x16xf32> to vector<16x16xf32>
    %cst_132 = arith.constant dense<0.000000e+00> : vector<16x16xf32>
    %264 = tpu.matmul %253, %263, %cst_132 {dimension_numbers = #tpu.dot_dimension_numbers<[1], [0], [0], [1], [0, 0, 1, 1], [], []>} : vector<16x16xf32>, vector<16x16xf32>, vector<16x16xf32> -> vector<16x16xf32>
    %265 = arith.addf %261, %264 : vector<16x16xf32>
    %c0_133 = arith.constant 0 : index
    %c0_134 = arith.constant 0 : index
    %266 = vector.load %arg17[%c0_133, %c0_134] : memref<1x16xf32, #tpu.memory_space<vmem>>, vector<1x16xf32>
    %267 = vector.broadcast %266 : vector<1x16xf32> to vector<16x16xf32>
    %268 = arith.addf %265, %267 : vector<16x16xf32>
    %269 = arith.addf %268, %236 : vector<16x16xf32>
    %cst_135 = arith.constant 0.000000e+00 : f32
    %270 = vector.broadcast %cst_135 : f32 to vector<16x16xf32>
    %271 = arith.maximumf %269, %270 : vector<16x16xf32>
    %c0_136 = arith.constant 0 : index
    %c0_137 = arith.constant 0 : index
    %c0_138 = arith.constant 0 : index
    %272 = vector.load %arg18[%c0_136, %c0_137, %c0_138] : memref<1x16x8xf32, #tpu.memory_space<vmem>>, vector<1x16x8xf32>
    %273 = vector.shape_cast %272 : vector<1x16x8xf32> to vector<16x8xf32>
    %cst_139 = arith.constant dense<0.000000e+00> : vector<16x8xf32>
    %274 = tpu.matmul %271, %273, %cst_139 {dimension_numbers = #tpu.dot_dimension_numbers<[1], [0], [0], [1], [0, 0, 1, 1], [], []>} : vector<16x16xf32>, vector<16x8xf32>, vector<16x8xf32> -> vector<16x8xf32>
    %c0_140 = arith.constant 0 : index
    %c0_141 = arith.constant 0 : index
    %275 = vector.load %arg19[%c0_140, %c0_141] : memref<1x8xf32, #tpu.memory_space<vmem>>, vector<1x8xf32>
    %276 = vector.broadcast %275 : vector<1x8xf32> to vector<16x8xf32>
    %277 = arith.addf %274, %276 : vector<16x8xf32>
    %cst_142 = arith.constant 0.000000e+00 : f32
    %278 = vector.broadcast %cst_142 : f32 to vector<16x8xf32>
    %279 = arith.maximumf %277, %278 : vector<16x8xf32>
    %c0_143 = arith.constant 0 : index
    %c0_144 = arith.constant 0 : index
    %c0_145 = arith.constant 0 : index
    %280 = vector.load %arg20[%c0_143, %c0_144, %c0_145] : memref<1x8x8xf32, #tpu.memory_space<vmem>>, vector<1x8x8xf32>
    %281 = vector.shape_cast %280 : vector<1x8x8xf32> to vector<8x8xf32>
    %cst_146 = arith.constant dense<0.000000e+00> : vector<16x8xf32>
    %282 = tpu.matmul %279, %281, %cst_146 {dimension_numbers = #tpu.dot_dimension_numbers<[1], [0], [0], [1], [0, 0, 1, 1], [], []>} : vector<16x8xf32>, vector<8x8xf32>, vector<16x8xf32> -> vector<16x8xf32>
    %c0_147 = arith.constant 0 : index
    %c0_148 = arith.constant 0 : index
    %283 = vector.load %arg21[%c0_147, %c0_148] : memref<1x8xf32, #tpu.memory_space<vmem>>, vector<1x8xf32>
    %284 = vector.broadcast %283 : vector<1x8xf32> to vector<16x8xf32>
    %285 = arith.addf %282, %284 : vector<16x8xf32>
    %c0_149 = arith.constant 0 : index
    %c0_150 = arith.constant 0 : index
    %286 = vector.load %arg22[%c0_149, %c0_150] : memref<16x8xf32, #tpu.memory_space<vmem>>, vector<16x8xf32>
    %cst_151 = arith.constant dense<0.000000e+00> : vector<16x8xf32>
    %287 = tpu.matmul %271, %286, %cst_151 {dimension_numbers = #tpu.dot_dimension_numbers<[1], [0], [0], [1], [0, 0, 1, 1], [], []>} : vector<16x16xf32>, vector<16x8xf32>, vector<16x8xf32> -> vector<16x8xf32>
    %c0_152 = arith.constant 0 : index
    %c0_153 = arith.constant 0 : index
    %288 = vector.load %arg23[%c0_152, %c0_153] : memref<1x8xf32, #tpu.memory_space<vmem>>, vector<1x8xf32>
    %289 = vector.broadcast %288 : vector<1x8xf32> to vector<16x8xf32>
    %290 = arith.addf %287, %289 : vector<16x8xf32>
    %291 = arith.addf %285, %290 : vector<16x8xf32>
    %cst_154 = arith.constant 0.000000e+00 : f32
    %292 = vector.broadcast %cst_154 : f32 to vector<16x8xf32>
    %293 = arith.maximumf %291, %292 : vector<16x8xf32>
    %c0_155 = arith.constant 0 : index
    %c0_156 = arith.constant 0 : index
    %294 = vector.load %arg24[%c0_155, %c0_156] : memref<8x1xf32, #tpu.memory_space<vmem>>, vector<8x1xf32>
    %cst_157 = arith.constant dense<0.000000e+00> : vector<16x1xf32>
    %295 = tpu.matmul %293, %294, %cst_157 {dimension_numbers = #tpu.dot_dimension_numbers<[1], [0], [0], [1], [0, 0, 1, 1], [], []>} : vector<16x8xf32>, vector<8x1xf32>, vector<16x1xf32> -> vector<16x1xf32>
    %c0_158 = arith.constant 0 : index
    %c0_159 = arith.constant 0 : index
    %296 = vector.load %arg25[%c0_158, %c0_159] : memref<1x1xf32, #tpu.memory_space<vmem>>, vector<1x1xf32>
    %297 = vector.broadcast %296 : vector<1x1xf32> to vector<16x1xf32>
    %298 = arith.addf %295, %297 : vector<16x1xf32>
    %c0_160 = arith.constant 0 : index
    %c0_161 = arith.constant 0 : index
    %299 = vector.load %arg26[%c0_160, %c0_161] : memref<16x1xf32, #tpu.memory_space<vmem>>, vector<16x1xf32>
    tpu.vector_store %arg26[%c0_160, %c0_161], %298 {strides = array<i32>} : memref<16x1xf32, #tpu.memory_space<vmem>>, vector<16x1xf32>,
    return
  }
  func.func @transform_0(%arg0: i32) -> (i32, i32) {
    %c0_i32 = arith.constant 0 : i32
    %c0_i32_0 = arith.constant 0 : i32
    %c0_i32_1 = arith.constant 0 : i32
    return %c0_i32, %c0_i32_0 : i32, i32
  }
  func.func @transform_1(%arg0: i32) -> (i32, i32) {
    %c0_i32 = arith.constant 0 : i32
    %c0_i32_0 = arith.constant 0 : i32
    %c0_i32_1 = arith.constant 0 : i32
    return %c0_i32, %c0_i32_0 : i32, i32
  }
  func.func @transform_2(%arg0: i32) -> (i32, i32) {
    %c0_i32 = arith.constant 0 : i32
    %c0_i32_0 = arith.constant 0 : i32
    %c0_i32_1 = arith.constant 0 : i32
    return %c0_i32, %c0_i32_0 : i32, i32
  }
  func.func @transform_3(%arg0: i32) -> (i32, i32, i32) {
    %c0_i32 = arith.constant 0 : i32
    %c0_i32_0 = arith.constant 0 : i32
    %c0_i32_1 = arith.constant 0 : i32
    %c0_i32_2 = arith.constant 0 : i32
    return %c0_i32, %c0_i32_0, %c0_i32_1 : i32, i32, i32
  }
  func.func @transform_4(%arg0: i32) -> (i32, i32) {
    %c0_i32 = arith.constant 0 : i32
    %c0_i32_0 = arith.constant 0 : i32
    %c0_i32_1 = arith.constant 0 : i32
    return %c0_i32, %c0_i32_0 : i32, i32
  }
  func.func @transform_5(%arg0: i32) -> (i32, i32, i32) {
    %c0_i32 = arith.constant 0 : i32
    %c0_i32_0 = arith.constant 0 : i32
    %c0_i32_1 = arith.constant 0 : i32
    %c0_i32_2 = arith.constant 0 : i32
    return %c0_i32, %c0_i32_0, %c0_i32_1 : i32, i32, i32
  }
  func.func @transform_6(%arg0: i32) -> (i32, i32) {
    %c0_i32 = arith.constant 0 : i32
    %c0_i32_0 = arith.constant 0 : i32
    %c0_i32_1 = arith.constant 0 : i32
    return %c0_i32, %c0_i32_0 : i32, i32
  }
  func.func @transform_7(%arg0: i32) -> (i32, i32, i32) {
    %c0_i32 = arith.constant 0 : i32
    %c0_i32_0 = arith.constant 0 : i32
    %c0_i32_1 = arith.constant 0 : i32
    %c0_i32_2 = arith.constant 0 : i32
    return %c0_i32, %c0_i32_0, %c0_i32_1 : i32, i32, i32
  }
  func.func @transform_8(%arg0: i32) -> (i32, i32) {
    %c0_i32 = arith.constant 0 : i32
    %c0_i32_0 = arith.constant 0 : i32
    %c0_i32_1 = arith.constant 0 : i32
    return %c0_i32, %c0_i32_0 : i32, i32
  }
  func.func @transform_9(%arg0: i32) -> (i32, i32, i32) {
    %c0_i32 = arith.constant 0 : i32
    %c0_i32_0 = arith.constant 0 : i32
    %c0_i32_1 = arith.constant 0 : i32
    %c0_i32_2 = arith.constant 0 : i32
    return %c0_i32, %c0_i32_0, %c0_i32_1 : i32, i32, i32
  }
  func.func @transform_10(%arg0: i32) -> (i32, i32) {
    %c0_i32 = arith.constant 0 : i32
    %c0_i32_0 = arith.constant 0 : i32
    %c0_i32_1 = arith.constant 0 : i32
    return %c0_i32, %c0_i32_0 : i32, i32
  }
  func.func @transform_11(%arg0: i32) -> (i32, i32) {
    %c0_i32 = arith.constant 0 : i32
    %c0_i32_0 = arith.constant 0 : i32
    %c0_i32_1 = arith.constant 0 : i32
    return %c0_i32, %c0_i32_0 : i32, i32
  }
  func.func @transform_12(%arg0: i32) -> (i32, i32) {
    %c0_i32 = arith.constant 0 : i32
    %c0_i32_0 = arith.constant 0 : i32
    %c0_i32_1 = arith.constant 0 : i32
    return %c0_i32, %c0_i32_0 : i32, i32
  }
  func.func @transform_13(%arg0: i32) -> (i32, i32, i32) {
    %c0_i32 = arith.constant 0 : i32
    %c0_i32_0 = arith.constant 0 : i32
    %c0_i32_1 = arith.constant 0 : i32
    %c0_i32_2 = arith.constant 0 : i32
    return %c0_i32, %c0_i32_0, %c0_i32_1 : i32, i32, i32
  }
  func.func @transform_14(%arg0: i32) -> (i32, i32) {
    %c0_i32 = arith.constant 0 : i32
    %c0_i32_0 = arith.constant 0 : i32
    %c0_i32_1 = arith.constant 0 : i32
    return %c0_i32, %c0_i32_0 : i32, i32
  }
  func.func @transform_15(%arg0: i32) -> (i32, i32, i32) {
    %c0_i32 = arith.constant 0 : i32
    %c0_i32_0 = arith.constant 0 : i32
    %c0_i32_1 = arith.constant 0 : i32
    %c0_i32_2 = arith.constant 0 : i32
    return %c0_i32, %c0_i32_0, %c0_i32_1 : i32, i32, i32
  }
  func.func @transform_16(%arg0: i32) -> (i32, i32) {
    %c0_i32 = arith.constant 0 : i32
    %c0_i32_0 = arith.constant 0 : i32
    %c0_i32_1 = arith.constant 0 : i32
    return %c0_i32, %c0_i32_0 : i32, i32
  }
  func.func @transform_17(%arg0: i32) -> (i32, i32, i32) {
    %c0_i32 = arith.constant 0 : i32
    %c0_i32_0 = arith.constant 0 : i32
    %c0_i32_1 = arith.constant 0 : i32
    %c0_i32_2 = arith.constant 0 : i32
    return %c0_i32, %c0_i32_0, %c0_i32_1 : i32, i32, i32
  }
  func.func @transform_18(%arg0: i32) -> (i32, i32) {
    %c0_i32 = arith.constant 0 : i32
    %c0_i32_0 = arith.constant 0 : i32
    %c0_i32_1 = arith.constant 0 : i32
    return %c0_i32, %c0_i32_0 : i32, i32
  }
  func.func @transform_19(%arg0: i32) -> (i32, i32, i32) {
    %c0_i32 = arith.constant 0 : i32
    %c0_i32_0 = arith.constant 0 : i32
    %c0_i32_1 = arith.constant 0 : i32
    %c0_i32_2 = arith.constant 0 : i32
    return %c0_i32, %c0_i32_0, %c0_i32_1 : i32, i32, i32
  }
  func.func @transform_20(%arg0: i32) -> (i32, i32) {
    %c0_i32 = arith.constant 0 : i32
    %c0_i32_0 = arith.constant 0 : i32
    %c0_i32_1 = arith.constant 0 : i32
    return %c0_i32, %c0_i32_0 : i32, i32
  }
  func.func @transform_21(%arg0: i32) -> (i32, i32) {
    %c0_i32 = arith.constant 0 : i32
    %c0_i32_0 = arith.constant 0 : i32
    %c0_i32_1 = arith.constant 0 : i32
    return %c0_i32, %c0_i32_0 : i32, i32
  }
  func.func @transform_22(%arg0: i32) -> (i32, i32) {
    %c0_i32 = arith.constant 0 : i32
    %c0_i32_0 = arith.constant 0 : i32
    %c0_i32_1 = arith.constant 0 : i32
    return %c0_i32, %c0_i32_0 : i32, i32
  }
  func.func @transform_23(%arg0: i32) -> (i32, i32) {
    %c0_i32 = arith.constant 0 : i32
    %c0_i32_0 = arith.constant 0 : i32
    %c0_i32_1 = arith.constant 0 : i32
    return %c0_i32, %c0_i32_0 : i32, i32
  }
  func.func @transform_24(%arg0: i32) -> (i32, i32) {
    %c0_i32 = arith.constant 0 : i32
    %c0_i32_0 = arith.constant 0 : i32
    %c0_i32_1 = arith.constant 0 : i32
    return %c0_i32, %c0_i32_0 : i32, i32
  }
  func.func @transform_25(%arg0: i32) -> (i32, i32) {
    %c0_i32 = arith.constant 0 : i32
    %c0_i32_0 = arith.constant 0 : i32
    %c0_i32_1 = arith.constant 0 : i32
    return %c0_i32, %c0_i32_0 : i32, i32
  }
}

</mosaic_0001>

<llo_original>
// kernel: tpu_custom_call.1
$region0: #{tpu_custom_call.1}
  #allocation0 [shape = 'u32[]', space=smem, size = 0x4, offset = 0x4, fixed_abs, tag = 'smem constant byte address 0x4 - core index']
  #allocation1 [shape = 'u32[144,128]{1,0:T(1,128)}', space=vmem, size = 0x12000, scoped, tag = 'internal scratch']
  #allocation2 [shape = 'f32[1,1]{1,0:T(1,128)S(1)}', space=vmem, size = 0x200, scoped, tag = 'scoped memory for tpu_custom_call.1']
  %s0 = inlined_call_operand.vmem [shape: f32[16,768], index: 0, kind: input, shape index: {}]
  %s1 = inlined_call_operand.vmem [shape: f32[768,32], index: 1, kind: input, shape index: {}]
  %s2 = inlined_call_operand.vmem [shape: f32[1,32], index: 2, kind: input, shape index: {}]
  %s3 = inlined_call_operand.vmem [shape: f32[5,32,32], index: 3, kind: input, shape index: {}]
  %s4 = inlined_call_operand.vmem [shape: f32[1,32], index: 4, kind: input, shape index: {}]
  %s5 = inlined_call_operand.vmem [shape: f32[5,32,32], index: 5, kind: input, shape index: {}]
  %s6 = inlined_call_operand.vmem [shape: f32[1,32], index: 6, kind: input, shape index: {}]
  %s7 = inlined_call_operand.vmem [shape: f32[4,32,16], index: 7, kind: input, shape index: {}]
  %s8 = inlined_call_operand.vmem [shape: f32[1,16], index: 8, kind: input, shape index: {}]
  %s9 = inlined_call_operand.vmem [shape: f32[4,16,16], index: 9, kind: input, shape index: {}]
  %s10 = inlined_call_operand.vmem [shape: f32[1,16], index: 10, kind: input, shape index: {}]
  %s11 = inlined_call_operand.vmem [shape: f32[32,16], index: 11, kind: input, shape index: {}]
  %s12 = inlined_call_operand.vmem [shape: f32[1,16], index: 12, kind: input, shape index: {}]
  %s13 = inlined_call_operand.vmem [shape: f32[2,16,16], index: 13, kind: input, shape index: {}]
  %s14 = inlined_call_operand.vmem [shape: f32[1,16], index: 14, kind: input, shape index: {}]
  %s15 = inlined_call_operand.vmem [shape: f32[2,16,16], index: 15, kind: input, shape index: {}]
  %s16 = inlined_call_operand.vmem [shape: f32[1,16], index: 16, kind: input, shape index: {}]
  %s17 = inlined_call_operand.vmem [shape: f32[1,16,8], index: 17, kind: input, shape index: {}]
  %s18 = inlined_call_operand.vmem [shape: f32[1,8], index: 18, kind: input, shape index: {}]
  %s19 = inlined_call_operand.vmem [shape: f32[1,8,8], index: 19, kind: input, shape index: {}]
  %s20 = inlined_call_operand.vmem [shape: f32[1,8], index: 20, kind: input, shape index: {}]
  %s21 = inlined_call_operand.vmem [shape: f32[16,8], index: 21, kind: input, shape index: {}]
  %s22 = inlined_call_operand.vmem [shape: f32[1,8], index: 22, kind: input, shape index: {}]
  %s23 = inlined_call_operand.vmem [shape: f32[8,1], index: 23, kind: input, shape index: {}]
  %s24 = inlined_call_operand.<no memory space> [shape: f32[1,1], index: 24, kind: input, shape index: {}]
  %s25 = inlined_call_operand.vmem [shape: f32[16,1], index: 25, kind: output, shape index: {}]
  %s26 = sld [smem:[#allocation0]]
  $region110: #{tpu_custom_call.1} parent=0
    _
  %s28 = ssub.s32 1, %s26
  %s29 = scalar_select 0, %s28, %s26
  %v30 = vstv %s24
  %31 = vst [vmem:[#allocation2] sm:$0x1] %v30
  // Predicated region
  $region2: #{tpu_custom_call.1} parent=0 // pred_check
    _
  $region3: #{tpu_custom_call.1} parent=0 // pred_check_branch
    %33 = sbr.rel (0) target = $region5
  $region4: #{tpu_custom_call.1} parent=0 // pred_region
    _
  $region5: #{tpu_custom_call.1} parent=0 // pred_fallthru
    _
  // Predicated region
  $region6: #{tpu_custom_call.1} parent=0 // pred_check
    _
  $region7: #{tpu_custom_call.1} parent=0 // pred_check_branch
    %35 = sbr.rel (0) target = $region9
  $region8: #{tpu_custom_call.1} parent=0 // pred_region
    _
  $region9: #{tpu_custom_call.1} parent=0 // pred_fallthru
    _
  // Predicated region
  $region10: #{tpu_custom_call.1} parent=0 // pred_check
    _
  $region11: #{tpu_custom_call.1} parent=0 // pred_check_branch
    %37 = sbr.rel (0) target = $region13
  $region12: #{tpu_custom_call.1} parent=0 // pred_region
    _
  $region13: #{tpu_custom_call.1} parent=0 // pred_fallthru
    _
  // Predicated region
  $region14: #{tpu_custom_call.1} parent=0 // pred_check
    _
  $region15: #{tpu_custom_call.1} parent=0 // pred_check_branch
    %39 = sbr.rel (0) target = $region17
  $region16: #{tpu_custom_call.1} parent=0 // pred_region
    _
  $region17: #{tpu_custom_call.1} parent=0 // pred_fallthru
    _
  // Predicated region
  $region18: #{tpu_custom_call.1} parent=0 // pred_check
    _
  $region19: #{tpu_custom_call.1} parent=0 // pred_check_branch
    %41 = sbr.rel (0) target = $region21
  $region20: #{tpu_custom_call.1} parent=0 // pred_region
    _
  $region21: #{tpu_custom_call.1} parent=0 // pred_fallthru
    _
  // Predicated region
  $region22: #{tpu_custom_call.1} parent=0 // pred_check
    _
  $region23: #{tpu_custom_call.1} parent=0 // pred_check_branch
    %43 = sbr.rel (0) target = $region25
  $region24: #{tpu_custom_call.1} parent=0 // pred_region
    _
  $region25: #{tpu_custom_call.1} parent=0 // pred_fallthru
    _
  // Predicated region
  $region26: #{tpu_custom_call.1} parent=0 // pred_check
    _
  $region27: #{tpu_custom_call.1} parent=0 // pred_check_branch
    %45 = sbr.rel (0) target = $region29
  $region28: #{tpu_custom_call.1} parent=0 // pred_region
    _
  $region29: #{tpu_custom_call.1} parent=0 // pred_fallthru
    _
  // Predicated region
  $region30: #{tpu_custom_call.1} parent=0 // pred_check
    _
  $region31: #{tpu_custom_call.1} parent=0 // pred_check_branch
    %47 = sbr.rel (0) target = $region33
  $region32: #{tpu_custom_call.1} parent=0 // pred_region
    _
  $region33: #{tpu_custom_call.1} parent=0 // pred_fallthru
    _
  // Predicated region
  $region34: #{tpu_custom_call.1} parent=0 // pred_check
    _
  $region35: #{tpu_custom_call.1} parent=0 // pred_check_branch
    %49 = sbr.rel (0) target = $region37
  $region36: #{tpu_custom_call.1} parent=0 // pred_region
    _
  $region37: #{tpu_custom_call.1} parent=0 // pred_fallthru
    _
  // Predicated region
  $region38: #{tpu_custom_call.1} parent=0 // pred_check
    _
  $region39: #{tpu_custom_call.1} parent=0 // pred_check_branch
    %51 = sbr.rel (0) target = $region41
  $region40: #{tpu_custom_call.1} parent=0 // pred_region
    _
  $region41: #{tpu_custom_call.1} parent=0 // pred_fallthru
    _
  // Predicated region
  $region42: #{tpu_custom_call.1} parent=0 // pred_check
    _
  $region43: #{tpu_custom_call.1} parent=0 // pred_check_branch
    %53 = sbr.rel (0) target = $region45
  $region44: #{tpu_custom_call.1} parent=0 // pred_region
    _
  $region45: #{tpu_custom_call.1} parent=0 // pred_fallthru
    _
  // Predicated region
  $region46: #{tpu_custom_call.1} parent=0 // pred_check
    _
  $region47: #{tpu_custom_call.1} parent=0 // pred_check_branch
    %55 = sbr.rel (0) target = $region49
  $region48: #{tpu_custom_call.1} parent=0 // pred_region
    _
  $region49: #{tpu_custom_call.1} parent=0 // pred_fallthru
    _
  // Predicated region
  $region50: #{tpu_custom_call.1} parent=0 // pred_check
    _
  $region51: #{tpu_custom_call.1} parent=0 // pred_check_branch
    %57 = sbr.rel (0) target = $region53
  $region52: #{tpu_custom_call.1} parent=0 // pred_region
    _
  $region53: #{tpu_custom_call.1} parent=0 // pred_fallthru
    _
  // Predicated region
  $region54: #{tpu_custom_call.1} parent=0 // pred_check
    _
  $region55: #{tpu_custom_call.1} parent=0 // pred_check_branch
    %59 = sbr.rel (0) target = $region57
  $region56: #{tpu_custom_call.1} parent=0 // pred_region
    _
  $region57: #{tpu_custom_call.1} parent=0 // pred_fallthru
    _
  // Predicated region
  $region58: #{tpu_custom_call.1} parent=0 // pred_check
    _
  $region59: #{tpu_custom_call.1} parent=0 // pred_check_branch
    %61 = sbr.rel (0) target = $region61
  $region60: #{tpu_custom_call.1} parent=0 // pred_region
    _
  $region61: #{tpu_custom_call.1} parent=0 // pred_fallthru
    _
  // Predicated region
  $region62: #{tpu_custom_call.1} parent=0 // pred_check
    _
  $region63: #{tpu_custom_call.1} parent=0 // pred_check_branch
    %63 = sbr.rel (0) target = $region65
  $region64: #{tpu_custom_call.1} parent=0 // pred_region
    _
  $region65: #{tpu_custom_call.1} parent=0 // pred_fallthru
    _
  // Predicated region
  $region66: #{tpu_custom_call.1} parent=0 // pred_check
    _
  $region67: #{tpu_custom_call.1} parent=0 // pred_check_branch
    %65 = sbr.rel (0) target = $region69
  $region68: #{tpu_custom_call.1} parent=0 // pred_region
    _
  $region69: #{tpu_custom_call.1} parent=0 // pred_fallthru
    _
  // Predicated region
  $region70: #{tpu_custom_call.1} parent=0 // pred_check
    _
  $region71: #{tpu_custom_call.1} parent=0 // pred_check_branch
    %67 = sbr.rel (0) target = $region73
  $region72: #{tpu_custom_call.1} parent=0 // pred_region
    _
  $region73: #{tpu_custom_call.1} parent=0 // pred_fallthru
    _
  // Predicated region
  $region74: #{tpu_custom_call.1} parent=0 // pred_check
    _
  $region75: #{tpu_custom_call.1} parent=0 // pred_check_branch
    %69 = sbr.rel (0) target = $region77
  $region76: #{tpu_custom_call.1} parent=0 // pred_region
    _
  $region77: #{tpu_custom_call.1} parent=0 // pred_fallthru
    _
  // Predicated region
  $region78: #{tpu_custom_call.1} parent=0 // pred_check
    _
  $region79: #{tpu_custom_call.1} parent=0 // pred_check_branch
    %71 = sbr.rel (0) target = $region81
  $region80: #{tpu_custom_call.1} parent=0 // pred_region
    _
  $region81: #{tpu_custom_call.1} parent=0 // pred_fallthru
    _
  // Predicated region
  $region82: #{tpu_custom_call.1} parent=0 // pred_check
    _
  $region83: #{tpu_custom_call.1} parent=0 // pred_check_branch
    %73 = sbr.rel (0) target = $region85
  $region84: #{tpu_custom_call.1} parent=0 // pred_region
    _
  $region85: #{tpu_custom_call.1} parent=0 // pred_fallthru
    _
  // Predicated region
  $region86: #{tpu_custom_call.1} parent=0 // pred_check
    _
  $region87: #{tpu_custom_call.1} parent=0 // pred_check_branch
    %75 = sbr.rel (0) target = $region89
  $region88: #{tpu_custom_call.1} parent=0 // pred_region
    _
  $region89: #{tpu_custom_call.1} parent=0 // pred_fallthru
    _
  // Predicated region
  $region90: #{tpu_custom_call.1} parent=0 // pred_check
    _
  $region91: #{tpu_custom_call.1} parent=0 // pred_check_branch
    %77 = sbr.rel (0) target = $region93
  $region92: #{tpu_custom_call.1} parent=0 // pred_region
    _
  $region93: #{tpu_custom_call.1} parent=0 // pred_fallthru
    _
  // Predicated region
  $region94: #{tpu_custom_call.1} parent=0 // pred_check
    _
  $region95: #{tpu_custom_call.1} parent=0 // pred_check_branch
    %79 = sbr.rel (0) target = $region97
  $region96: #{tpu_custom_call.1} parent=0 // pred_region
    _
  $region97: #{tpu_custom_call.1} parent=0 // pred_fallthru
    _
  // Predicated region
  $region98: #{tpu_custom_call.1} parent=0 // pred_check
    _
  $region99: #{tpu_custom_call.1} parent=0 // pred_check_branch
    %81 = sbr.rel (0) target = $region101
  $region100: #{tpu_custom_call.1} parent=0 // pred_region
    _
  $region101: #{tpu_custom_call.1} parent=0 // pred_fallthru
    _
  %v82 = vlaneseq
  %v83 = vshrl.u32 %v82, 7
  %v84 = vadd.s32 %v83, 8
  %vm85 = vcmp.ge.s32.totalorder %v83, 1
  %vm86 = vcmp.ge.s32.totalorder %v84, 1
  %vm87 = vcmp.lt.s32.totalorder %v83, 8
  %vm88 = vcmp.lt.s32.totalorder %v84, 8
  %vm89 = vmand %vm85, %vm87
  %vm90 = vmand %vm86, %vm88
  %vm91 = vcmp.ge.s32.totalorder %v83, 9
  %vm92 = vcmp.ge.s32.totalorder %v84, 9
  %vm93 = vcmp.lt.s32.totalorder %v83, 16
  %vm94 = vcmp.lt.s32.totalorder %v84, 16
  %vm95 = vmand %vm91, %vm93
  %vm96 = vmand %vm92, %vm94
  %vm97 = vmor %vm89, %vm95
  %vm98 = vmor %vm90, %vm96
  %v99 = vsel %vm97, 1, 0
  %v100 = vsel %vm98, 1, 0
  %v101 = vcvt.s32.f32 %v99
  %v102 = vcvt.s32.f32 %v100
  %vm103 = vcmp.ge.s32.totalorder %v83, 2
  %vm104 = vcmp.ge.s32.totalorder %v84, 2
  %vm105 = vmand %vm103, %vm87
  %vm106 = vmand %vm104, %vm88
  %vm107 = vcmp.ge.s32.totalorder %v83, 10
  %vm108 = vcmp.ge.s32.totalorder %v84, 10
  %vm109 = vmand %vm107, %vm93
  %vm110 = vmand %vm108, %vm94
  %vm111 = vmor %vm105, %vm109
  %vm112 = vmor %vm106, %vm110
  %v113 = vsel %vm111, 1, 0
  %v114 = vsel %vm112, 1, 0
  %v115 = vcvt.s32.f32 %v113
  %v116 = vcvt.s32.f32 %v114
  %vm117 = vcmp.ge.s32.totalorder %v83, 3
  %vm118 = vcmp.ge.s32.totalorder %v84, 3
  %vm119 = vmand %vm117, %vm87
  %vm120 = vmand %vm118, %vm88
  %vm121 = vcmp.ge.s32.totalorder %v83, 11
  %vm122 = vcmp.ge.s32.totalorder %v84, 11
  %vm123 = vmand %vm121, %vm93
  %vm124 = vmand %vm122, %vm94
  %vm125 = vmor %vm119, %vm123
  %vm126 = vmor %vm120, %vm124
  %v127 = vsel %vm125, 1, 0
  %v128 = vsel %vm126, 1, 0
  %v129 = vcvt.s32.f32 %v127
  %v130 = vcvt.s32.f32 %v128
  %vm131 = vcmp.ge.s32.totalorder %v83, 4
  %vm132 = vcmp.ge.s32.totalorder %v84, 4
  %vm133 = vmand %vm131, %vm87
  %vm134 = vmand %vm132, %vm88
  %vm135 = vcmp.ge.s32.totalorder %v83, 12
  %vm136 = vcmp.ge.s32.totalorder %v84, 12
  %vm137 = vmand %vm135, %vm93
  %vm138 = vmand %vm136, %vm94
  %vm139 = vmor %vm133, %vm137
  %vm140 = vmor %vm134, %vm138
  %v141 = vsel %vm139, 1, 0
  %v142 = vsel %vm140, 1, 0
  %v143 = vcvt.s32.f32 %v141
  %v144 = vcvt.s32.f32 %v142
  %vm145 = vcmp.ge.s32.totalorder %v83, 6
  %vm146 = vcmp.ge.s32.totalorder %v84, 6
  %vm147 = vmand %vm145, %vm87
  %vm148 = vmand %vm146, %vm88
  %vm149 = vcmp.ge.s32.totalorder %v83, 14
  %vm150 = vcmp.ge.s32.totalorder %v84, 14
  %vm151 = vmand %vm149, %vm93
  %vm152 = vmand %vm150, %vm94
  %vm153 = vmor %vm147, %vm151
  %vm154 = vmor %vm148, %vm152
  %v155 = vsel %vm153, 1, 0
  %v156 = vsel %vm154, 1, 0
  %v157 = vcvt.s32.f32 %v155
  %v158 = vcvt.s32.f32 %v156
  %v159 = vld [vmem:[%s0] sm:$0xff]
  %v160 = vld [vmem:[%s0 + $0x8] sm:$0xff]
  %v161 = vld [vmem:[%s0 + $0x10] sm:$0xff]
  %v162 = vld [vmem:[%s0 + $0x18] sm:$0xff]
  %v163 = vld [vmem:[%s0 + $0x20] sm:$0xff]
  %v164 = vld [vmem:[%s0 + $0x28] sm:$0xff]
  %v165 = vld [vmem:[%s0 + $0x30] sm:$0xff]
  %v166 = vld [vmem:[%s0 + $0x38] sm:$0xff]
  %v167 = vld [vmem:[%s0 + $0x40] sm:$0xff]
  %v168 = vld [vmem:[%s0 + $0x48] sm:$0xff]
  %v169 = vld [vmem:[%s0 + $0x50] sm:$0xff]
  %v170 = vld [vmem:[%s0 + $0x58] sm:$0xff]
  %v171 = vld [vmem:[%s1] sm:$0xff]
  %v172 = vld [vmem:[%s1 + $0x8] sm:$0xff]
  %v173 = vld [vmem:[%s1 + $0x10] sm:$0xff]
  %v174 = vld [vmem:[%s1 + $0x18] sm:$0xff]
  %v175 = vld [vmem:[%s1 + $0x20] sm:$0xff]
  %v176 = vld [vmem:[%s1 + $0x28] sm:$0xff]
  %v177 = vld [vmem:[%s1 + $0x30] sm:$0xff]
  %v178 = vld [vmem:[%s1 + $0x38] sm:$0xff]
  %v179 = vld [vmem:[%s1 + $0x40] sm:$0xff]
  %v180 = vld [vmem:[%s1 + $0x48] sm:$0xff]
  %v181 = vld [vmem:[%s1 + $0x50] sm:$0xff]
  %v182 = vld [vmem:[%s1 + $0x58] sm:$0xff]
  %v183 = vld [vmem:[%s1 + $0x60] sm:$0xff]
  %v184 = vld [vmem:[%s1 + $0x68] sm:$0xff]
  %v185 = vld [vmem:[%s1 + $0x70] sm:$0xff]
  %v186 = vld [vmem:[%s1 + $0x78] sm:$0xff]
  %v187 = vld [vmem:[%s1 + $0x80] sm:$0xff]
  %v188 = vld [vmem:[%s1 + $0x88] sm:$0xff]
  %v189 = vld [vmem:[%s1 + $0x90] sm:$0xff]
  %v190 = vld [vmem:[%s1 + $0x98] sm:$0xff]
  %v191 = vld [vmem:[%s1 + $0xa0] sm:$0xff]
  %v192 = vld [vmem:[%s1 + $0xa8] sm:$0xff]
  %v193 = vld [vmem:[%s1 + $0xb0] sm:$0xff]
  %v194 = vld [vmem:[%s1 + $0xb8] sm:$0xff]
  %v195 = vld [vmem:[%s1 + $0xc0] sm:$0xff]
  %v196 = vld [vmem:[%s1 + $0xc8] sm:$0xff]
  %v197 = vld [vmem:[%s1 + $0xd0] sm:$0xff]
  %v198 = vld [vmem:[%s1 + $0xd8] sm:$0xff]
  %v199 = vld [vmem:[%s1 + $0xe0] sm:$0xff]
  %v200 = vld [vmem:[%s1 + $0xe8] sm:$0xff]
  %v201 = vld [vmem:[%s1 + $0xf0] sm:$0xff]
  %v202 = vld [vmem:[%s1 + $0xf8] sm:$0xff]
  %v203 = vld [vmem:[%s1 + $0x100] sm:$0xff]
  %v204 = vld [vmem:[%s1 + $0x108] sm:$0xff]
  %v205 = vld [vmem:[%s1 + $0x110] sm:$0xff]
  %v206 = vld [vmem:[%s1 + $0x118] sm:$0xff]
  %v207 = vld [vmem:[%s1 + $0x120] sm:$0xff]
  %v208 = vld [vmem:[%s1 + $0x128] sm:$0xff]
  %v209 = vld [vmem:[%s1 + $0x130] sm:$0xff]
  %v210 = vld [vmem:[%s1 + $0x138] sm:$0xff]
  %v211 = vld [vmem:[%s1 + $0x140] sm:$0xff]
  %v212 = vld [vmem:[%s1 + $0x148] sm:$0xff]
  %v213 = vld [vmem:[%s1 + $0x150] sm:$0xff]
  %v214 = vld [vmem:[%s1 + $0x158] sm:$0xff]
  %v215 = vld [vmem:[%s1 + $0x160] sm:$0xff]
  %v216 = vld [vmem:[%s1 + $0x168] sm:$0xff]
  %v217 = vld [vmem:[%s1 + $0x170] sm:$0xff]
  %v218 = vld [vmem:[%s1 + $0x178] sm:$0xff]
  %v219 = vld [vmem:[%s1 + $0x180] sm:$0xff]
  %v220 = vld [vmem:[%s1 + $0x188] sm:$0xff]
  %v221 = vld [vmem:[%s1 + $0x190] sm:$0xff]
  %v222 = vld [vmem:[%s1 + $0x198] sm:$0xff]
  %v223 = vld [vmem:[%s1 + $0x1a0] sm:$0xff]
  %v224 = vld [vmem:[%s1 + $0x1a8] sm:$0xff]
  %v225 = vld [vmem:[%s1 + $0x1b0] sm:$0xff]
  %v226 = vld [vmem:[%s1 + $0x1b8] sm:$0xff]
  %v227 = vld [vmem:[%s1 + $0x1c0] sm:$0xff]
  %v228 = vld [vmem:[%s1 + $0x1c8] sm:$0xff]
  %v229 = vld [vmem:[%s1 + $0x1d0] sm:$0xff]
  %v230 = vld [vmem:[%s1 + $0x1d8] sm:$0xff]
  %v231 = vld [vmem:[%s1 + $0x1e0] sm:$0xff]
  %v232 = vld [vmem:[%s1 + $0x1e8] sm:$0xff]
  %v233 = vld [vmem:[%s1 + $0x1f0] sm:$0xff]
  %v234 = vld [vmem:[%s1 + $0x1f8] sm:$0xff]
  %v235 = vld [vmem:[%s1 + $0x200] sm:$0xff]
  %v236 = vld [vmem:[%s1 + $0x208] sm:$0xff]
  %v237 = vld [vmem:[%s1 + $0x210] sm:$0xff]
  %v238 = vld [vmem:[%s1 + $0x218] sm:$0xff]
  %v239 = vld [vmem:[%s1 + $0x220] sm:$0xff]
  %v240 = vld [vmem:[%s1 + $0x228] sm:$0xff]
  %v241 = vld [vmem:[%s1 + $0x230] sm:$0xff]
  %v242 = vld [vmem:[%s1 + $0x238] sm:$0xff]
  %v243 = vld [vmem:[%s1 + $0x240] sm:$0xff]
  %v244 = vld [vmem:[%s1 + $0x248] sm:$0xff]
  %v245 = vld [vmem:[%s1 + $0x250] sm:$0xff]
  %v246 = vld [vmem:[%s1 + $0x258] sm:$0xff]
  %v247 = vld [vmem:[%s1 + $0x260] sm:$0xff]
  %v248 = vld [vmem:[%s1 + $0x268] sm:$0xff]
  %v249 = vld [vmem:[%s1 + $0x270] sm:$0xff]
  %v250 = vld [vmem:[%s1 + $0x278] sm:$0xff]
  %v251 = vld [vmem:[%s1 + $0x280] sm:$0xff]
  %v252 = vld [vmem:[%s1 + $0x288] sm:$0xff]
  %v253 = vld [vmem:[%s1 + $0x290] sm:$0xff]
  %v254 = vld [vmem:[%s1 + $0x298] sm:$0xff]
  %v255 = vld [vmem:[%s1 + $0x2a0] sm:$0xff]
  %v256 = vld [vmem:[%s1 + $0x2a8] sm:$0xff]
  %v257 = vld [vmem:[%s1 + $0x2b0] sm:$0xff]
  %v258 = vld [vmem:[%s1 + $0x2b8] sm:$0xff]
  %v259 = vld [vmem:[%s1 + $0x2c0] sm:$0xff]
  %v260 = vld [vmem:[%s1 + $0x2c8] sm:$0xff]
  %v261 = vld [vmem:[%s1 + $0x2d0] sm:$0xff]
  %v262 = vld [vmem:[%s1 + $0x2d8] sm:$0xff]
  %v263 = vld [vmem:[%s1 + $0x2e0] sm:$0xff]
  %v264 = vld [vmem:[%s1 + $0x2e8] sm:$0xff]
  %v265 = vld [vmem:[%s1 + $0x2f0] sm:$0xff]
  %v266 = vld [vmem:[%s1 + $0x2f8] sm:$0xff]
  %v267 = vld [vmem:[%s2] sm:$0x1]
  %v269 = vlaneseq
  %v270 = vshrl.u32 %v269, 7
  %v271 = vsub.s32 0, %v270
  %v272 = vrot.slane %v267, %v271
  %274 = vmatprep.subr.mxu0 0.0
  %275 = vmatpush1.msra.mxu0 %v171
  %276 = vmatprep.subr.mxu0 0.0
  %277 = vmatpush1.msra.mxu0 %v172
  %278 = vmatprep.subr.mxu0 0.0
  %279 = vmatpush1.msra.mxu0 %v173
  %280 = vmatprep.subr.mxu0 0.0
  %281 = vmatpush1.msra.mxu0 %v174
  %282 = vmatprep.subr.mxu0 0.0
  %283 = vmatpush1.msra.mxu0 %v175
  %284 = vmatprep.subr.mxu0 0.0
  %285 = vmatpush1.msra.mxu0 %v176
  %286 = vmatprep.subr.mxu0 0.0
  %287 = vmatpush1.msra.mxu0 %v177
  %288 = vmatprep.subr.mxu0 0.0
  %289 = vmatpush1.msra.mxu0 %v178
  %290 = vmatprep.subr.mxu0 0.0
  %291 = vmatpush1.msra.mxu0 %v179
  %292 = vmatprep.subr.mxu0 0.0
  %293 = vmatpush1.msra.mxu0 %v180
  %294 = vmatprep.subr.mxu0 0.0
  %295 = vmatpush1.msra.mxu0 %v181
  %296 = vmatprep.subr.mxu0 0.0
  %297 = vmatpush1.msra.mxu0 %v182
  %298 = vmatprep.subr.mxu0 0.0
  %299 = vmatpush1.msra.mxu0 %v183
  %300 = vmatprep.subr.mxu0 0.0
  %301 = vmatpush1.msra.mxu0 %v184
  %302 = vmatprep.subr.mxu0 0.0
  %303 = vmatpush1.msra.mxu0 %v185
  %304 = vmatprep.subr.mxu0 0.0
  %305 = vmatpush1.msra.mxu0 %v186
  %306 = vmatprep.subr.mxu0 0.0
  %307 = vmatpush1.msra.mxu0 %v187
  %308 = vmatprep.subr.mxu0 0.0
  %309 = vmatpush1.msra.mxu0 %v188
  %310 = vmatprep.subr.mxu0 0.0
  %311 = vmatpush1.msra.mxu0 %v189
  %312 = vmatprep.subr.mxu0 0.0
  %313 = vmatpush1.msra.mxu0 %v190
  %314 = vmatprep.subr.mxu0 0.0
  %315 = vmatpush1.msra.mxu0 %v191
  %316 = vmatprep.subr.mxu0 0.0
  %317 = vmatpush1.msra.mxu0 %v192
  %318 = vmatprep.subr.mxu0 0.0
  %319 = vmatpush1.msra.mxu0 %v193
  %320 = vmatprep.subr.mxu0 0.0
  %321 = vmatpush1.msra.mxu0 %v194
  %322 = vmatprep.subr.mxu0 0.0
  %323 = vmatpush1.msra.mxu0 %v195
  %324 = vmatprep.subr.mxu0 0.0
  %325 = vmatpush1.msra.mxu0 %v196
  %326 = vmatprep.subr.mxu0 0.0
  %327 = vmatpush1.msra.mxu0 %v197
  %328 = vmatprep.subr.mxu0 0.0
  %329 = vmatpush1.msra.mxu0 %v198
  %330 = vmatprep.subr.mxu0 0.0
  %331 = vmatpush1.msra.mxu0 %v199
  %332 = vmatprep.subr.mxu0 0.0
  %333 = vmatpush1.msra.mxu0 %v200
  %334 = vmatprep.subr.mxu0 0.0
  %335 = vmatpush1.msra.mxu0 %v201
  %336 = vmatprep.subr.mxu0 0.0
  %337 = vmatpush1.msra.mxu0 %v202
  %338 = vmatprep.mubr.f32.mxu0 %v160
  %339 = vmatmul.mubr.f32.gmra.mrb[0].mxu0 %v159
  %v340 = vpop.f32.mrb[0].mxu0
  %v341 = vadd.f32 %v272, %v340
  %v342 = vpop.f32.mrb[0].mxu0
  %343 = vmatprep.mubr.f32.mxu0 %v166
  %344 = vmatmul.mubr.f32.gmra.mrb[0].mxu0 %v165
  %v345 = vpop.f32.mrb[0].mxu0
  %v346 = vadd.f32 %v272, %v345
  %v347 = vpop.f32.mrb[0].mxu0
  %348 = vdwg.mxu0
  %349 = vmatprep.subr.mxu0 0.0
  %350 = vmatpush1.msra.mxu0 %v203
  %351 = vmatprep.subr.mxu0 0.0
  %352 = vmatpush1.msra.mxu0 %v204
  %353 = vmatprep.subr.mxu0 0.0
  %354 = vmatpush1.msra.mxu0 %v205
  %355 = vmatprep.subr.mxu0 0.0
  %356 = vmatpush1.msra.mxu0 %v206
  %357 = vmatprep.subr.mxu0 0.0
  %358 = vmatpush1.msra.mxu0 %v207
  %359 = vmatprep.subr.mxu0 0.0
  %360 = vmatpush1.msra.mxu0 %v208
  %361 = vmatprep.subr.mxu0 0.0
  %362 = vmatpush1.msra.mxu0 %v209
  %363 = vmatprep.subr.mxu0 0.0
  %364 = vmatpush1.msra.mxu0 %v210
  %365 = vmatprep.subr.mxu0 0.0
  %366 = vmatpush1.msra.mxu0 %v211
  %367 = vmatprep.subr.mxu0 0.0
  %368 = vmatpush1.msra.mxu0 %v212
  %369 = vmatprep.subr.mxu0 0.0
  %370 = vmatpush1.msra.mxu0 %v213
  %371 = vmatprep.subr.mxu0 0.0
  %372 = vmatpush1.msra.mxu0 %v214
  %373 = vmatprep.subr.mxu0 0.0
  %374 = vmatpush1.msra.mxu0 %v215
  %375 = vmatprep.subr.mxu0 0.0
  %376 = vmatpush1.msra.mxu0 %v216
  %377 = vmatprep.subr.mxu0 0.0
  %378 = vmatpush1.msra.mxu0 %v217
  %379 = vmatprep.subr.mxu0 0.0
  %380 = vmatpush1.msra.mxu0 %v218
  %381 = vmatprep.subr.mxu0 0.0
  %382 = vmatpush1.msra.mxu0 %v219
  %383 = vmatprep.subr.mxu0 0.0
  %384 = vmatpush1.msra.mxu0 %v220
  %385 = vmatprep.subr.mxu0 0.0
  %386 = vmatpush1.msra.mxu0 %v221
  %387 = vmatprep.subr.mxu0 0.0
  %388 = vmatpush1.msra.mxu0 %v222
  %389 = vmatprep.subr.mxu0 0.0
  %390 = vmatpush1.msra.mxu0 %v223
  %391 = vmatprep.subr.mxu0 0.0
  %392 = vmatpush1.msra.mxu0 %v224
  %393 = vmatprep.subr.mxu0 0.0
  %394 = vmatpush1.msra.mxu0 %v225
  %395 = vmatprep.subr.mxu0 0.0
  %396 = vmatpush1.msra.mxu0 %v226
  %397 = vmatprep.subr.mxu0 0.0
  %398 = vmatpush1.msra.mxu0 %v227
  %399 = vmatprep.subr.mxu0 0.0
  %400 = vmatpush1.msra.mxu0 %v228
  %401 = vmatprep.subr.mxu0 0.0
  %402 = vmatpush1.msra.mxu0 %v229
  %403 = vmatprep.subr.mxu0 0.0
  %404 = vmatpush1.msra.mxu0 %v230
  %405 = vmatprep.subr.mxu0 0.0
  %406 = vmatpush1.msra.mxu0 %v231
  %407 = vmatprep.subr.mxu0 0.0
  %408 = vmatpush1.msra.mxu0 %v232
  %409 = vmatprep.subr.mxu0 0.0
  %410 = vmatpush1.msra.mxu0 %v233
  %411 = vmatprep.subr.mxu0 0.0
  %412 = vmatpush1.msra.mxu0 %v234
  %413 = vmatprep.mubr.f32.mxu0 %v162
  %414 = vmatmul.mubr.f32.gmra.mrb[0].mxu0 %v161
  %v415 = vpop.f32.mrb[0].mxu0
  %v416 = vadd.f32 %v341, %v415
  %v417 = vpop.f32.mrb[0].mxu0
  %418 = vmatprep.mubr.f32.mxu0 %v168
  %419 = vmatmul.mubr.f32.gmra.mrb[0].mxu0 %v167
  %v420 = vpop.f32.mrb[0].mxu0
  %v421 = vadd.f32 %v346, %v420
  %v422 = vpop.f32.mrb[0].mxu0
  %423 = vdwg.mxu0
  %424 = vmatprep.subr.mxu0 0.0
  %425 = vmatpush1.msra.mxu0 %v235
  %426 = vmatprep.subr.mxu0 0.0
  %427 = vmatpush1.msra.mxu0 %v236
  %428 = vmatprep.subr.mxu0 0.0
  %429 = vmatpush1.msra.mxu0 %v237
  %430 = vmatprep.subr.mxu0 0.0
  %431 = vmatpush1.msra.mxu0 %v238
  %432 = vmatprep.subr.mxu0 0.0
  %433 = vmatpush1.msra.mxu0 %v239
  %434 = vmatprep.subr.mxu0 0.0
  %435 = vmatpush1.msra.mxu0 %v240
  %436 = vmatprep.subr.mxu0 0.0
  %437 = vmatpush1.msra.mxu0 %v241
  %438 = vmatprep.subr.mxu0 0.0
  %439 = vmatpush1.msra.mxu0 %v242
  %440 = vmatprep.subr.mxu0 0.0
  %441 = vmatpush1.msra.mxu0 %v243
  %442 = vmatprep.subr.mxu0 0.0
  %443 = vmatpush1.msra.mxu0 %v244
  %444 = vmatprep.subr.mxu0 0.0
  %445 = vmatpush1.msra.mxu0 %v245
  %446 = vmatprep.subr.mxu0 0.0
  %447 = vmatpush1.msra.mxu0 %v246
  %448 = vmatprep.subr.mxu0 0.0
  %449 = vmatpush1.msra.mxu0 %v247
  %450 = vmatprep.subr.mxu0 0.0
  %451 = vmatpush1.msra.mxu0 %v248
  %452 = vmatprep.subr.mxu0 0.0
  %453 = vmatpush1.msra.mxu0 %v249
  %454 = vmatprep.subr.mxu0 0.0
  %455 = vmatpush1.msra.mxu0 %v250
  %456 = vmatprep.subr.mxu0 0.0
  %457 = vmatpush1.msra.mxu0 %v251
  %458 = vmatprep.subr.mxu0 0.0
  %459 = vmatpush1.msra.mxu0 %v252
  %460 = vmatprep.subr.mxu0 0.0
  %461 = vmatpush1.msra.mxu0 %v253
  %462 = vmatprep.subr.mxu0 0.0
  %463 = vmatpush1.msra.mxu0 %v254
  %464 = vmatprep.subr.mxu0 0.0
  %465 = vmatpush1.msra.mxu0 %v255
  %466 = vmatprep.subr.mxu0 0.0
  %467 = vmatpush1.msra.mxu0 %v256
  %468 = vmatprep.subr.mxu0 0.0
  %469 = vmatpush1.msra.mxu0 %v257
  %470 = vmatprep.subr.mxu0 0.0
  %471 = vmatpush1.msra.mxu0 %v258
  %472 = vmatprep.subr.mxu0 0.0
  %473 = vmatpush1.msra.mxu0 %v259
  %474 = vmatprep.subr.mxu0 0.0
  %475 = vmatpush1.msra.mxu0 %v260
  %476 = vmatprep.subr.mxu0 0.0
  %477 = vmatpush1.msra.mxu0 %v261
  %478 = vmatprep.subr.mxu0 0.0
  %479 = vmatpush1.msra.mxu0 %v262
  %480 = vmatprep.subr.mxu0 0.0
  %481 = vmatpush1.msra.mxu0 %v263
  %482 = vmatprep.subr.mxu0 0.0
  %483 = vmatpush1.msra.mxu0 %v264
  %484 = vmatprep.subr.mxu0 0.0
  %485 = vmatpush1.msra.mxu0 %v265
  %486 = vmatprep.subr.mxu0 0.0
  %487 = vmatpush1.msra.mxu0 %v266
  %488 = vmatprep.mubr.f32.mxu0 %v164
  %489 = vmatmul.mubr.f32.gmra.mrb[0].mxu0 %v163
  %v490 = vpop.f32.mrb[0].mxu0
  %v491 = vadd.f32 %v416, %v490
  %v492 = vpop.f32.mrb[0].mxu0
  %493 = vmatprep.mubr.f32.mxu0 %v170
  %494 = vmatmul.mubr.f32.gmra.mrb[0].mxu0 %v169
  %v495 = vpop.f32.mrb[0].mxu0
  %v496 = vadd.f32 %v421, %v495
  %v497 = vpop.f32.mrb[0].mxu0
  %498 = vdwg.mxu0
  %v499 = vld [vmem:[%s3] sm:$0xff]
  %v500 = vld [vmem:[%s3 + $0x8] sm:$0xff]
  %v501 = vld [vmem:[%s3 + $0x10] sm:$0xff]
  %v502 = vld [vmem:[%s3 + $0x18] sm:$0xff]
  %vm503 = vcmask 261120
  %v505 = vsel %vm503, %v491, 0
  %v508 = vsel %vm503, %v496, 0
  %510 = vmatprep.subr.mxu0 0.0
  %511 = vmatpush1.msra.mxu0 %v499
  %512 = vmatprep.subr.mxu0 0.0
  %513 = vmatpush1.msra.mxu0 %v500
  %514 = vmatprep.subr.mxu0 0.0
  %515 = vmatpush1.msra.mxu0 %v501
  %516 = vmatprep.subr.mxu0 0.0
  %517 = vmatpush1.msra.mxu0 %v502
  %518 = vmatprep.subr.mxu0 0.0
  %519 = vmatpush1.msra.mxu0 0.0
  %520 = vmatprep.subr.mxu0 0.0
  %521 = vmatpush1.msra.mxu0 0.0
  %522 = vmatprep.subr.mxu0 0.0
  %523 = vmatpush1.msra.mxu0 0.0
  %524 = vmatprep.subr.mxu0 0.0
  %525 = vmatpush1.msra.mxu0 0.0
  %526 = vmatprep.subr.mxu0 0.0
  %527 = vmatpush1.msra.mxu0 0.0
  %528 = vmatprep.subr.mxu0 0.0
  %529 = vmatpush1.msra.mxu0 0.0
  %530 = vmatprep.subr.mxu0 0.0
  %531 = vmatpush1.msra.mxu0 0.0
  %532 = vmatprep.subr.mxu0 0.0
  %533 = vmatpush1.msra.mxu0 0.0
  %534 = vmatprep.subr.mxu0 0.0
  %535 = vmatpush1.msra.mxu0 0.0
  %536 = vmatprep.subr.mxu0 0.0
  %537 = vmatpush1.msra.mxu0 0.0
  %538 = vmatprep.subr.mxu0 0.0
  %539 = vmatpush1.msra.mxu0 0.0
  %540 = vmatprep.subr.mxu0 0.0
  %541 = vmatpush1.msra.mxu0 0.0
  %542 = vmatprep.subr.mxu0 0.0
  %543 = vmatpush1.msra.mxu0 0.0
  %544 = vmatprep.subr.mxu0 0.0
  %545 = vmatpush1.msra.mxu0 0.0
  %546 = vmatprep.subr.mxu0 0.0
  %547 = vmatpush1.msra.mxu0 0.0
  %548 = vmatprep.subr.mxu0 0.0
  %549 = vmatpush1.msra.mxu0 0.0
  %550 = vmatprep.subr.mxu0 0.0
  %551 = vmatpush1.msra.mxu0 0.0
  %552 = vmatprep.subr.mxu0 0.0
  %553 = vmatpush1.msra.mxu0 0.0
  %554 = vmatprep.subr.mxu0 0.0
  %555 = vmatpush1.msra.mxu0 0.0
  %556 = vmatprep.subr.mxu0 0.0
  %557 = vmatpush1.msra.mxu0 0.0
  %558 = vmatprep.subr.mxu0 0.0
  %559 = vmatpush1.msra.mxu0 0.0
  %560 = vmatprep.subr.mxu0 0.0
  %561 = vmatpush1.msra.mxu0 0.0
  %562 = vmatprep.subr.mxu0 0.0
  %563 = vmatpush1.msra.mxu0 0.0
  %564 = vmatprep.subr.mxu0 0.0
  %565 = vmatpush1.msra.mxu0 0.0
  %566 = vmatprep.subr.mxu0 0.0
  %567 = vmatpush1.msra.mxu0 0.0
  %568 = vmatprep.subr.mxu0 0.0
  %569 = vmatpush1.msra.mxu0 0.0
  %570 = vmatprep.subr.mxu0 0.0
  %571 = vmatpush1.msra.mxu0 0.0
  %572 = vmatprep.subr.mxu0 0.0
  %573 = vmatpush1.msra.mxu0 0.0
  %574 = vmatprep.mubr.f32.mxu0 0.0
  %575 = vmatmul.mubr.f32.gmra.mrb[0].mxu0 %v505
  %v576 = vpop.f32.mrb[0].mxu0
  %v577 = vadd.f32 0.0, %v576
  %v578 = vpop.f32.mrb[0].mxu0
  %579 = vmatprep.mubr.f32.mxu0 0.0
  %580 = vmatmul.mubr.f32.gmra.mrb[0].mxu0 %v508
  %v581 = vpop.f32.mrb[0].mxu0
  %v582 = vadd.f32 0.0, %v581
  %v583 = vpop.f32.mrb[0].mxu0
  %584 = vdwg.mxu0
  %vm587 = vcmask 1043456
  %v588 = vrot.slane %v577, 4
  %v589 = vrot.slane %v582, 4
  %v590 = vsel %vm587, %v588, %v589
  %v593 = vsel %vm587, 0.0, %v588
  %v594 = vmul.f32 %v593, %v143
  %v595 = vmul.f32 %v590, %v144
  %s596 = scalar_lea.vmem %s3, 32
  %v597 = vld [vmem:[%s596] sm:$0xff]
  %v598 = vld [vmem:[%s596 + $0x8] sm:$0xff]
  %v599 = vld [vmem:[%s596 + $0x10] sm:$0xff]
  %v600 = vld [vmem:[%s596 + $0x18] sm:$0xff]
  %601 = vmatprep.subr.mxu0 0.0
  %602 = vmatpush1.msra.mxu0 %v597
  %603 = vmatprep.subr.mxu0 0.0
  %604 = vmatpush1.msra.mxu0 %v598
  %605 = vmatprep.subr.mxu0 0.0
  %606 = vmatpush1.msra.mxu0 %v599
  %607 = vmatprep.subr.mxu0 0.0
  %608 = vmatpush1.msra.mxu0 %v600
  %609 = vmatprep.subr.mxu0 0.0
  %610 = vmatpush1.msra.mxu0 0.0
  %611 = vmatprep.subr.mxu0 0.0
  %612 = vmatpush1.msra.mxu0 0.0
  %613 = vmatprep.subr.mxu0 0.0
  %614 = vmatpush1.msra.mxu0 0.0
  %615 = vmatprep.subr.mxu0 0.0
  %616 = vmatpush1.msra.mxu0 0.0
  %617 = vmatprep.subr.mxu0 0.0
  %618 = vmatpush1.msra.mxu0 0.0
  %619 = vmatprep.subr.mxu0 0.0
  %620 = vmatpush1.msra.mxu0 0.0
  %621 = vmatprep.subr.mxu0 0.0
  %622 = vmatpush1.msra.mxu0 0.0
  %623 = vmatprep.subr.mxu0 0.0
  %624 = vmatpush1.msra.mxu0 0.0
  %625 = vmatprep.subr.mxu0 0.0
  %626 = vmatpush1.msra.mxu0 0.0
  %627 = vmatprep.subr.mxu0 0.0
  %628 = vmatpush1.msra.mxu0 0.0
  %629 = vmatprep.subr.mxu0 0.0
  %630 = vmatpush1.msra.mxu0 0.0
  %631 = vmatprep.subr.mxu0 0.0
  %632 = vmatpush1.msra.mxu0 0.0
  %633 = vmatprep.subr.mxu0 0.0
  %634 = vmatpush1.msra.mxu0 0.0
  %635 = vmatprep.subr.mxu0 0.0
  %636 = vmatpush1.msra.mxu0 0.0
  %637 = vmatprep.subr.mxu0 0.0
  %638 = vmatpush1.msra.mxu0 0.0
  %639 = vmatprep.subr.mxu0 0.0
  %640 = vmatpush1.msra.mxu0 0.0
  %641 = vmatprep.subr.mxu0 0.0
  %642 = vmatpush1.msra.mxu0 0.0
  %643 = vmatprep.subr.mxu0 0.0
  %644 = vmatpush1.msra.mxu0 0.0
  %645 = vmatprep.subr.mxu0 0.0
  %646 = vmatpush1.msra.mxu0 0.0
  %647 = vmatprep.subr.mxu0 0.0
  %648 = vmatpush1.msra.mxu0 0.0
  %649 = vmatprep.subr.mxu0 0.0
  %650 = vmatpush1.msra.mxu0 0.0
  %651 = vmatprep.subr.mxu0 0.0
  %652 = vmatpush1.msra.mxu0 0.0
  %653 = vmatprep.subr.mxu0 0.0
  %654 = vmatpush1.msra.mxu0 0.0
  %655 = vmatprep.subr.mxu0 0.0
  %656 = vmatpush1.msra.mxu0 0.0
  %657 = vmatprep.subr.mxu0 0.0
  %658 = vmatpush1.msra.mxu0 0.0
  %659 = vmatprep.subr.mxu0 0.0
  %660 = vmatpush1.msra.mxu0 0.0
  %661 = vmatprep.subr.mxu0 0.0
  %662 = vmatpush1.msra.mxu0 0.0
  %663 = vmatprep.subr.mxu0 0.0
  %664 = vmatpush1.msra.mxu0 0.0
  %665 = vmatprep.mubr.f32.mxu0 0.0
  %666 = vmatmul.mubr.f32.gmra.mrb[0].mxu0 %v505
  %v667 = vpop.f32.mrb[0].mxu0
  %v668 = vadd.f32 0.0, %v667
  %v669 = vpop.f32.mrb[0].mxu0
  %670 = vmatprep.mubr.f32.mxu0 0.0
  %671 = vmatmul.mubr.f32.gmra.mrb[0].mxu0 %v508
  %v672 = vpop.f32.mrb[0].mxu0
  %v673 = vadd.f32 0.0, %v672
  %v674 = vpop.f32.mrb[0].mxu0
  %675 = vdwg.mxu0
  %vm678 = vcmask 1042432
  %v679 = vrot.slane %v668, 5
  %v680 = vrot.slane %v673, 5
  %v681 = vsel %vm678, %v679, %v680
  %v684 = vsel %vm678, 0.0, %v679
  %v685 = vmul.f32 %v684, %v129
  %v686 = vmul.f32 %v681, %v130
  %v687 = vadd.f32 %v594, %v685
  %v688 = vadd.f32 %v595, %v686
  %s689 = scalar_lea.vmem %s3, 64
  %v690 = vld [vmem:[%s689] sm:$0xff]
  %v691 = vld [vmem:[%s689 + $0x8] sm:$0xff]
  %v692 = vld [vmem:[%s689 + $0x10] sm:$0xff]
  %v693 = vld [vmem:[%s689 + $0x18] sm:$0xff]
  %694 = vmatprep.subr.mxu0 0.0
  %695 = vmatpush1.msra.mxu0 %v690
  %696 = vmatprep.subr.mxu0 0.0
  %697 = vmatpush1.msra.mxu0 %v691
  %698 = vmatprep.subr.mxu0 0.0
  %699 = vmatpush1.msra.mxu0 %v692
  %700 = vmatprep.subr.mxu0 0.0
  %701 = vmatpush1.msra.mxu0 %v693
  %702 = vmatprep.subr.mxu0 0.0
  %703 = vmatpush1.msra.mxu0 0.0
  %704 = vmatprep.subr.mxu0 0.0
  %705 = vmatpush1.msra.mxu0 0.0
  %706 = vmatprep.subr.mxu0 0.0
  %707 = vmatpush1.msra.mxu0 0.0
  %708 = vmatprep.subr.mxu0 0.0
  %709 = vmatpush1.msra.mxu0 0.0
  %710 = vmatprep.subr.mxu0 0.0
  %711 = vmatpush1.msra.mxu0 0.0
  %712 = vmatprep.subr.mxu0 0.0
  %713 = vmatpush1.msra.mxu0 0.0
  %714 = vmatprep.subr.mxu0 0.0
  %715 = vmatpush1.msra.mxu0 0.0
  %716 = vmatprep.subr.mxu0 0.0
  %717 = vmatpush1.msra.mxu0 0.0
  %718 = vmatprep.subr.mxu0 0.0
  %719 = vmatpush1.msra.mxu0 0.0
  %720 = vmatprep.subr.mxu0 0.0
  %721 = vmatpush1.msra.mxu0 0.0
  %722 = vmatprep.subr.mxu0 0.0
  %723 = vmatpush1.msra.mxu0 0.0
  %724 = vmatprep.subr.mxu0 0.0
  %725 = vmatpush1.msra.mxu0 0.0
  %726 = vmatprep.subr.mxu0 0.0
  %727 = vmatpush1.msra.mxu0 0.0
  %728 = vmatprep.subr.mxu0 0.0
  %729 = vmatpush1.msra.mxu0 0.0
  %730 = vmatprep.subr.mxu0 0.0
  %731 = vmatpush1.msra.mxu0 0.0
  %732 = vmatprep.subr.mxu0 0.0
  %733 = vmatpush1.msra.mxu0 0.0
  %734 = vmatprep.subr.mxu0 0.0
  %735 = vmatpush1.msra.mxu0 0.0
  %736 = vmatprep.subr.mxu0 0.0
  %737 = vmatpush1.msra.mxu0 0.0
  %738 = vmatprep.subr.mxu0 0.0
  %739 = vmatpush1.msra.mxu0 0.0
  %740 = vmatprep.subr.mxu0 0.0
  %741 = vmatpush1.msra.mxu0 0.0
  %742 = vmatprep.subr.mxu0 0.0
  %743 = vmatpush1.msra.mxu0 0.0
  %744 = vmatprep.subr.mxu0 0.0
  %745 = vmatpush1.msra.mxu0 0.0
  %746 = vmatprep.subr.mxu0 0.0
  %747 = vmatpush1.msra.mxu0 0.0
  %748 = vmatprep.subr.mxu0 0.0
  %749 = vmatpush1.msra.mxu0 0.0
  %750 = vmatprep.subr.mxu0 0.0
  %751 = vmatpush1.msra.mxu0 0.0
  %752 = vmatprep.subr.mxu0 0.0
  %753 = vmatpush1.msra.mxu0 0.0
  %754 = vmatprep.subr.mxu0 0.0
  %755 = vmatpush1.msra.mxu0 0.0
  %756 = vmatprep.subr.mxu0 0.0
  %757 = vmatpush1.msra.mxu0 0.0
  %758 = vmatprep.mubr.f32.mxu0 0.0
  %759 = vmatmul.mubr.f32.gmra.mrb[0].mxu0 %v505
  %v760 = vpop.f32.mrb[0].mxu0
  %v761 = vadd.f32 0.0, %v760
  %v762 = vpop.f32.mrb[0].mxu0
  %763 = vmatprep.mubr.f32.mxu0 0.0
  %764 = vmatmul.mubr.f32.gmra.mrb[0].mxu0 %v508
  %v765 = vpop.f32.mrb[0].mxu0
  %v766 = vadd.f32 0.0, %v765
  %v767 = vpop.f32.mrb[0].mxu0
  %768 = vdwg.mxu0
  %vm771 = vcmask 1041408
  %v772 = vrot.slane %v761, 6
  %v773 = vrot.slane %v766, 6
  %v774 = vsel %vm771, %v772, %v773
  %v777 = vsel %vm771, 0.0, %v772
  %v778 = vmul.f32 %v777, %v115
  %v779 = vmul.f32 %v774, %v116
  %v780 = vadd.f32 %v687, %v778
  %v781 = vadd.f32 %v688, %v779
  %s782 = scalar_lea.vmem %s3, 96
  %v783 = vld [vmem:[%s782] sm:$0xff]
  %v784 = vld [vmem:[%s782 + $0x8] sm:$0xff]
  %v785 = vld [vmem:[%s782 + $0x10] sm:$0xff]
  %v786 = vld [vmem:[%s782 + $0x18] sm:$0xff]
  %787 = vmatprep.subr.mxu0 0.0
  %788 = vmatpush1.msra.mxu0 %v783
  %789 = vmatprep.subr.mxu0 0.0
  %790 = vmatpush1.msra.mxu0 %v784
  %791 = vmatprep.subr.mxu0 0.0
  %792 = vmatpush1.msra.mxu0 %v785
  %793 = vmatprep.subr.mxu0 0.0
  %794 = vmatpush1.msra.mxu0 %v786
  %795 = vmatprep.subr.mxu0 0.0
  %796 = vmatpush1.msra.mxu0 0.0
  %797 = vmatprep.subr.mxu0 0.0
  %798 = vmatpush1.msra.mxu0 0.0
  %799 = vmatprep.subr.mxu0 0.0
  %800 = vmatpush1.msra.mxu0 0.0
  %801 = vmatprep.subr.mxu0 0.0
  %802 = vmatpush1.msra.mxu0 0.0
  %803 = vmatprep.subr.mxu0 0.0
  %804 = vmatpush1.msra.mxu0 0.0
  %805 = vmatprep.subr.mxu0 0.0
  %806 = vmatpush1.msra.mxu0 0.0
  %807 = vmatprep.subr.mxu0 0.0
  %808 = vmatpush1.msra.mxu0 0.0
  %809 = vmatprep.subr.mxu0 0.0
  %810 = vmatpush1.msra.mxu0 0.0
  %811 = vmatprep.subr.mxu0 0.0
  %812 = vmatpush1.msra.mxu0 0.0
  %813 = vmatprep.subr.mxu0 0.0
  %814 = vmatpush1.msra.mxu0 0.0
  %815 = vmatprep.subr.mxu0 0.0
  %816 = vmatpush1.msra.mxu0 0.0
  %817 = vmatprep.subr.mxu0 0.0
  %818 = vmatpush1.msra.mxu0 0.0
  %819 = vmatprep.subr.mxu0 0.0
  %820 = vmatpush1.msra.mxu0 0.0
  %821 = vmatprep.subr.mxu0 0.0
  %822 = vmatpush1.msra.mxu0 0.0
  %823 = vmatprep.subr.mxu0 0.0
  %824 = vmatpush1.msra.mxu0 0.0
  %825 = vmatprep.subr.mxu0 0.0
  %826 = vmatpush1.msra.mxu0 0.0
  %827 = vmatprep.subr.mxu0 0.0
  %828 = vmatpush1.msra.mxu0 0.0
  %829 = vmatprep.subr.mxu0 0.0
  %830 = vmatpush1.msra.mxu0 0.0
  %831 = vmatprep.subr.mxu0 0.0
  %832 = vmatpush1.msra.mxu0 0.0
  %833 = vmatprep.subr.mxu0 0.0
  %834 = vmatpush1.msra.mxu0 0.0
  %835 = vmatprep.subr.mxu0 0.0
  %836 = vmatpush1.msra.mxu0 0.0
  %837 = vmatprep.subr.mxu0 0.0
  %838 = vmatpush1.msra.mxu0 0.0
  %839 = vmatprep.subr.mxu0 0.0
  %840 = vmatpush1.msra.mxu0 0.0
  %841 = vmatprep.subr.mxu0 0.0
  %842 = vmatpush1.msra.mxu0 0.0
  %843 = vmatprep.subr.mxu0 0.0
  %844 = vmatpush1.msra.mxu0 0.0
  %845 = vmatprep.subr.mxu0 0.0
  %846 = vmatpush1.msra.mxu0 0.0
  %847 = vmatprep.subr.mxu0 0.0
  %848 = vmatpush1.msra.mxu0 0.0
  %849 = vmatprep.subr.mxu0 0.0
  %850 = vmatpush1.msra.mxu0 0.0
  %851 = vmatprep.mubr.f32.mxu0 0.0
  %852 = vmatmul.mubr.f32.gmra.mrb[0].mxu0 %v505
  %v853 = vpop.f32.mrb[0].mxu0
  %v854 = vadd.f32 0.0, %v853
  %v855 = vpop.f32.mrb[0].mxu0
  %856 = vmatprep.mubr.f32.mxu0 0.0
  %857 = vmatmul.mubr.f32.gmra.mrb[0].mxu0 %v508
  %v858 = vpop.f32.mrb[0].mxu0
  %v859 = vadd.f32 0.0, %v858
  %v860 = vpop.f32.mrb[0].mxu0
  %861 = vdwg.mxu0
  %vm864 = vcmask 1040384
  %v865 = vrot.slane %v854, 7
  %v866 = vrot.slane %v859, 7
  %v867 = vsel %vm864, %v865, %v866
  %v870 = vsel %vm864, 0.0, %v865
  %v871 = vmul.f32 %v870, %v101
  %v872 = vmul.f32 %v867, %v102
  %v873 = vadd.f32 %v780, %v871
  %v874 = vadd.f32 %v781, %v872
  %s875 = scalar_lea.vmem %s3, 128
  %v876 = vld [vmem:[%s875] sm:$0xff]
  %v877 = vld [vmem:[%s875 + $0x8] sm:$0xff]
  %v878 = vld [vmem:[%s875 + $0x10] sm:$0xff]
  %v879 = vld [vmem:[%s875 + $0x18] sm:$0xff]
  %880 = vmatprep.subr.mxu0 0.0
  %881 = vmatpush1.msra.mxu0 %v876
  %882 = vmatprep.subr.mxu0 0.0
  %883 = vmatpush1.msra.mxu0 %v877
  %884 = vmatprep.subr.mxu0 0.0
  %885 = vmatpush1.msra.mxu0 %v878
  %886 = vmatprep.subr.mxu0 0.0
  %887 = vmatpush1.msra.mxu0 %v879
  %888 = vmatprep.subr.mxu0 0.0
  %889 = vmatpush1.msra.mxu0 0.0
  %890 = vmatprep.subr.mxu0 0.0
  %891 = vmatpush1.msra.mxu0 0.0
  %892 = vmatprep.subr.mxu0 0.0
  %893 = vmatpush1.msra.mxu0 0.0
  %894 = vmatprep.subr.mxu0 0.0
  %895 = vmatpush1.msra.mxu0 0.0
  %896 = vmatprep.subr.mxu0 0.0
  %897 = vmatpush1.msra.mxu0 0.0
  %898 = vmatprep.subr.mxu0 0.0
  %899 = vmatpush1.msra.mxu0 0.0
  %900 = vmatprep.subr.mxu0 0.0
  %901 = vmatpush1.msra.mxu0 0.0
  %902 = vmatprep.subr.mxu0 0.0
  %903 = vmatpush1.msra.mxu0 0.0
  %904 = vmatprep.subr.mxu0 0.0
  %905 = vmatpush1.msra.mxu0 0.0
  %906 = vmatprep.subr.mxu0 0.0
  %907 = vmatpush1.msra.mxu0 0.0
  %908 = vmatprep.subr.mxu0 0.0
  %909 = vmatpush1.msra.mxu0 0.0
  %910 = vmatprep.subr.mxu0 0.0
  %911 = vmatpush1.msra.mxu0 0.0
  %912 = vmatprep.subr.mxu0 0.0
  %913 = vmatpush1.msra.mxu0 0.0
  %914 = vmatprep.subr.mxu0 0.0
  %915 = vmatpush1.msra.mxu0 0.0
  %916 = vmatprep.subr.mxu0 0.0
  %917 = vmatpush1.msra.mxu0 0.0
  %918 = vmatprep.subr.mxu0 0.0
  %919 = vmatpush1.msra.mxu0 0.0
  %920 = vmatprep.subr.mxu0 0.0
  %921 = vmatpush1.msra.mxu0 0.0
  %922 = vmatprep.subr.mxu0 0.0
  %923 = vmatpush1.msra.mxu0 0.0
  %924 = vmatprep.subr.mxu0 0.0
  %925 = vmatpush1.msra.mxu0 0.0
  %926 = vmatprep.subr.mxu0 0.0
  %927 = vmatpush1.msra.mxu0 0.0
  %928 = vmatprep.subr.mxu0 0.0
  %929 = vmatpush1.msra.mxu0 0.0
  %930 = vmatprep.subr.mxu0 0.0
  %931 = vmatpush1.msra.mxu0 0.0
  %932 = vmatprep.subr.mxu0 0.0
  %933 = vmatpush1.msra.mxu0 0.0
  %934 = vmatprep.subr.mxu0 0.0
  %935 = vmatpush1.msra.mxu0 0.0
  %936 = vmatprep.subr.mxu0 0.0
  %937 = vmatpush1.msra.mxu0 0.0
  %938 = vmatprep.subr.mxu0 0.0
  %939 = vmatpush1.msra.mxu0 0.0
  %940 = vmatprep.subr.mxu0 0.0
  %941 = vmatpush1.msra.mxu0 0.0
  %942 = vmatprep.subr.mxu0 0.0
  %943 = vmatpush1.msra.mxu0 0.0
  %944 = vmatprep.mubr.f32.mxu0 0.0
  %945 = vmatmul.mubr.f32.gmra.mrb[0].mxu0 %v505
  %v946 = vpop.f32.mrb[0].mxu0
  %v947 = vadd.f32 0.0, %v946
  %v948 = vpop.f32.mrb[0].mxu0
  %949 = vmatprep.mubr.f32.mxu0 0.0
  %950 = vmatmul.mubr.f32.gmra.mrb[0].mxu0 %v508
  %v951 = vpop.f32.mrb[0].mxu0
  %v952 = vadd.f32 0.0, %v951
  %v953 = vpop.f32.mrb[0].mxu0
  %954 = vdwg.mxu0
  %v955 = vadd.f32 %v873, %v947
  %v956 = vadd.f32 %v874, %v952
  %v957 = vld [vmem:[%s4] sm:$0x1]
  %v959 = vlaneseq
  %v960 = vshrl.u32 %v959, 7
  %v961 = vsub.s32 0, %v960
  %v962 = vrot.slane %v957, %v961
  %v964 = vadd.f32 %v955, %v962
  %v965 = vadd.f32 %v956, %v962
  %v966 = vmax.f32 %v964, 0.0
  %v967 = vmax.f32 %v965, 0.0
  %v968 = vld [vmem:[%s5] sm:$0xff]
  %v969 = vld [vmem:[%s5 + $0x8] sm:$0xff]
  %v970 = vld [vmem:[%s5 + $0x10] sm:$0xff]
  %v971 = vld [vmem:[%s5 + $0x18] sm:$0xff]
  %v973 = vsel %vm503, %v966, 0
  %v976 = vsel %vm503, %v967, 0
  %978 = vmatprep.subr.mxu0 0.0
  %979 = vmatpush1.msra.mxu0 %v968
  %980 = vmatprep.subr.mxu0 0.0
  %981 = vmatpush1.msra.mxu0 %v969
  %982 = vmatprep.subr.mxu0 0.0
  %983 = vmatpush1.msra.mxu0 %v970
  %984 = vmatprep.subr.mxu0 0.0
  %985 = vmatpush1.msra.mxu0 %v971
  %986 = vmatprep.subr.mxu0 0.0
  %987 = vmatpush1.msra.mxu0 0.0
  %988 = vmatprep.subr.mxu0 0.0
  %989 = vmatpush1.msra.mxu0 0.0
  %990 = vmatprep.subr.mxu0 0.0
  %991 = vmatpush1.msra.mxu0 0.0
  %992 = vmatprep.subr.mxu0 0.0
  %993 = vmatpush1.msra.mxu0 0.0
  %994 = vmatprep.subr.mxu0 0.0
  %995 = vmatpush1.msra.mxu0 0.0
  %996 = vmatprep.subr.mxu0 0.0
  %997 = vmatpush1.msra.mxu0 0.0
  %998 = vmatprep.subr.mxu0 0.0
  %999 = vmatpush1.msra.mxu0 0.0
  %1000 = vmatprep.subr.mxu0 0.0
  %1001 = vmatpush1.msra.mxu0 0.0
  %1002 = vmatprep.subr.mxu0 0.0
  %1003 = vmatpush1.msra.mxu0 0.0
  %1004 = vmatprep.subr.mxu0 0.0
  %1005 = vmatpush1.msra.mxu0 0.0
  %1006 = vmatprep.subr.mxu0 0.0
  %1007 = vmatpush1.msra.mxu0 0.0
  %1008 = vmatprep.subr.mxu0 0.0
  %1009 = vmatpush1.msra.mxu0 0.0
  %1010 = vmatprep.subr.mxu0 0.0
  %1011 = vmatpush1.msra.mxu0 0.0
  %1012 = vmatprep.subr.mxu0 0.0
  %1013 = vmatpush1.msra.mxu0 0.0
  %1014 = vmatprep.subr.mxu0 0.0
  %1015 = vmatpush1.msra.mxu0 0.0
  %1016 = vmatprep.subr.mxu0 0.0
  %1017 = vmatpush1.msra.mxu0 0.0
  %1018 = vmatprep.subr.mxu0 0.0
  %1019 = vmatpush1.msra.mxu0 0.0
  %1020 = vmatprep.subr.mxu0 0.0
  %1021 = vmatpush1.msra.mxu0 0.0
  %1022 = vmatprep.subr.mxu0 0.0
  %1023 = vmatpush1.msra.mxu0 0.0
  %1024 = vmatprep.subr.mxu0 0.0
  %1025 = vmatpush1.msra.mxu0 0.0
  %1026 = vmatprep.subr.mxu0 0.0
  %1027 = vmatpush1.msra.mxu0 0.0
  %1028 = vmatprep.subr.mxu0 0.0
  %1029 = vmatpush1.msra.mxu0 0.0
  %1030 = vmatprep.subr.mxu0 0.0
  %1031 = vmatpush1.msra.mxu0 0.0
  %1032 = vmatprep.subr.mxu0 0.0
  %1033 = vmatpush1.msra.mxu0 0.0
  %1034 = vmatprep.subr.mxu0 0.0
  %1035 = vmatpush1.msra.mxu0 0.0
  %1036 = vmatprep.subr.mxu0 0.0
  %1037 = vmatpush1.msra.mxu0 0.0
  %1038 = vmatprep.subr.mxu0 0.0
  %1039 = vmatpush1.msra.mxu0 0.0
  %1040 = vmatprep.subr.mxu0 0.0
  %1041 = vmatpush1.msra.mxu0 0.0
  %1042 = vmatprep.mubr.f32.mxu0 0.0
  %1043 = vmatmul.mubr.f32.gmra.mrb[0].mxu0 %v973
  %v1044 = vpop.f32.mrb[0].mxu0
  %v1045 = vadd.f32 0.0, %v1044
  %v1046 = vpop.f32.mrb[0].mxu0
  %1047 = vmatprep.mubr.f32.mxu0 0.0
  %1048 = vmatmul.mubr.f32.gmra.mrb[0].mxu0 %v976
  %v1049 = vpop.f32.mrb[0].mxu0
  %v1050 = vadd.f32 0.0, %v1049
  %v1051 = vpop.f32.mrb[0].mxu0
  %1052 = vdwg.mxu0
  %v1055 = vrot.slane %v1045, 4
  %v1056 = vrot.slane %v1050, 4
  %v1057 = vsel %vm587, %v1055, %v1056
  %v1060 = vsel %vm587, 0.0, %v1055
  %v1061 = vmul.f32 %v1060, %v143
  %v1062 = vmul.f32 %v1057, %v144
  %s1063 = scalar_lea.vmem %s5, 32
  %v1064 = vld [vmem:[%s1063] sm:$0xff]
  %v1065 = vld [vmem:[%s1063 + $0x8] sm:$0xff]
  %v1066 = vld [vmem:[%s1063 + $0x10] sm:$0xff]
  %v1067 = vld [vmem:[%s1063 + $0x18] sm:$0xff]
  %1068 = vmatprep.subr.mxu0 0.0
  %1069 = vmatpush1.msra.mxu0 %v1064
  %1070 = vmatprep.subr.mxu0 0.0
  %1071 = vmatpush1.msra.mxu0 %v1065
  %1072 = vmatprep.subr.mxu0 0.0
  %1073 = vmatpush1.msra.mxu0 %v1066
  %1074 = vmatprep.subr.mxu0 0.0
  %1075 = vmatpush1.msra.mxu0 %v1067
  %1076 = vmatprep.subr.mxu0 0.0
  %1077 = vmatpush1.msra.mxu0 0.0
  %1078 = vmatprep.subr.mxu0 0.0
  %1079 = vmatpush1.msra.mxu0 0.0
  %1080 = vmatprep.subr.mxu0 0.0
  %1081 = vmatpush1.msra.mxu0 0.0
  %1082 = vmatprep.subr.mxu0 0.0
  %1083 = vmatpush1.msra.mxu0 0.0
  %1084 = vmatprep.subr.mxu0 0.0
  %1085 = vmatpush1.msra.mxu0 0.0
  %1086 = vmatprep.subr.mxu0 0.0
  %1087 = vmatpush1.msra.mxu0 0.0
  %1088 = vmatprep.subr.mxu0 0.0
  %1089 = vmatpush1.msra.mxu0 0.0
  %1090 = vmatprep.subr.mxu0 0.0
  %1091 = vmatpush1.msra.mxu0 0.0
  %1092 = vmatprep.subr.mxu0 0.0
  %1093 = vmatpush1.msra.mxu0 0.0
  %1094 = vmatprep.subr.mxu0 0.0
  %1095 = vmatpush1.msra.mxu0 0.0
  %1096 = vmatprep.subr.mxu0 0.0
  %1097 = vmatpush1.msra.mxu0 0.0
  %1098 = vmatprep.subr.mxu0 0.0
  %1099 = vmatpush1.msra.mxu0 0.0
  %1100 = vmatprep.subr.mxu0 0.0
  %1101 = vmatpush1.msra.mxu0 0.0
  %1102 = vmatprep.subr.mxu0 0.0
  %1103 = vmatpush1.msra.mxu0 0.0
  %1104 = vmatprep.subr.mxu0 0.0
  %1105 = vmatpush1.msra.mxu0 0.0
  %1106 = vmatprep.subr.mxu0 0.0
  %1107 = vmatpush1.msra.mxu0 0.0
  %1108 = vmatprep.subr.mxu0 0.0
  %1109 = vmatpush1.msra.mxu0 0.0
  %1110 = vmatprep.subr.mxu0 0.0
  %1111 = vmatpush1.msra.mxu0 0.0
  %1112 = vmatprep.subr.mxu0 0.0
  %1113 = vmatpush1.msra.mxu0 0.0
  %1114 = vmatprep.subr.mxu0 0.0
  %1115 = vmatpush1.msra.mxu0 0.0
  %1116 = vmatprep.subr.mxu0 0.0
  %1117 = vmatpush1.msra.mxu0 0.0
  %1118 = vmatprep.subr.mxu0 0.0
  %1119 = vmatpush1.msra.mxu0 0.0
  %1120 = vmatprep.subr.mxu0 0.0
  %1121 = vmatpush1.msra.mxu0 0.0
  %1122 = vmatprep.subr.mxu0 0.0
  %1123 = vmatpush1.msra.mxu0 0.0
  %1124 = vmatprep.subr.mxu0 0.0
  %1125 = vmatpush1.msra.mxu0 0.0
  %1126 = vmatprep.subr.mxu0 0.0
  %1127 = vmatpush1.msra.mxu0 0.0
  %1128 = vmatprep.subr.mxu0 0.0
  %1129 = vmatpush1.msra.mxu0 0.0
  %1130 = vmatprep.subr.mxu0 0.0
  %1131 = vmatpush1.msra.mxu0 0.0
  %1132 = vmatprep.mubr.f32.mxu0 0.0
  %1133 = vmatmul.mubr.f32.gmra.mrb[0].mxu0 %v973
  %v1134 = vpop.f32.mrb[0].mxu0
  %v1135 = vadd.f32 0.0, %v1134
  %v1136 = vpop.f32.mrb[0].mxu0
  %1137 = vmatprep.mubr.f32.mxu0 0.0
  %1138 = vmatmul.mubr.f32.gmra.mrb[0].mxu0 %v976
  %v1139 = vpop.f32.mrb[0].mxu0
  %v1140 = vadd.f32 0.0, %v1139
  %v1141 = vpop.f32.mrb[0].mxu0
  %1142 = vdwg.mxu0
  %v1145 = vrot.slane %v1135, 5
  %v1146 = vrot.slane %v1140, 5
  %v1147 = vsel %vm678, %v1145, %v1146
  %v1150 = vsel %vm678, 0.0, %v1145
  %v1151 = vmul.f32 %v1150, %v129
  %v1152 = vmul.f32 %v1147, %v130
  %v1153 = vadd.f32 %v1061, %v1151
  %v1154 = vadd.f32 %v1062, %v1152
  %s1155 = scalar_lea.vmem %s5, 64
  %v1156 = vld [vmem:[%s1155] sm:$0xff]
  %v1157 = vld [vmem:[%s1155 + $0x8] sm:$0xff]
  %v1158 = vld [vmem:[%s1155 + $0x10] sm:$0xff]
  %v1159 = vld [vmem:[%s1155 + $0x18] sm:$0xff]
  %1160 = vmatprep.subr.mxu0 0.0
  %1161 = vmatpush1.msra.mxu0 %v1156
  %1162 = vmatprep.subr.mxu0 0.0
  %1163 = vmatpush1.msra.mxu0 %v1157
  %1164 = vmatprep.subr.mxu0 0.0
  %1165 = vmatpush1.msra.mxu0 %v1158
  %1166 = vmatprep.subr.mxu0 0.0
  %1167 = vmatpush1.msra.mxu0 %v1159
  %1168 = vmatprep.subr.mxu0 0.0
  %1169 = vmatpush1.msra.mxu0 0.0
  %1170 = vmatprep.subr.mxu0 0.0
  %1171 = vmatpush1.msra.mxu0 0.0
  %1172 = vmatprep.subr.mxu0 0.0
  %1173 = vmatpush1.msra.mxu0 0.0
  %1174 = vmatprep.subr.mxu0 0.0
  %1175 = vmatpush1.msra.mxu0 0.0
  %1176 = vmatprep.subr.mxu0 0.0
  %1177 = vmatpush1.msra.mxu0 0.0
  %1178 = vmatprep.subr.mxu0 0.0
  %1179 = vmatpush1.msra.mxu0 0.0
  %1180 = vmatprep.subr.mxu0 0.0
  %1181 = vmatpush1.msra.mxu0 0.0
  %1182 = vmatprep.subr.mxu0 0.0
  %1183 = vmatpush1.msra.mxu0 0.0
  %1184 = vmatprep.subr.mxu0 0.0
  %1185 = vmatpush1.msra.mxu0 0.0
  %1186 = vmatprep.subr.mxu0 0.0
  %1187 = vmatpush1.msra.mxu0 0.0
  %1188 = vmatprep.subr.mxu0 0.0
  %1189 = vmatpush1.msra.mxu0 0.0
  %1190 = vmatprep.subr.mxu0 0.0
  %1191 = vmatpush1.msra.mxu0 0.0
  %1192 = vmatprep.subr.mxu0 0.0
  %1193 = vmatpush1.msra.mxu0 0.0
  %1194 = vmatprep.subr.mxu0 0.0
  %1195 = vmatpush1.msra.mxu0 0.0
  %1196 = vmatprep.subr.mxu0 0.0
  %1197 = vmatpush1.msra.mxu0 0.0
  %1198 = vmatprep.subr.mxu0 0.0
  %1199 = vmatpush1.msra.mxu0 0.0
  %1200 = vmatprep.subr.mxu0 0.0
  %1201 = vmatpush1.msra.mxu0 0.0
  %1202 = vmatprep.subr.mxu0 0.0
  %1203 = vmatpush1.msra.mxu0 0.0
  %1204 = vmatprep.subr.mxu0 0.0
  %1205 = vmatpush1.msra.mxu0 0.0
  %1206 = vmatprep.subr.mxu0 0.0
  %1207 = vmatpush1.msra.mxu0 0.0
  %1208 = vmatprep.subr.mxu0 0.0
  %1209 = vmatpush1.msra.mxu0 0.0
  %1210 = vmatprep.subr.mxu0 0.0
  %1211 = vmatpush1.msra.mxu0 0.0
  %1212 = vmatprep.subr.mxu0 0.0
  %1213 = vmatpush1.msra.mxu0 0.0
  %1214 = vmatprep.subr.mxu0 0.0
  %1215 = vmatpush1.msra.mxu0 0.0
  %1216 = vmatprep.subr.mxu0 0.0
  %1217 = vmatpush1.msra.mxu0 0.0
  %1218 = vmatprep.subr.mxu0 0.0
  %1219 = vmatpush1.msra.mxu0 0.0
  %1220 = vmatprep.subr.mxu0 0.0
  %1221 = vmatpush1.msra.mxu0 0.0
  %1222 = vmatprep.subr.mxu0 0.0
  %1223 = vmatpush1.msra.mxu0 0.0
  %1224 = vmatprep.mubr.f32.mxu0 0.0
  %1225 = vmatmul.mubr.f32.gmra.mrb[0].mxu0 %v973
  %v1226 = vpop.f32.mrb[0].mxu0
  %v1227 = vadd.f32 0.0, %v1226
  %v1228 = vpop.f32.mrb[0].mxu0
  %1229 = vmatprep.mubr.f32.mxu0 0.0
  %1230 = vmatmul.mubr.f32.gmra.mrb[0].mxu0 %v976
  %v1231 = vpop.f32.mrb[0].mxu0
  %v1232 = vadd.f32 0.0, %v1231
  %v1233 = vpop.f32.mrb[0].mxu0
  %1234 = vdwg.mxu0
  %v1237 = vrot.slane %v1227, 6
  %v1238 = vrot.slane %v1232, 6
  %v1239 = vsel %vm771, %v1237, %v1238
  %v1242 = vsel %vm771, 0.0, %v1237
  %v1243 = vmul.f32 %v1242, %v115
  %v1244 = vmul.f32 %v1239, %v116
  %v1245 = vadd.f32 %v1153, %v1243
  %v1246 = vadd.f32 %v1154, %v1244
  %s1247 = scalar_lea.vmem %s5, 96
  %v1248 = vld [vmem:[%s1247] sm:$0xff]
  %v1249 = vld [vmem:[%s1247 + $0x8] sm:$0xff]
  %v1250 = vld [vmem:[%s1247 + $0x10] sm:$0xff]
  %v1251 = vld [vmem:[%s1247 + $0x18] sm:$0xff]
  %1252 = vmatprep.subr.mxu0 0.0
  %1253 = vmatpush1.msra.mxu0 %v1248
  %1254 = vmatprep.subr.mxu0 0.0
  %1255 = vmatpush1.msra.mxu0 %v1249
  %1256 = vmatprep.subr.mxu0 0.0
  %1257 = vmatpush1.msra.mxu0 %v1250
  %1258 = vmatprep.subr.mxu0 0.0
  %1259 = vmatpush1.msra.mxu0 %v1251
  %1260 = vmatprep.subr.mxu0 0.0
  %1261 = vmatpush1.msra.mxu0 0.0
  %1262 = vmatprep.subr.mxu0 0.0
  %1263 = vmatpush1.msra.mxu0 0.0
  %1264 = vmatprep.subr.mxu0 0.0
  %1265 = vmatpush1.msra.mxu0 0.0
  %1266 = vmatprep.subr.mxu0 0.0
  %1267 = vmatpush1.msra.mxu0 0.0
  %1268 = vmatprep.subr.mxu0 0.0
  %1269 = vmatpush1.msra.mxu0 0.0
  %1270 = vmatprep.subr.mxu0 0.0
  %1271 = vmatpush1.msra.mxu0 0.0
  %1272 = vmatprep.subr.mxu0 0.0
  %1273 = vmatpush1.msra.mxu0 0.0
  %1274 = vmatprep.subr.mxu0 0.0
  %1275 = vmatpush1.msra.mxu0 0.0
  %1276 = vmatprep.subr.mxu0 0.0
  %1277 = vmatpush1.msra.mxu0 0.0
  %1278 = vmatprep.subr.mxu0 0.0
  %1279 = vmatpush1.msra.mxu0 0.0
  %1280 = vmatprep.subr.mxu0 0.0
  %1281 = vmatpush1.msra.mxu0 0.0
  %1282 = vmatprep.subr.mxu0 0.0
  %1283 = vmatpush1.msra.mxu0 0.0
  %1284 = vmatprep.subr.mxu0 0.0
  %1285 = vmatpush1.msra.mxu0 0.0
  %1286 = vmatprep.subr.mxu0 0.0
  %1287 = vmatpush1.msra.mxu0 0.0
  %1288 = vmatprep.subr.mxu0 0.0
  %1289 = vmatpush1.msra.mxu0 0.0
  %1290 = vmatprep.subr.mxu0 0.0
  %1291 = vmatpush1.msra.mxu0 0.0
  %1292 = vmatprep.subr.mxu0 0.0
  %1293 = vmatpush1.msra.mxu0 0.0
  %1294 = vmatprep.subr.mxu0 0.0
  %1295 = vmatpush1.msra.mxu0 0.0
  %1296 = vmatprep.subr.mxu0 0.0
  %1297 = vmatpush1.msra.mxu0 0.0
  %1298 = vmatprep.subr.mxu0 0.0
  %1299 = vmatpush1.msra.mxu0 0.0
  %1300 = vmatprep.subr.mxu0 0.0
  %1301 = vmatpush1.msra.mxu0 0.0
  %1302 = vmatprep.subr.mxu0 0.0
  %1303 = vmatpush1.msra.mxu0 0.0
  %1304 = vmatprep.subr.mxu0 0.0
  %1305 = vmatpush1.msra.mxu0 0.0
  %1306 = vmatprep.subr.mxu0 0.0
  %1307 = vmatpush1.msra.mxu0 0.0
  %1308 = vmatprep.subr.mxu0 0.0
  %1309 = vmatpush1.msra.mxu0 0.0
  %1310 = vmatprep.subr.mxu0 0.0
  %1311 = vmatpush1.msra.mxu0 0.0
  %1312 = vmatprep.subr.mxu0 0.0
  %1313 = vmatpush1.msra.mxu0 0.0
  %1314 = vmatprep.subr.mxu0 0.0
  %1315 = vmatpush1.msra.mxu0 0.0
  %1316 = vmatprep.mubr.f32.mxu0 0.0
  %1317 = vmatmul.mubr.f32.gmra.mrb[0].mxu0 %v973
  %v1318 = vpop.f32.mrb[0].mxu0
  %v1319 = vadd.f32 0.0, %v1318
  %v1320 = vpop.f32.mrb[0].mxu0
  %1321 = vmatprep.mubr.f32.mxu0 0.0
  %1322 = vmatmul.mubr.f32.gmra.mrb[0].mxu0 %v976
  %v1323 = vpop.f32.mrb[0].mxu0
  %v1324 = vadd.f32 0.0, %v1323
  %v1325 = vpop.f32.mrb[0].mxu0
  %1326 = vdwg.mxu0
  %v1329 = vrot.slane %v1319, 7
  %v1330 = vrot.slane %v1324, 7
  %v1331 = vsel %vm864, %v1329, %v1330
  %v1334 = vsel %vm864, 0.0, %v1329
  %v1335 = vmul.f32 %v1334, %v101
  %v1336 = vmul.f32 %v1331, %v102
  %v1337 = vadd.f32 %v1245, %v1335
  %v1338 = vadd.f32 %v1246, %v1336
  %s1339 = scalar_lea.vmem %s5, 128
  %v1340 = vld [vmem:[%s1339] sm:$0xff]
  %v1341 = vld [vmem:[%s1339 + $0x8] sm:$0xff]
  %v1342 = vld [vmem:[%s1339 + $0x10] sm:$0xff]
  %v1343 = vld [vmem:[%s1339 + $0x18] sm:$0xff]
  %1344 = vmatprep.subr.mxu0 0.0
  %1345 = vmatpush1.msra.mxu0 %v1340
  %1346 = vmatprep.subr.mxu0 0.0
  %1347 = vmatpush1.msra.mxu0 %v1341
  %1348 = vmatprep.subr.mxu0 0.0
  %1349 = vmatpush1.msra.mxu0 %v1342
  %1350 = vmatprep.subr.mxu0 0.0
  %1351 = vmatpush1.msra.mxu0 %v1343
  %1352 = vmatprep.subr.mxu0 0.0
  %1353 = vmatpush1.msra.mxu0 0.0
  %1354 = vmatprep.subr.mxu0 0.0
  %1355 = vmatpush1.msra.mxu0 0.0
  %1356 = vmatprep.subr.mxu0 0.0
  %1357 = vmatpush1.msra.mxu0 0.0
  %1358 = vmatprep.subr.mxu0 0.0
  %1359 = vmatpush1.msra.mxu0 0.0
  %1360 = vmatprep.subr.mxu0 0.0
  %1361 = vmatpush1.msra.mxu0 0.0
  %1362 = vmatprep.subr.mxu0 0.0
  %1363 = vmatpush1.msra.mxu0 0.0
  %1364 = vmatprep.subr.mxu0 0.0
  %1365 = vmatpush1.msra.mxu0 0.0
  %1366 = vmatprep.subr.mxu0 0.0
  %1367 = vmatpush1.msra.mxu0 0.0
  %1368 = vmatprep.subr.mxu0 0.0
  %1369 = vmatpush1.msra.mxu0 0.0
  %1370 = vmatprep.subr.mxu0 0.0
  %1371 = vmatpush1.msra.mxu0 0.0
  %1372 = vmatprep.subr.mxu0 0.0
  %1373 = vmatpush1.msra.mxu0 0.0
  %1374 = vmatprep.subr.mxu0 0.0
  %1375 = vmatpush1.msra.mxu0 0.0
  %1376 = vmatprep.subr.mxu0 0.0
  %1377 = vmatpush1.msra.mxu0 0.0
  %1378 = vmatprep.subr.mxu0 0.0
  %1379 = vmatpush1.msra.mxu0 0.0
  %1380 = vmatprep.subr.mxu0 0.0
  %1381 = vmatpush1.msra.mxu0 0.0
  %1382 = vmatprep.subr.mxu0 0.0
  %1383 = vmatpush1.msra.mxu0 0.0
  %1384 = vmatprep.subr.mxu0 0.0
  %1385 = vmatpush1.msra.mxu0 0.0
  %1386 = vmatprep.subr.mxu0 0.0
  %1387 = vmatpush1.msra.mxu0 0.0
  %1388 = vmatprep.subr.mxu0 0.0
  %1389 = vmatpush1.msra.mxu0 0.0
  %1390 = vmatprep.subr.mxu0 0.0
  %1391 = vmatpush1.msra.mxu0 0.0
  %1392 = vmatprep.subr.mxu0 0.0
  %1393 = vmatpush1.msra.mxu0 0.0
  %1394 = vmatprep.subr.mxu0 0.0
  %1395 = vmatpush1.msra.mxu0 0.0
  %1396 = vmatprep.subr.mxu0 0.0
  %1397 = vmatpush1.msra.mxu0 0.0
  %1398 = vmatprep.subr.mxu0 0.0
  %1399 = vmatpush1.msra.mxu0 0.0
  %1400 = vmatprep.subr.mxu0 0.0
  %1401 = vmatpush1.msra.mxu0 0.0
  %1402 = vmatprep.subr.mxu0 0.0
  %1403 = vmatpush1.msra.mxu0 0.0
  %1404 = vmatprep.subr.mxu0 0.0
  %1405 = vmatpush1.msra.mxu0 0.0
  %1406 = vmatprep.subr.mxu0 0.0
  %1407 = vmatpush1.msra.mxu0 0.0
  %1408 = vmatprep.mubr.f32.mxu0 0.0
  %1409 = vmatmul.mubr.f32.gmra.mrb[0].mxu0 %v973
  %v1410 = vpop.f32.mrb[0].mxu0
  %v1411 = vadd.f32 0.0, %v1410
  %v1412 = vpop.f32.mrb[0].mxu0
  %1413 = vmatprep.mubr.f32.mxu0 0.0
  %1414 = vmatmul.mubr.f32.gmra.mrb[0].mxu0 %v976
  %v1415 = vpop.f32.mrb[0].mxu0
  %v1416 = vadd.f32 0.0, %v1415
  %v1417 = vpop.f32.mrb[0].mxu0
  %1418 = vdwg.mxu0
  %v1419 = vadd.f32 %v1337, %v1411
  %v1420 = vadd.f32 %v1338, %v1416
  %v1421 = vld [vmem:[%s6] sm:$0x1]
  %v1423 = vlaneseq
  %v1424 = vshrl.u32 %v1423, 7
  %v1425 = vsub.s32 0, %v1424
  %v1426 = vrot.slane %v1421, %v1425
  %v1428 = vadd.f32 %v1419, %v1426
  %v1429 = vadd.f32 %v1420, %v1426
  %v1430 = vadd.f32 %v1428, %v491
  %v1431 = vadd.f32 %v1429, %v496
  %v1432 = vmax.f32 %v1430, 0.0
  %v1433 = vmax.f32 %v1431, 0.0
  %v1434 = vld [vmem:[%s7] sm:$0xff]
  %v1435 = vld [vmem:[%s7 + $0x8] sm:$0xff]
  %v1436 = vld [vmem:[%s7 + $0x10] sm:$0xff]
  %v1437 = vld [vmem:[%s7 + $0x18] sm:$0xff]
  %v1439 = vsel %vm503, %v1432, 0
  %v1442 = vsel %vm503, %v1433, 0
  %1444 = vmatprep.subr.mxu0 0.0
  %1445 = vmatpush1.msra.mxu0 %v1434
  %1446 = vmatprep.subr.mxu0 0.0
  %1447 = vmatpush1.msra.mxu0 %v1435
  %1448 = vmatprep.subr.mxu0 0.0
  %1449 = vmatpush1.msra.mxu0 %v1436
  %1450 = vmatprep.subr.mxu0 0.0
  %1451 = vmatpush1.msra.mxu0 %v1437
  %1452 = vmatprep.subr.mxu0 0.0
  %1453 = vmatpush1.msra.mxu0 0.0
  %1454 = vmatprep.subr.mxu0 0.0
  %1455 = vmatpush1.msra.mxu0 0.0
  %1456 = vmatprep.subr.mxu0 0.0
  %1457 = vmatpush1.msra.mxu0 0.0
  %1458 = vmatprep.subr.mxu0 0.0
  %1459 = vmatpush1.msra.mxu0 0.0
  %1460 = vmatprep.subr.mxu0 0.0
  %1461 = vmatpush1.msra.mxu0 0.0
  %1462 = vmatprep.subr.mxu0 0.0
  %1463 = vmatpush1.msra.mxu0 0.0
  %1464 = vmatprep.subr.mxu0 0.0
  %1465 = vmatpush1.msra.mxu0 0.0
  %1466 = vmatprep.subr.mxu0 0.0
  %1467 = vmatpush1.msra.mxu0 0.0
  %1468 = vmatprep.subr.mxu0 0.0
  %1469 = vmatpush1.msra.mxu0 0.0
  %1470 = vmatprep.subr.mxu0 0.0
  %1471 = vmatpush1.msra.mxu0 0.0
  %1472 = vmatprep.subr.mxu0 0.0
  %1473 = vmatpush1.msra.mxu0 0.0
  %1474 = vmatprep.subr.mxu0 0.0
  %1475 = vmatpush1.msra.mxu0 0.0
  %1476 = vmatprep.subr.mxu0 0.0
  %1477 = vmatpush1.msra.mxu0 0.0
  %1478 = vmatprep.subr.mxu0 0.0
  %1479 = vmatpush1.msra.mxu0 0.0
  %1480 = vmatprep.subr.mxu0 0.0
  %1481 = vmatpush1.msra.mxu0 0.0
  %1482 = vmatprep.subr.mxu0 0.0
  %1483 = vmatpush1.msra.mxu0 0.0
  %1484 = vmatprep.subr.mxu0 0.0
  %1485 = vmatpush1.msra.mxu0 0.0
  %1486 = vmatprep.subr.mxu0 0.0
  %1487 = vmatpush1.msra.mxu0 0.0
  %1488 = vmatprep.subr.mxu0 0.0
  %1489 = vmatpush1.msra.mxu0 0.0
  %1490 = vmatprep.subr.mxu0 0.0
  %1491 = vmatpush1.msra.mxu0 0.0
  %1492 = vmatprep.subr.mxu0 0.0
  %1493 = vmatpush1.msra.mxu0 0.0
  %1494 = vmatprep.subr.mxu0 0.0
  %1495 = vmatpush1.msra.mxu0 0.0
  %1496 = vmatprep.subr.mxu0 0.0
  %1497 = vmatpush1.msra.mxu0 0.0
  %1498 = vmatprep.subr.mxu0 0.0
  %1499 = vmatpush1.msra.mxu0 0.0
  %1500 = vmatprep.subr.mxu0 0.0
  %1501 = vmatpush1.msra.mxu0 0.0
  %1502 = vmatprep.subr.mxu0 0.0
  %1503 = vmatpush1.msra.mxu0 0.0
  %1504 = vmatprep.subr.mxu0 0.0
  %1505 = vmatpush1.msra.mxu0 0.0
  %1506 = vmatprep.subr.mxu0 0.0
  %1507 = vmatpush1.msra.mxu0 0.0
  %1508 = vmatprep.mubr.f32.mxu0 0.0
  %1509 = vmatmul.mubr.f32.gmra.mrb[0].mxu0 %v1439
  %v1510 = vpop.f32.mrb[0].mxu0
  %v1511 = vadd.f32 0.0, %v1510
  %v1512 = vpop.f32.mrb[0].mxu0
  %1513 = vmatprep.mubr.f32.mxu0 0.0
  %1514 = vmatmul.mubr.f32.gmra.mrb[0].mxu0 %v1442
  %v1515 = vpop.f32.mrb[0].mxu0
  %v1516 = vadd.f32 0.0, %v1515
  %v1517 = vpop.f32.mrb[0].mxu0
  %1518 = vdwg.mxu0
  %vm1521 = vcmask 1045504
  %v1522 = vrot.slane %v1511, 2
  %v1523 = vrot.slane %v1516, 2
  %v1524 = vsel %vm1521, %v1522, %v1523
  %v1527 = vsel %vm1521, 0.0, %v1522
  %v1528 = vmul.f32 %v1527, %v157
  %v1529 = vmul.f32 %v1524, %v158
  %s1530 = scalar_lea.vmem %s7, 32
  %v1531 = vld [vmem:[%s1530] sm:$0xff]
  %v1532 = vld [vmem:[%s1530 + $0x8] sm:$0xff]
  %v1533 = vld [vmem:[%s1530 + $0x10] sm:$0xff]
  %v1534 = vld [vmem:[%s1530 + $0x18] sm:$0xff]
  %1535 = vmatprep.subr.mxu0 0.0
  %1536 = vmatpush1.msra.mxu0 %v1531
  %1537 = vmatprep.subr.mxu0 0.0
  %1538 = vmatpush1.msra.mxu0 %v1532
  %1539 = vmatprep.subr.mxu0 0.0
  %1540 = vmatpush1.msra.mxu0 %v1533
  %1541 = vmatprep.subr.mxu0 0.0
  %1542 = vmatpush1.msra.mxu0 %v1534
  %1543 = vmatprep.subr.mxu0 0.0
  %1544 = vmatpush1.msra.mxu0 0.0
  %1545 = vmatprep.subr.mxu0 0.0
  %1546 = vmatpush1.msra.mxu0 0.0
  %1547 = vmatprep.subr.mxu0 0.0
  %1548 = vmatpush1.msra.mxu0 0.0
  %1549 = vmatprep.subr.mxu0 0.0
  %1550 = vmatpush1.msra.mxu0 0.0
  %1551 = vmatprep.subr.mxu0 0.0
  %1552 = vmatpush1.msra.mxu0 0.0
  %1553 = vmatprep.subr.mxu0 0.0
  %1554 = vmatpush1.msra.mxu0 0.0
  %1555 = vmatprep.subr.mxu0 0.0
  %1556 = vmatpush1.msra.mxu0 0.0
  %1557 = vmatprep.subr.mxu0 0.0
  %1558 = vmatpush1.msra.mxu0 0.0
  %1559 = vmatprep.subr.mxu0 0.0
  %1560 = vmatpush1.msra.mxu0 0.0
  %1561 = vmatprep.subr.mxu0 0.0
  %1562 = vmatpush1.msra.mxu0 0.0
  %1563 = vmatprep.subr.mxu0 0.0
  %1564 = vmatpush1.msra.mxu0 0.0
  %1565 = vmatprep.subr.mxu0 0.0
  %1566 = vmatpush1.msra.mxu0 0.0
  %1567 = vmatprep.subr.mxu0 0.0
  %1568 = vmatpush1.msra.mxu0 0.0
  %1569 = vmatprep.subr.mxu0 0.0
  %1570 = vmatpush1.msra.mxu0 0.0
  %1571 = vmatprep.subr.mxu0 0.0
  %1572 = vmatpush1.msra.mxu0 0.0
  %1573 = vmatprep.subr.mxu0 0.0
  %1574 = vmatpush1.msra.mxu0 0.0
  %1575 = vmatprep.subr.mxu0 0.0
  %1576 = vmatpush1.msra.mxu0 0.0
  %1577 = vmatprep.subr.mxu0 0.0
  %1578 = vmatpush1.msra.mxu0 0.0
  %1579 = vmatprep.subr.mxu0 0.0
  %1580 = vmatpush1.msra.mxu0 0.0
  %1581 = vmatprep.subr.mxu0 0.0
  %1582 = vmatpush1.msra.mxu0 0.0
  %1583 = vmatprep.subr.mxu0 0.0
  %1584 = vmatpush1.msra.mxu0 0.0
  %1585 = vmatprep.subr.mxu0 0.0
  %1586 = vmatpush1.msra.mxu0 0.0
  %1587 = vmatprep.subr.mxu0 0.0
  %1588 = vmatpush1.msra.mxu0 0.0
  %1589 = vmatprep.subr.mxu0 0.0
  %1590 = vmatpush1.msra.mxu0 0.0
  %1591 = vmatprep.subr.mxu0 0.0
  %1592 = vmatpush1.msra.mxu0 0.0
  %1593 = vmatprep.subr.mxu0 0.0
  %1594 = vmatpush1.msra.mxu0 0.0
  %1595 = vmatprep.subr.mxu0 0.0
  %1596 = vmatpush1.msra.mxu0 0.0
  %1597 = vmatprep.subr.mxu0 0.0
  %1598 = vmatpush1.msra.mxu0 0.0
  %1599 = vmatprep.mubr.f32.mxu0 0.0
  %1600 = vmatmul.mubr.f32.gmra.mrb[0].mxu0 %v1439
  %v1601 = vpop.f32.mrb[0].mxu0
  %v1602 = vadd.f32 0.0, %v1601
  %v1603 = vpop.f32.mrb[0].mxu0
  %1604 = vmatprep.mubr.f32.mxu0 0.0
  %1605 = vmatmul.mubr.f32.gmra.mrb[0].mxu0 %v1442
  %v1606 = vpop.f32.mrb[0].mxu0
  %v1607 = vadd.f32 0.0, %v1606
  %v1608 = vpop.f32.mrb[0].mxu0
  %1609 = vdwg.mxu0
  %v1612 = vrot.slane %v1602, 4
  %v1613 = vrot.slane %v1607, 4
  %v1614 = vsel %vm587, %v1612, %v1613
  %v1617 = vsel %vm587, 0.0, %v1612
  %v1618 = vmul.f32 %v1617, %v143
  %v1619 = vmul.f32 %v1614, %v144
  %v1620 = vadd.f32 %v1528, %v1618
  %v1621 = vadd.f32 %v1529, %v1619
  %s1622 = scalar_lea.vmem %s7, 64
  %v1623 = vld [vmem:[%s1622] sm:$0xff]
  %v1624 = vld [vmem:[%s1622 + $0x8] sm:$0xff]
  %v1625 = vld [vmem:[%s1622 + $0x10] sm:$0xff]
  %v1626 = vld [vmem:[%s1622 + $0x18] sm:$0xff]
  %1627 = vmatprep.subr.mxu0 0.0
  %1628 = vmatpush1.msra.mxu0 %v1623
  %1629 = vmatprep.subr.mxu0 0.0
  %1630 = vmatpush1.msra.mxu0 %v1624
  %1631 = vmatprep.subr.mxu0 0.0
  %1632 = vmatpush1.msra.mxu0 %v1625
  %1633 = vmatprep.subr.mxu0 0.0
  %1634 = vmatpush1.msra.mxu0 %v1626
  %1635 = vmatprep.subr.mxu0 0.0
  %1636 = vmatpush1.msra.mxu0 0.0
  %1637 = vmatprep.subr.mxu0 0.0
  %1638 = vmatpush1.msra.mxu0 0.0
  %1639 = vmatprep.subr.mxu0 0.0
  %1640 = vmatpush1.msra.mxu0 0.0
  %1641 = vmatprep.subr.mxu0 0.0
  %1642 = vmatpush1.msra.mxu0 0.0
  %1643 = vmatprep.subr.mxu0 0.0
  %1644 = vmatpush1.msra.mxu0 0.0
  %1645 = vmatprep.subr.mxu0 0.0
  %1646 = vmatpush1.msra.mxu0 0.0
  %1647 = vmatprep.subr.mxu0 0.0
  %1648 = vmatpush1.msra.mxu0 0.0
  %1649 = vmatprep.subr.mxu0 0.0
  %1650 = vmatpush1.msra.mxu0 0.0
  %1651 = vmatprep.subr.mxu0 0.0
  %1652 = vmatpush1.msra.mxu0 0.0
  %1653 = vmatprep.subr.mxu0 0.0
  %1654 = vmatpush1.msra.mxu0 0.0
  %1655 = vmatprep.subr.mxu0 0.0
  %1656 = vmatpush1.msra.mxu0 0.0
  %1657 = vmatprep.subr.mxu0 0.0
  %1658 = vmatpush1.msra.mxu0 0.0
  %1659 = vmatprep.subr.mxu0 0.0
  %1660 = vmatpush1.msra.mxu0 0.0
  %1661 = vmatprep.subr.mxu0 0.0
  %1662 = vmatpush1.msra.mxu0 0.0
  %1663 = vmatprep.subr.mxu0 0.0
  %1664 = vmatpush1.msra.mxu0 0.0
  %1665 = vmatprep.subr.mxu0 0.0
  %1666 = vmatpush1.msra.mxu0 0.0
  %1667 = vmatprep.subr.mxu0 0.0
  %1668 = vmatpush1.msra.mxu0 0.0
  %1669 = vmatprep.subr.mxu0 0.0
  %1670 = vmatpush1.msra.mxu0 0.0
  %1671 = vmatprep.subr.mxu0 0.0
  %1672 = vmatpush1.msra.mxu0 0.0
  %1673 = vmatprep.subr.mxu0 0.0
  %1674 = vmatpush1.msra.mxu0 0.0
  %1675 = vmatprep.subr.mxu0 0.0
  %1676 = vmatpush1.msra.mxu0 0.0
  %1677 = vmatprep.subr.mxu0 0.0
  %1678 = vmatpush1.msra.mxu0 0.0
  %1679 = vmatprep.subr.mxu0 0.0
  %1680 = vmatpush1.msra.mxu0 0.0
  %1681 = vmatprep.subr.mxu0 0.0
  %1682 = vmatpush1.msra.mxu0 0.0
  %1683 = vmatprep.subr.mxu0 0.0
  %1684 = vmatpush1.msra.mxu0 0.0
  %1685 = vmatprep.subr.mxu0 0.0
  %1686 = vmatpush1.msra.mxu0 0.0
  %1687 = vmatprep.subr.mxu0 0.0
  %1688 = vmatpush1.msra.mxu0 0.0
  %1689 = vmatprep.subr.mxu0 0.0
  %1690 = vmatpush1.msra.mxu0 0.0
  %1691 = vmatprep.mubr.f32.mxu0 0.0
  %1692 = vmatmul.mubr.f32.gmra.mrb[0].mxu0 %v1439
  %v1693 = vpop.f32.mrb[0].mxu0
  %v1694 = vadd.f32 0.0, %v1693
  %v1695 = vpop.f32.mrb[0].mxu0
  %1696 = vmatprep.mubr.f32.mxu0 0.0
  %1697 = vmatmul.mubr.f32.gmra.mrb[0].mxu0 %v1442
  %v1698 = vpop.f32.mrb[0].mxu0
  %v1699 = vadd.f32 0.0, %v1698
  %v1700 = vpop.f32.mrb[0].mxu0
  %1701 = vdwg.mxu0
  %v1704 = vrot.slane %v1694, 6
  %v1705 = vrot.slane %v1699, 6
  %v1706 = vsel %vm771, %v1704, %v1705
  %v1709 = vsel %vm771, 0.0, %v1704
  %v1710 = vmul.f32 %v1709, %v115
  %v1711 = vmul.f32 %v1706, %v116
  %v1712 = vadd.f32 %v1620, %v1710
  %v1713 = vadd.f32 %v1621, %v1711
  %s1714 = scalar_lea.vmem %s7, 96
  %v1715 = vld [vmem:[%s1714] sm:$0xff]
  %v1716 = vld [vmem:[%s1714 + $0x8] sm:$0xff]
  %v1717 = vld [vmem:[%s1714 + $0x10] sm:$0xff]
  %v1718 = vld [vmem:[%s1714 + $0x18] sm:$0xff]
  %1719 = vmatprep.subr.mxu0 0.0
  %1720 = vmatpush1.msra.mxu0 %v1715
  %1721 = vmatprep.subr.mxu0 0.0
  %1722 = vmatpush1.msra.mxu0 %v1716
  %1723 = vmatprep.subr.mxu0 0.0
  %1724 = vmatpush1.msra.mxu0 %v1717
  %1725 = vmatprep.subr.mxu0 0.0
  %1726 = vmatpush1.msra.mxu0 %v1718
  %1727 = vmatprep.subr.mxu0 0.0
  %1728 = vmatpush1.msra.mxu0 0.0
  %1729 = vmatprep.subr.mxu0 0.0
  %1730 = vmatpush1.msra.mxu0 0.0
  %1731 = vmatprep.subr.mxu0 0.0
  %1732 = vmatpush1.msra.mxu0 0.0
  %1733 = vmatprep.subr.mxu0 0.0
  %1734 = vmatpush1.msra.mxu0 0.0
  %1735 = vmatprep.subr.mxu0 0.0
  %1736 = vmatpush1.msra.mxu0 0.0
  %1737 = vmatprep.subr.mxu0 0.0
  %1738 = vmatpush1.msra.mxu0 0.0
  %1739 = vmatprep.subr.mxu0 0.0
  %1740 = vmatpush1.msra.mxu0 0.0
  %1741 = vmatprep.subr.mxu0 0.0
  %1742 = vmatpush1.msra.mxu0 0.0
  %1743 = vmatprep.subr.mxu0 0.0
  %1744 = vmatpush1.msra.mxu0 0.0
  %1745 = vmatprep.subr.mxu0 0.0
  %1746 = vmatpush1.msra.mxu0 0.0
  %1747 = vmatprep.subr.mxu0 0.0
  %1748 = vmatpush1.msra.mxu0 0.0
  %1749 = vmatprep.subr.mxu0 0.0
  %1750 = vmatpush1.msra.mxu0 0.0
  %1751 = vmatprep.subr.mxu0 0.0
  %1752 = vmatpush1.msra.mxu0 0.0
  %1753 = vmatprep.subr.mxu0 0.0
  %1754 = vmatpush1.msra.mxu0 0.0
  %1755 = vmatprep.subr.mxu0 0.0
  %1756 = vmatpush1.msra.mxu0 0.0
  %1757 = vmatprep.subr.mxu0 0.0
  %1758 = vmatpush1.msra.mxu0 0.0
  %1759 = vmatprep.subr.mxu0 0.0
  %1760 = vmatpush1.msra.mxu0 0.0
  %1761 = vmatprep.subr.mxu0 0.0
  %1762 = vmatpush1.msra.mxu0 0.0
  %1763 = vmatprep.subr.mxu0 0.0
  %1764 = vmatpush1.msra.mxu0 0.0
  %1765 = vmatprep.subr.mxu0 0.0
  %1766 = vmatpush1.msra.mxu0 0.0
  %1767 = vmatprep.subr.mxu0 0.0
  %1768 = vmatpush1.msra.mxu0 0.0
  %1769 = vmatprep.subr.mxu0 0.0
  %1770 = vmatpush1.msra.mxu0 0.0
  %1771 = vmatprep.subr.mxu0 0.0
  %1772 = vmatpush1.msra.mxu0 0.0
  %1773 = vmatprep.subr.mxu0 0.0
  %1774 = vmatpush1.msra.mxu0 0.0
  %1775 = vmatprep.subr.mxu0 0.0
  %1776 = vmatpush1.msra.mxu0 0.0
  %1777 = vmatprep.subr.mxu0 0.0
  %1778 = vmatpush1.msra.mxu0 0.0
  %1779 = vmatprep.subr.mxu0 0.0
  %1780 = vmatpush1.msra.mxu0 0.0
  %1781 = vmatprep.subr.mxu0 0.0
  %1782 = vmatpush1.msra.mxu0 0.0
  %1783 = vmatprep.mubr.f32.mxu0 0.0
  %1784 = vmatmul.mubr.f32.gmra.mrb[0].mxu0 %v1439
  %v1785 = vpop.f32.mrb[0].mxu0
  %v1786 = vadd.f32 0.0, %v1785
  %v1787 = vpop.f32.mrb[0].mxu0
  %1788 = vmatprep.mubr.f32.mxu0 0.0
  %1789 = vmatmul.mubr.f32.gmra.mrb[0].mxu0 %v1442
  %v1790 = vpop.f32.mrb[0].mxu0
  %v1791 = vadd.f32 0.0, %v1790
  %v1792 = vpop.f32.mrb[0].mxu0
  %1793 = vdwg.mxu0
  %v1794 = vadd.f32 %v1712, %v1786
  %v1795 = vadd.f32 %v1713, %v1791
  %v1796 = vld [vmem:[%s8] sm:$0x1]
  %v1798 = vlaneseq
  %v1799 = vshrl.u32 %v1798, 7
  %v1800 = vsub.s32 0, %v1799
  %v1801 = vrot.slane %v1796, %v1800
  %v1803 = vadd.f32 %v1794, %v1801
  %v1804 = vadd.f32 %v1795, %v1801
  %v1805 = vmax.f32 %v1803, 0.0
  %v1806 = vmax.f32 %v1804, 0.0
  %v1807 = vld [vmem:[%s9] sm:$0xff]
  %v1808 = vld [vmem:[%s9 + $0x8] sm:$0xff]
  %vm1809 = vcmask 130048
  %v1811 = vsel %vm1809, %v1805, 0
  %v1814 = vsel %vm1809, %v1806, 0
  %1816 = vmatprep.subr.mxu0 0.0
  %1817 = vmatpush1.msra.mxu0 %v1807
  %1818 = vmatprep.subr.mxu0 0.0
  %1819 = vmatpush1.msra.mxu0 %v1808
  %1820 = vmatprep.subr.mxu0 0.0
  %1821 = vmatpush1.msra.mxu0 0.0
  %1822 = vmatprep.subr.mxu0 0.0
  %1823 = vmatpush1.msra.mxu0 0.0
  %1824 = vmatprep.subr.mxu0 0.0
  %1825 = vmatpush1.msra.mxu0 0.0
  %1826 = vmatprep.subr.mxu0 0.0
  %1827 = vmatpush1.msra.mxu0 0.0
  %1828 = vmatprep.subr.mxu0 0.0
  %1829 = vmatpush1.msra.mxu0 0.0
  %1830 = vmatprep.subr.mxu0 0.0
  %1831 = vmatpush1.msra.mxu0 0.0
  %1832 = vmatprep.subr.mxu0 0.0
  %1833 = vmatpush1.msra.mxu0 0.0
  %1834 = vmatprep.subr.mxu0 0.0
  %1835 = vmatpush1.msra.mxu0 0.0
  %1836 = vmatprep.subr.mxu0 0.0
  %1837 = vmatpush1.msra.mxu0 0.0
  %1838 = vmatprep.subr.mxu0 0.0
  %1839 = vmatpush1.msra.mxu0 0.0
  %1840 = vmatprep.subr.mxu0 0.0
  %1841 = vmatpush1.msra.mxu0 0.0
  %1842 = vmatprep.subr.mxu0 0.0
  %1843 = vmatpush1.msra.mxu0 0.0
  %1844 = vmatprep.subr.mxu0 0.0
  %1845 = vmatpush1.msra.mxu0 0.0
  %1846 = vmatprep.subr.mxu0 0.0
  %1847 = vmatpush1.msra.mxu0 0.0
  %1848 = vmatprep.subr.mxu0 0.0
  %1849 = vmatpush1.msra.mxu0 0.0
  %1850 = vmatprep.subr.mxu0 0.0
  %1851 = vmatpush1.msra.mxu0 0.0
  %1852 = vmatprep.subr.mxu0 0.0
  %1853 = vmatpush1.msra.mxu0 0.0
  %1854 = vmatprep.subr.mxu0 0.0
  %1855 = vmatpush1.msra.mxu0 0.0
  %1856 = vmatprep.subr.mxu0 0.0
  %1857 = vmatpush1.msra.mxu0 0.0
  %1858 = vmatprep.subr.mxu0 0.0
  %1859 = vmatpush1.msra.mxu0 0.0
  %1860 = vmatprep.subr.mxu0 0.0
  %1861 = vmatpush1.msra.mxu0 0.0
  %1862 = vmatprep.subr.mxu0 0.0
  %1863 = vmatpush1.msra.mxu0 0.0
  %1864 = vmatprep.subr.mxu0 0.0
  %1865 = vmatpush1.msra.mxu0 0.0
  %1866 = vmatprep.subr.mxu0 0.0
  %1867 = vmatpush1.msra.mxu0 0.0
  %1868 = vmatprep.subr.mxu0 0.0
  %1869 = vmatpush1.msra.mxu0 0.0
  %1870 = vmatprep.subr.mxu0 0.0
  %1871 = vmatpush1.msra.mxu0 0.0
  %1872 = vmatprep.subr.mxu0 0.0
  %1873 = vmatpush1.msra.mxu0 0.0
  %1874 = vmatprep.subr.mxu0 0.0
  %1875 = vmatpush1.msra.mxu0 0.0
  %1876 = vmatprep.subr.mxu0 0.0
  %1877 = vmatpush1.msra.mxu0 0.0
  %1878 = vmatprep.subr.mxu0 0.0
  %1879 = vmatpush1.msra.mxu0 0.0
  %1880 = vmatprep.mubr.f32.mxu0 0.0
  %1881 = vmatmul.mubr.f32.gmra.mrb[0].mxu0 %v1811
  %v1882 = vpop.f32.mrb[0].mxu0
  %v1883 = vadd.f32 0.0, %v1882
  %v1884 = vpop.f32.mrb[0].mxu0
  %1885 = vmatprep.mubr.f32.mxu0 0.0
  %1886 = vmatmul.mubr.f32.gmra.mrb[0].mxu0 %v1814
  %v1887 = vpop.f32.mrb[0].mxu0
  %v1888 = vadd.f32 0.0, %v1887
  %v1889 = vpop.f32.mrb[0].mxu0
  %1890 = vdwg.mxu0
  %v1893 = vrot.slane %v1883, 2
  %v1894 = vrot.slane %v1888, 2
  %v1895 = vsel %vm1521, %v1893, %v1894
  %v1898 = vsel %vm1521, 0.0, %v1893
  %v1899 = vmul.f32 %v1898, %v157
  %v1900 = vmul.f32 %v1895, %v158
  %s1901 = scalar_lea.vmem %s9, 16
  %v1902 = vld [vmem:[%s1901] sm:$0xff]
  %v1903 = vld [vmem:[%s1901 + $0x8] sm:$0xff]
  %1904 = vmatprep.subr.mxu0 0.0
  %1905 = vmatpush1.msra.mxu0 %v1902
  %1906 = vmatprep.subr.mxu0 0.0
  %1907 = vmatpush1.msra.mxu0 %v1903
  %1908 = vmatprep.subr.mxu0 0.0
  %1909 = vmatpush1.msra.mxu0 0.0
  %1910 = vmatprep.subr.mxu0 0.0
  %1911 = vmatpush1.msra.mxu0 0.0
  %1912 = vmatprep.subr.mxu0 0.0
  %1913 = vmatpush1.msra.mxu0 0.0
  %1914 = vmatprep.subr.mxu0 0.0
  %1915 = vmatpush1.msra.mxu0 0.0
  %1916 = vmatprep.subr.mxu0 0.0
  %1917 = vmatpush1.msra.mxu0 0.0
  %1918 = vmatprep.subr.mxu0 0.0
  %1919 = vmatpush1.msra.mxu0 0.0
  %1920 = vmatprep.subr.mxu0 0.0
  %1921 = vmatpush1.msra.mxu0 0.0
  %1922 = vmatprep.subr.mxu0 0.0
  %1923 = vmatpush1.msra.mxu0 0.0
  %1924 = vmatprep.subr.mxu0 0.0
  %1925 = vmatpush1.msra.mxu0 0.0
  %1926 = vmatprep.subr.mxu0 0.0
  %1927 = vmatpush1.msra.mxu0 0.0
  %1928 = vmatprep.subr.mxu0 0.0
  %1929 = vmatpush1.msra.mxu0 0.0
  %1930 = vmatprep.subr.mxu0 0.0
  %1931 = vmatpush1.msra.mxu0 0.0
  %1932 = vmatprep.subr.mxu0 0.0
  %1933 = vmatpush1.msra.mxu0 0.0
  %1934 = vmatprep.subr.mxu0 0.0
  %1935 = vmatpush1.msra.mxu0 0.0
  %1936 = vmatprep.subr.mxu0 0.0
  %1937 = vmatpush1.msra.mxu0 0.0
  %1938 = vmatprep.subr.mxu0 0.0
  %1939 = vmatpush1.msra.mxu0 0.0
  %1940 = vmatprep.subr.mxu0 0.0
  %1941 = vmatpush1.msra.mxu0 0.0
  %1942 = vmatprep.subr.mxu0 0.0
  %1943 = vmatpush1.msra.mxu0 0.0
  %1944 = vmatprep.subr.mxu0 0.0
  %1945 = vmatpush1.msra.mxu0 0.0
  %1946 = vmatprep.subr.mxu0 0.0
  %1947 = vmatpush1.msra.mxu0 0.0
  %1948 = vmatprep.subr.mxu0 0.0
  %1949 = vmatpush1.msra.mxu0 0.0
  %1950 = vmatprep.subr.mxu0 0.0
  %1951 = vmatpush1.msra.mxu0 0.0
  %1952 = vmatprep.subr.mxu0 0.0
  %1953 = vmatpush1.msra.mxu0 0.0
  %1954 = vmatprep.subr.mxu0 0.0
  %1955 = vmatpush1.msra.mxu0 0.0
  %1956 = vmatprep.subr.mxu0 0.0
  %1957 = vmatpush1.msra.mxu0 0.0
  %1958 = vmatprep.subr.mxu0 0.0
  %1959 = vmatpush1.msra.mxu0 0.0
  %1960 = vmatprep.subr.mxu0 0.0
  %1961 = vmatpush1.msra.mxu0 0.0
  %1962 = vmatprep.subr.mxu0 0.0
  %1963 = vmatpush1.msra.mxu0 0.0
  %1964 = vmatprep.subr.mxu0 0.0
  %1965 = vmatpush1.msra.mxu0 0.0
  %1966 = vmatprep.subr.mxu0 0.0
  %1967 = vmatpush1.msra.mxu0 0.0
  %1968 = vmatprep.mubr.f32.mxu0 0.0
  %1969 = vmatmul.mubr.f32.gmra.mrb[0].mxu0 %v1811
  %v1970 = vpop.f32.mrb[0].mxu0
  %v1971 = vadd.f32 0.0, %v1970
  %v1972 = vpop.f32.mrb[0].mxu0
  %1973 = vmatprep.mubr.f32.mxu0 0.0
  %1974 = vmatmul.mubr.f32.gmra.mrb[0].mxu0 %v1814
  %v1975 = vpop.f32.mrb[0].mxu0
  %v1976 = vadd.f32 0.0, %v1975
  %v1977 = vpop.f32.mrb[0].mxu0
  %1978 = vdwg.mxu0
  %v1981 = vrot.slane %v1971, 4
  %v1982 = vrot.slane %v1976, 4
  %v1983 = vsel %vm587, %v1981, %v1982
  %v1986 = vsel %vm587, 0.0, %v1981
  %v1987 = vmul.f32 %v1986, %v143
  %v1988 = vmul.f32 %v1983, %v144
  %v1989 = vadd.f32 %v1899, %v1987
  %v1990 = vadd.f32 %v1900, %v1988
  %s1991 = scalar_lea.vmem %s9, 32
  %v1992 = vld [vmem:[%s1991] sm:$0xff]
  %v1993 = vld [vmem:[%s1991 + $0x8] sm:$0xff]
  %1994 = vmatprep.subr.mxu0 0.0
  %1995 = vmatpush1.msra.mxu0 %v1992
  %1996 = vmatprep.subr.mxu0 0.0
  %1997 = vmatpush1.msra.mxu0 %v1993
  %1998 = vmatprep.subr.mxu0 0.0
  %1999 = vmatpush1.msra.mxu0 0.0
  %2000 = vmatprep.subr.mxu0 0.0
  %2001 = vmatpush1.msra.mxu0 0.0
  %2002 = vmatprep.subr.mxu0 0.0
  %2003 = vmatpush1.msra.mxu0 0.0
  %2004 = vmatprep.subr.mxu0 0.0
  %2005 = vmatpush1.msra.mxu0 0.0
  %2006 = vmatprep.subr.mxu0 0.0
  %2007 = vmatpush1.msra.mxu0 0.0
  %2008 = vmatprep.subr.mxu0 0.0
  %2009 = vmatpush1.msra.mxu0 0.0
  %2010 = vmatprep.subr.mxu0 0.0
  %2011 = vmatpush1.msra.mxu0 0.0
  %2012 = vmatprep.subr.mxu0 0.0
  %2013 = vmatpush1.msra.mxu0 0.0
  %2014 = vmatprep.subr.mxu0 0.0
  %2015 = vmatpush1.msra.mxu0 0.0
  %2016 = vmatprep.subr.mxu0 0.0
  %2017 = vmatpush1.msra.mxu0 0.0
  %2018 = vmatprep.subr.mxu0 0.0
  %2019 = vmatpush1.msra.mxu0 0.0
  %2020 = vmatprep.subr.mxu0 0.0
  %2021 = vmatpush1.msra.mxu0 0.0
  %2022 = vmatprep.subr.mxu0 0.0
  %2023 = vmatpush1.msra.mxu0 0.0
  %2024 = vmatprep.subr.mxu0 0.0
  %2025 = vmatpush1.msra.mxu0 0.0
  %2026 = vmatprep.subr.mxu0 0.0
  %2027 = vmatpush1.msra.mxu0 0.0
  %2028 = vmatprep.subr.mxu0 0.0
  %2029 = vmatpush1.msra.mxu0 0.0
  %2030 = vmatprep.subr.mxu0 0.0
  %2031 = vmatpush1.msra.mxu0 0.0
  %2032 = vmatprep.subr.mxu0 0.0
  %2033 = vmatpush1.msra.mxu0 0.0
  %2034 = vmatprep.subr.mxu0 0.0
  %2035 = vmatpush1.msra.mxu0 0.0
  %2036 = vmatprep.subr.mxu0 0.0
  %2037 = vmatpush1.msra.mxu0 0.0
  %2038 = vmatprep.subr.mxu0 0.0
  %2039 = vmatpush1.msra.mxu0 0.0
  %2040 = vmatprep.subr.mxu0 0.0
  %2041 = vmatpush1.msra.mxu0 0.0
  %2042 = vmatprep.subr.mxu0 0.0
  %2043 = vmatpush1.msra.mxu0 0.0
  %2044 = vmatprep.subr.mxu0 0.0
  %2045 = vmatpush1.msra.mxu0 0.0
  %2046 = vmatprep.subr.mxu0 0.0
  %2047 = vmatpush1.msra.mxu0 0.0
  %2048 = vmatprep.subr.mxu0 0.0
  %2049 = vmatpush1.msra.mxu0 0.0
  %2050 = vmatprep.subr.mxu0 0.0
  %2051 = vmatpush1.msra.mxu0 0.0
  %2052 = vmatprep.subr.mxu0 0.0
  %2053 = vmatpush1.msra.mxu0 0.0
  %2054 = vmatprep.subr.mxu0 0.0
  %2055 = vmatpush1.msra.mxu0 0.0
  %2056 = vmatprep.subr.mxu0 0.0
  %2057 = vmatpush1.msra.mxu0 0.0
  %2058 = vmatprep.mubr.f32.mxu0 0.0
  %2059 = vmatmul.mubr.f32.gmra.mrb[0].mxu0 %v1811
  %v2060 = vpop.f32.mrb[0].mxu0
  %v2061 = vadd.f32 0.0, %v2060
  %v2062 = vpop.f32.mrb[0].mxu0
  %2063 = vmatprep.mubr.f32.mxu0 0.0
  %2064 = vmatmul.mubr.f32.gmra.mrb[0].mxu0 %v1814
  %v2065 = vpop.f32.mrb[0].mxu0
  %v2066 = vadd.f32 0.0, %v2065
  %v2067 = vpop.f32.mrb[0].mxu0
  %2068 = vdwg.mxu0
  %v2071 = vrot.slane %v2061, 6
  %v2072 = vrot.slane %v2066, 6
  %v2073 = vsel %vm771, %v2071, %v2072
  %v2076 = vsel %vm771, 0.0, %v2071
  %v2077 = vmul.f32 %v2076, %v115
  %v2078 = vmul.f32 %v2073, %v116
  %v2079 = vadd.f32 %v1989, %v2077
  %v2080 = vadd.f32 %v1990, %v2078
  %s2081 = scalar_lea.vmem %s9, 48
  %v2082 = vld [vmem:[%s2081] sm:$0xff]
  %v2083 = vld [vmem:[%s2081 + $0x8] sm:$0xff]
  %2084 = vmatprep.subr.mxu0 0.0
  %2085 = vmatpush1.msra.mxu0 %v2082
  %2086 = vmatprep.subr.mxu0 0.0
  %2087 = vmatpush1.msra.mxu0 %v2083
  %2088 = vmatprep.subr.mxu0 0.0
  %2089 = vmatpush1.msra.mxu0 0.0
  %2090 = vmatprep.subr.mxu0 0.0
  %2091 = vmatpush1.msra.mxu0 0.0
  %2092 = vmatprep.subr.mxu0 0.0
  %2093 = vmatpush1.msra.mxu0 0.0
  %2094 = vmatprep.subr.mxu0 0.0
  %2095 = vmatpush1.msra.mxu0 0.0
  %2096 = vmatprep.subr.mxu0 0.0
  %2097 = vmatpush1.msra.mxu0 0.0
  %2098 = vmatprep.subr.mxu0 0.0
  %2099 = vmatpush1.msra.mxu0 0.0
  %2100 = vmatprep.subr.mxu0 0.0
  %2101 = vmatpush1.msra.mxu0 0.0
  %2102 = vmatprep.subr.mxu0 0.0
  %2103 = vmatpush1.msra.mxu0 0.0
  %2104 = vmatprep.subr.mxu0 0.0
  %2105 = vmatpush1.msra.mxu0 0.0
  %2106 = vmatprep.subr.mxu0 0.0
  %2107 = vmatpush1.msra.mxu0 0.0
  %2108 = vmatprep.subr.mxu0 0.0
  %2109 = vmatpush1.msra.mxu0 0.0
  %2110 = vmatprep.subr.mxu0 0.0
  %2111 = vmatpush1.msra.mxu0 0.0
  %2112 = vmatprep.subr.mxu0 0.0
  %2113 = vmatpush1.msra.mxu0 0.0
  %2114 = vmatprep.subr.mxu0 0.0
  %2115 = vmatpush1.msra.mxu0 0.0
  %2116 = vmatprep.subr.mxu0 0.0
  %2117 = vmatpush1.msra.mxu0 0.0
  %2118 = vmatprep.subr.mxu0 0.0
  %2119 = vmatpush1.msra.mxu0 0.0
  %2120 = vmatprep.subr.mxu0 0.0
  %2121 = vmatpush1.msra.mxu0 0.0
  %2122 = vmatprep.subr.mxu0 0.0
  %2123 = vmatpush1.msra.mxu0 0.0
  %2124 = vmatprep.subr.mxu0 0.0
  %2125 = vmatpush1.msra.mxu0 0.0
  %2126 = vmatprep.subr.mxu0 0.0
  %2127 = vmatpush1.msra.mxu0 0.0
  %2128 = vmatprep.subr.mxu0 0.0
  %2129 = vmatpush1.msra.mxu0 0.0
  %2130 = vmatprep.subr.mxu0 0.0
  %2131 = vmatpush1.msra.mxu0 0.0
  %2132 = vmatprep.subr.mxu0 0.0
  %2133 = vmatpush1.msra.mxu0 0.0
  %2134 = vmatprep.subr.mxu0 0.0
  %2135 = vmatpush1.msra.mxu0 0.0
  %2136 = vmatprep.subr.mxu0 0.0
  %2137 = vmatpush1.msra.mxu0 0.0
  %2138 = vmatprep.subr.mxu0 0.0
  %2139 = vmatpush1.msra.mxu0 0.0
  %2140 = vmatprep.subr.mxu0 0.0
  %2141 = vmatpush1.msra.mxu0 0.0
  %2142 = vmatprep.subr.mxu0 0.0
  %2143 = vmatpush1.msra.mxu0 0.0
  %2144 = vmatprep.subr.mxu0 0.0
  %2145 = vmatpush1.msra.mxu0 0.0
  %2146 = vmatprep.subr.mxu0 0.0
  %2147 = vmatpush1.msra.mxu0 0.0
  %2148 = vmatprep.mubr.f32.mxu0 0.0
  %2149 = vmatmul.mubr.f32.gmra.mrb[0].mxu0 %v1811
  %v2150 = vpop.f32.mrb[0].mxu0
  %v2151 = vadd.f32 0.0, %v2150
  %v2152 = vpop.f32.mrb[0].mxu0
  %2153 = vmatprep.mubr.f32.mxu0 0.0
  %2154 = vmatmul.mubr.f32.gmra.mrb[0].mxu0 %v1814
  %v2155 = vpop.f32.mrb[0].mxu0
  %v2156 = vadd.f32 0.0, %v2155
  %v2157 = vpop.f32.mrb[0].mxu0
  %2158 = vdwg.mxu0
  %v2159 = vadd.f32 %v2079, %v2151
  %v2160 = vadd.f32 %v2080, %v2156
  %v2161 = vld [vmem:[%s10] sm:$0x1]
  %v2163 = vlaneseq
  %v2164 = vshrl.u32 %v2163, 7
  %v2165 = vsub.s32 0, %v2164
  %v2166 = vrot.slane %v2161, %v2165
  %v2168 = vadd.f32 %v2159, %v2166
  %v2169 = vadd.f32 %v2160, %v2166
  %v2170 = vld [vmem:[%s11] sm:$0xff]
  %v2171 = vld [vmem:[%s11 + $0x8] sm:$0xff]
  %v2172 = vld [vmem:[%s11 + $0x10] sm:$0xff]
  %v2173 = vld [vmem:[%s11 + $0x18] sm:$0xff]
  %v2174 = vld [vmem:[%s12] sm:$0x1]
  %v2176 = vlaneseq
  %v2177 = vshrl.u32 %v2176, 7
  %v2178 = vsub.s32 0, %v2177
  %v2179 = vrot.slane %v2174, %v2178
  %2181 = vmatprep.subr.mxu0 0.0
  %2182 = vmatpush1.msra.mxu0 %v2170
  %2183 = vmatprep.subr.mxu0 0.0
  %2184 = vmatpush1.msra.mxu0 %v2171
  %2185 = vmatprep.subr.mxu0 0.0
  %2186 = vmatpush1.msra.mxu0 %v2172
  %2187 = vmatprep.subr.mxu0 0.0
  %2188 = vmatpush1.msra.mxu0 %v2173
  %2189 = vmatprep.subr.mxu0 0.0
  %2190 = vmatpush1.msra.mxu0 0.0
  %2191 = vmatprep.subr.mxu0 0.0
  %2192 = vmatpush1.msra.mxu0 0.0
  %2193 = vmatprep.subr.mxu0 0.0
  %2194 = vmatpush1.msra.mxu0 0.0
  %2195 = vmatprep.subr.mxu0 0.0
  %2196 = vmatpush1.msra.mxu0 0.0
  %2197 = vmatprep.subr.mxu0 0.0
  %2198 = vmatpush1.msra.mxu0 0.0
  %2199 = vmatprep.subr.mxu0 0.0
  %2200 = vmatpush1.msra.mxu0 0.0
  %2201 = vmatprep.subr.mxu0 0.0
  %2202 = vmatpush1.msra.mxu0 0.0
  %2203 = vmatprep.subr.mxu0 0.0
  %2204 = vmatpush1.msra.mxu0 0.0
  %2205 = vmatprep.subr.mxu0 0.0
  %2206 = vmatpush1.msra.mxu0 0.0
  %2207 = vmatprep.subr.mxu0 0.0
  %2208 = vmatpush1.msra.mxu0 0.0
  %2209 = vmatprep.subr.mxu0 0.0
  %2210 = vmatpush1.msra.mxu0 0.0
  %2211 = vmatprep.subr.mxu0 0.0
  %2212 = vmatpush1.msra.mxu0 0.0
  %2213 = vmatprep.subr.mxu0 0.0
  %2214 = vmatpush1.msra.mxu0 0.0
  %2215 = vmatprep.subr.mxu0 0.0
  %2216 = vmatpush1.msra.mxu0 0.0
  %2217 = vmatprep.subr.mxu0 0.0
  %2218 = vmatpush1.msra.mxu0 0.0
  %2219 = vmatprep.subr.mxu0 0.0
  %2220 = vmatpush1.msra.mxu0 0.0
  %2221 = vmatprep.subr.mxu0 0.0
  %2222 = vmatpush1.msra.mxu0 0.0
  %2223 = vmatprep.subr.mxu0 0.0
  %2224 = vmatpush1.msra.mxu0 0.0
  %2225 = vmatprep.subr.mxu0 0.0
  %2226 = vmatpush1.msra.mxu0 0.0
  %2227 = vmatprep.subr.mxu0 0.0
  %2228 = vmatpush1.msra.mxu0 0.0
  %2229 = vmatprep.subr.mxu0 0.0
  %2230 = vmatpush1.msra.mxu0 0.0
  %2231 = vmatprep.subr.mxu0 0.0
  %2232 = vmatpush1.msra.mxu0 0.0
  %2233 = vmatprep.subr.mxu0 0.0
  %2234 = vmatpush1.msra.mxu0 0.0
  %2235 = vmatprep.subr.mxu0 0.0
  %2236 = vmatpush1.msra.mxu0 0.0
  %2237 = vmatprep.subr.mxu0 0.0
  %2238 = vmatpush1.msra.mxu0 0.0
  %2239 = vmatprep.subr.mxu0 0.0
  %2240 = vmatpush1.msra.mxu0 0.0
  %2241 = vmatprep.subr.mxu0 0.0
  %2242 = vmatpush1.msra.mxu0 0.0
  %2243 = vmatprep.subr.mxu0 0.0
  %2244 = vmatpush1.msra.mxu0 0.0
  %2245 = vmatprep.mubr.f32.mxu0 0.0
  %2246 = vmatmul.mubr.f32.gmra.mrb[0].mxu0 %v1439
  %v2247 = vpop.f32.mrb[0].mxu0
  %v2248 = vadd.f32 %v2179, %v2247
  %v2249 = vpop.f32.mrb[0].mxu0
  %2250 = vmatprep.mubr.f32.mxu0 0.0
  %2251 = vmatmul.mubr.f32.gmra.mrb[0].mxu0 %v1442
  %v2252 = vpop.f32.mrb[0].mxu0
  %v2253 = vadd.f32 %v2179, %v2252
  %v2254 = vpop.f32.mrb[0].mxu0
  %2255 = vdwg.mxu0
  %v2256 = vadd.f32 %v2168, %v2248
  %v2257 = vadd.f32 %v2169, %v2253
  %v2258 = vmax.f32 %v2256, 0.0
  %v2259 = vmax.f32 %v2257, 0.0
  %v2260 = vld [vmem:[%s13] sm:$0xff]
  %v2261 = vld [vmem:[%s13 + $0x8] sm:$0xff]
  %v2263 = vsel %vm1809, %v2258, 0
  %v2266 = vsel %vm1809, %v2259, 0
  %2268 = vmatprep.subr.mxu0 0.0
  %2269 = vmatpush1.msra.mxu0 %v2260
  %2270 = vmatprep.subr.mxu0 0.0
  %2271 = vmatpush1.msra.mxu0 %v2261
  %2272 = vmatprep.subr.mxu0 0.0
  %2273 = vmatpush1.msra.mxu0 0.0
  %2274 = vmatprep.subr.mxu0 0.0
  %2275 = vmatpush1.msra.mxu0 0.0
  %2276 = vmatprep.subr.mxu0 0.0
  %2277 = vmatpush1.msra.mxu0 0.0
  %2278 = vmatprep.subr.mxu0 0.0
  %2279 = vmatpush1.msra.mxu0 0.0
  %2280 = vmatprep.subr.mxu0 0.0
  %2281 = vmatpush1.msra.mxu0 0.0
  %2282 = vmatprep.subr.mxu0 0.0
  %2283 = vmatpush1.msra.mxu0 0.0
  %2284 = vmatprep.subr.mxu0 0.0
  %2285 = vmatpush1.msra.mxu0 0.0
  %2286 = vmatprep.subr.mxu0 0.0
  %2287 = vmatpush1.msra.mxu0 0.0
  %2288 = vmatprep.subr.mxu0 0.0
  %2289 = vmatpush1.msra.mxu0 0.0
  %2290 = vmatprep.subr.mxu0 0.0
  %2291 = vmatpush1.msra.mxu0 0.0
  %2292 = vmatprep.subr.mxu0 0.0
  %2293 = vmatpush1.msra.mxu0 0.0
  %2294 = vmatprep.subr.mxu0 0.0
  %2295 = vmatpush1.msra.mxu0 0.0
  %2296 = vmatprep.subr.mxu0 0.0
  %2297 = vmatpush1.msra.mxu0 0.0
  %2298 = vmatprep.subr.mxu0 0.0
  %2299 = vmatpush1.msra.mxu0 0.0
  %2300 = vmatprep.subr.mxu0 0.0
  %2301 = vmatpush1.msra.mxu0 0.0
  %2302 = vmatprep.subr.mxu0 0.0
  %2303 = vmatpush1.msra.mxu0 0.0
  %2304 = vmatprep.subr.mxu0 0.0
  %2305 = vmatpush1.msra.mxu0 0.0
  %2306 = vmatprep.subr.mxu0 0.0
  %2307 = vmatpush1.msra.mxu0 0.0
  %2308 = vmatprep.subr.mxu0 0.0
  %2309 = vmatpush1.msra.mxu0 0.0
  %2310 = vmatprep.subr.mxu0 0.0
  %2311 = vmatpush1.msra.mxu0 0.0
  %2312 = vmatprep.subr.mxu0 0.0
  %2313 = vmatpush1.msra.mxu0 0.0
  %2314 = vmatprep.subr.mxu0 0.0
  %2315 = vmatpush1.msra.mxu0 0.0
  %2316 = vmatprep.subr.mxu0 0.0
  %2317 = vmatpush1.msra.mxu0 0.0
  %2318 = vmatprep.subr.mxu0 0.0
  %2319 = vmatpush1.msra.mxu0 0.0
  %2320 = vmatprep.subr.mxu0 0.0
  %2321 = vmatpush1.msra.mxu0 0.0
  %2322 = vmatprep.subr.mxu0 0.0
  %2323 = vmatpush1.msra.mxu0 0.0
  %2324 = vmatprep.subr.mxu0 0.0
  %2325 = vmatpush1.msra.mxu0 0.0
  %2326 = vmatprep.subr.mxu0 0.0
  %2327 = vmatpush1.msra.mxu0 0.0
  %2328 = vmatprep.subr.mxu0 0.0
  %2329 = vmatpush1.msra.mxu0 0.0
  %2330 = vmatprep.subr.mxu0 0.0
  %2331 = vmatpush1.msra.mxu0 0.0
  %2332 = vmatprep.mubr.f32.mxu0 0.0
  %2333 = vmatmul.mubr.f32.gmra.mrb[0].mxu0 %v2263
  %v2334 = vpop.f32.mrb[0].mxu0
  %v2335 = vadd.f32 0.0, %v2334
  %v2336 = vpop.f32.mrb[0].mxu0
  %2337 = vmatprep.mubr.f32.mxu0 0.0
  %2338 = vmatmul.mubr.f32.gmra.mrb[0].mxu0 %v2266
  %v2339 = vpop.f32.mrb[0].mxu0
  %v2340 = vadd.f32 0.0, %v2339
  %v2341 = vpop.f32.mrb[0].mxu0
  %2342 = vdwg.mxu0
  %v2345 = vrot.slane %v2335, 4
  %v2346 = vrot.slane %v2340, 4
  %v2347 = vsel %vm587, %v2345, %v2346
  %v2350 = vsel %vm587, 0.0, %v2345
  %v2351 = vmul.f32 %v2350, %v143
  %v2352 = vmul.f32 %v2347, %v144
  %s2353 = scalar_lea.vmem %s13, 16
  %v2354 = vld [vmem:[%s2353] sm:$0xff]
  %v2355 = vld [vmem:[%s2353 + $0x8] sm:$0xff]
  %2356 = vmatprep.subr.mxu0 0.0
  %2357 = vmatpush1.msra.mxu0 %v2354
  %2358 = vmatprep.subr.mxu0 0.0
  %2359 = vmatpush1.msra.mxu0 %v2355
  %2360 = vmatprep.subr.mxu0 0.0
  %2361 = vmatpush1.msra.mxu0 0.0
  %2362 = vmatprep.subr.mxu0 0.0
  %2363 = vmatpush1.msra.mxu0 0.0
  %2364 = vmatprep.subr.mxu0 0.0
  %2365 = vmatpush1.msra.mxu0 0.0
  %2366 = vmatprep.subr.mxu0 0.0
  %2367 = vmatpush1.msra.mxu0 0.0
  %2368 = vmatprep.subr.mxu0 0.0
  %2369 = vmatpush1.msra.mxu0 0.0
  %2370 = vmatprep.subr.mxu0 0.0
  %2371 = vmatpush1.msra.mxu0 0.0
  %2372 = vmatprep.subr.mxu0 0.0
  %2373 = vmatpush1.msra.mxu0 0.0
  %2374 = vmatprep.subr.mxu0 0.0
  %2375 = vmatpush1.msra.mxu0 0.0
  %2376 = vmatprep.subr.mxu0 0.0
  %2377 = vmatpush1.msra.mxu0 0.0
  %2378 = vmatprep.subr.mxu0 0.0
  %2379 = vmatpush1.msra.mxu0 0.0
  %2380 = vmatprep.subr.mxu0 0.0
  %2381 = vmatpush1.msra.mxu0 0.0
  %2382 = vmatprep.subr.mxu0 0.0
  %2383 = vmatpush1.msra.mxu0 0.0
  %2384 = vmatprep.subr.mxu0 0.0
  %2385 = vmatpush1.msra.mxu0 0.0
  %2386 = vmatprep.subr.mxu0 0.0
  %2387 = vmatpush1.msra.mxu0 0.0
  %2388 = vmatprep.subr.mxu0 0.0
  %2389 = vmatpush1.msra.mxu0 0.0
  %2390 = vmatprep.subr.mxu0 0.0
  %2391 = vmatpush1.msra.mxu0 0.0
  %2392 = vmatprep.subr.mxu0 0.0
  %2393 = vmatpush1.msra.mxu0 0.0
  %2394 = vmatprep.subr.mxu0 0.0
  %2395 = vmatpush1.msra.mxu0 0.0
  %2396 = vmatprep.subr.mxu0 0.0
  %2397 = vmatpush1.msra.mxu0 0.0
  %2398 = vmatprep.subr.mxu0 0.0
  %2399 = vmatpush1.msra.mxu0 0.0
  %2400 = vmatprep.subr.mxu0 0.0
  %2401 = vmatpush1.msra.mxu0 0.0
  %2402 = vmatprep.subr.mxu0 0.0
  %2403 = vmatpush1.msra.mxu0 0.0
  %2404 = vmatprep.subr.mxu0 0.0
  %2405 = vmatpush1.msra.mxu0 0.0
  %2406 = vmatprep.subr.mxu0 0.0
  %2407 = vmatpush1.msra.mxu0 0.0
  %2408 = vmatprep.subr.mxu0 0.0
  %2409 = vmatpush1.msra.mxu0 0.0
  %2410 = vmatprep.subr.mxu0 0.0
  %2411 = vmatpush1.msra.mxu0 0.0
  %2412 = vmatprep.subr.mxu0 0.0
  %2413 = vmatpush1.msra.mxu0 0.0
  %2414 = vmatprep.subr.mxu0 0.0
  %2415 = vmatpush1.msra.mxu0 0.0
  %2416 = vmatprep.subr.mxu0 0.0
  %2417 = vmatpush1.msra.mxu0 0.0
  %2418 = vmatprep.subr.mxu0 0.0
  %2419 = vmatpush1.msra.mxu0 0.0
  %2420 = vmatprep.mubr.f32.mxu0 0.0
  %2421 = vmatmul.mubr.f32.gmra.mrb[0].mxu0 %v2263
  %v2422 = vpop.f32.mrb[0].mxu0
  %v2423 = vadd.f32 0.0, %v2422
  %v2424 = vpop.f32.mrb[0].mxu0
  %2425 = vmatprep.mubr.f32.mxu0 0.0
  %2426 = vmatmul.mubr.f32.gmra.mrb[0].mxu0 %v2266
  %v2427 = vpop.f32.mrb[0].mxu0
  %v2428 = vadd.f32 0.0, %v2427
  %v2429 = vpop.f32.mrb[0].mxu0
  %2430 = vdwg.mxu0
  %v2431 = vadd.f32 %v2351, %v2423
  %v2432 = vadd.f32 %v2352, %v2428
  %v2433 = vld [vmem:[%s14] sm:$0x1]
  %v2435 = vlaneseq
  %v2436 = vshrl.u32 %v2435, 7
  %v2437 = vsub.s32 0, %v2436
  %v2438 = vrot.slane %v2433, %v2437
  %v2440 = vadd.f32 %v2431, %v2438
  %v2441 = vadd.f32 %v2432, %v2438
  %v2442 = vmax.f32 %v2440, 0.0
  %v2443 = vmax.f32 %v2441, 0.0
  %v2444 = vld [vmem:[%s15] sm:$0xff]
  %v2445 = vld [vmem:[%s15 + $0x8] sm:$0xff]
  %v2447 = vsel %vm1809, %v2442, 0
  %v2450 = vsel %vm1809, %v2443, 0
  %2452 = vmatprep.subr.mxu0 0.0
  %2453 = vmatpush1.msra.mxu0 %v2444
  %2454 = vmatprep.subr.mxu0 0.0
  %2455 = vmatpush1.msra.mxu0 %v2445
  %2456 = vmatprep.subr.mxu0 0.0
  %2457 = vmatpush1.msra.mxu0 0.0
  %2458 = vmatprep.subr.mxu0 0.0
  %2459 = vmatpush1.msra.mxu0 0.0
  %2460 = vmatprep.subr.mxu0 0.0
  %2461 = vmatpush1.msra.mxu0 0.0
  %2462 = vmatprep.subr.mxu0 0.0
  %2463 = vmatpush1.msra.mxu0 0.0
  %2464 = vmatprep.subr.mxu0 0.0
  %2465 = vmatpush1.msra.mxu0 0.0
  %2466 = vmatprep.subr.mxu0 0.0
  %2467 = vmatpush1.msra.mxu0 0.0
  %2468 = vmatprep.subr.mxu0 0.0
  %2469 = vmatpush1.msra.mxu0 0.0
  %2470 = vmatprep.subr.mxu0 0.0
  %2471 = vmatpush1.msra.mxu0 0.0
  %2472 = vmatprep.subr.mxu0 0.0
  %2473 = vmatpush1.msra.mxu0 0.0
  %2474 = vmatprep.subr.mxu0 0.0
  %2475 = vmatpush1.msra.mxu0 0.0
  %2476 = vmatprep.subr.mxu0 0.0
  %2477 = vmatpush1.msra.mxu0 0.0
  %2478 = vmatprep.subr.mxu0 0.0
  %2479 = vmatpush1.msra.mxu0 0.0
  %2480 = vmatprep.subr.mxu0 0.0
  %2481 = vmatpush1.msra.mxu0 0.0
  %2482 = vmatprep.subr.mxu0 0.0
  %2483 = vmatpush1.msra.mxu0 0.0
  %2484 = vmatprep.subr.mxu0 0.0
  %2485 = vmatpush1.msra.mxu0 0.0
  %2486 = vmatprep.subr.mxu0 0.0
  %2487 = vmatpush1.msra.mxu0 0.0
  %2488 = vmatprep.subr.mxu0 0.0
  %2489 = vmatpush1.msra.mxu0 0.0
  %2490 = vmatprep.subr.mxu0 0.0
  %2491 = vmatpush1.msra.mxu0 0.0
  %2492 = vmatprep.subr.mxu0 0.0
  %2493 = vmatpush1.msra.mxu0 0.0
  %2494 = vmatprep.subr.mxu0 0.0
  %2495 = vmatpush1.msra.mxu0 0.0
  %2496 = vmatprep.subr.mxu0 0.0
  %2497 = vmatpush1.msra.mxu0 0.0
  %2498 = vmatprep.subr.mxu0 0.0
  %2499 = vmatpush1.msra.mxu0 0.0
  %2500 = vmatprep.subr.mxu0 0.0
  %2501 = vmatpush1.msra.mxu0 0.0
  %2502 = vmatprep.subr.mxu0 0.0
  %2503 = vmatpush1.msra.mxu0 0.0
  %2504 = vmatprep.subr.mxu0 0.0
  %2505 = vmatpush1.msra.mxu0 0.0
  %2506 = vmatprep.subr.mxu0 0.0
  %2507 = vmatpush1.msra.mxu0 0.0
  %2508 = vmatprep.subr.mxu0 0.0
  %2509 = vmatpush1.msra.mxu0 0.0
  %2510 = vmatprep.subr.mxu0 0.0
  %2511 = vmatpush1.msra.mxu0 0.0
  %2512 = vmatprep.subr.mxu0 0.0
  %2513 = vmatpush1.msra.mxu0 0.0
  %2514 = vmatprep.subr.mxu0 0.0
  %2515 = vmatpush1.msra.mxu0 0.0
  %2516 = vmatprep.mubr.f32.mxu0 0.0
  %2517 = vmatmul.mubr.f32.gmra.mrb[0].mxu0 %v2447
  %v2518 = vpop.f32.mrb[0].mxu0
  %v2519 = vadd.f32 0.0, %v2518
  %v2520 = vpop.f32.mrb[0].mxu0
  %2521 = vmatprep.mubr.f32.mxu0 0.0
  %2522 = vmatmul.mubr.f32.gmra.mrb[0].mxu0 %v2450
  %v2523 = vpop.f32.mrb[0].mxu0
  %v2524 = vadd.f32 0.0, %v2523
  %v2525 = vpop.f32.mrb[0].mxu0
  %2526 = vdwg.mxu0
  %v2529 = vrot.slane %v2519, 4
  %v2530 = vrot.slane %v2524, 4
  %v2531 = vsel %vm587, %v2529, %v2530
  %v2534 = vsel %vm587, 0.0, %v2529
  %v2535 = vmul.f32 %v2534, %v143
  %v2536 = vmul.f32 %v2531, %v144
  %s2537 = scalar_lea.vmem %s15, 16
  %v2538 = vld [vmem:[%s2537] sm:$0xff]
  %v2539 = vld [vmem:[%s2537 + $0x8] sm:$0xff]
  %2540 = vmatprep.subr.mxu0 0.0
  %2541 = vmatpush1.msra.mxu0 %v2538
  %2542 = vmatprep.subr.mxu0 0.0
  %2543 = vmatpush1.msra.mxu0 %v2539
  %2544 = vmatprep.subr.mxu0 0.0
  %2545 = vmatpush1.msra.mxu0 0.0
  %2546 = vmatprep.subr.mxu0 0.0
  %2547 = vmatpush1.msra.mxu0 0.0
  %2548 = vmatprep.subr.mxu0 0.0
  %2549 = vmatpush1.msra.mxu0 0.0
  %2550 = vmatprep.subr.mxu0 0.0
  %2551 = vmatpush1.msra.mxu0 0.0
  %2552 = vmatprep.subr.mxu0 0.0
  %2553 = vmatpush1.msra.mxu0 0.0
  %2554 = vmatprep.subr.mxu0 0.0
  %2555 = vmatpush1.msra.mxu0 0.0
  %2556 = vmatprep.subr.mxu0 0.0
  %2557 = vmatpush1.msra.mxu0 0.0
  %2558 = vmatprep.subr.mxu0 0.0
  %2559 = vmatpush1.msra.mxu0 0.0
  %2560 = vmatprep.subr.mxu0 0.0
  %2561 = vmatpush1.msra.mxu0 0.0
  %2562 = vmatprep.subr.mxu0 0.0
  %2563 = vmatpush1.msra.mxu0 0.0
  %2564 = vmatprep.subr.mxu0 0.0
  %2565 = vmatpush1.msra.mxu0 0.0
  %2566 = vmatprep.subr.mxu0 0.0
  %2567 = vmatpush1.msra.mxu0 0.0
  %2568 = vmatprep.subr.mxu0 0.0
  %2569 = vmatpush1.msra.mxu0 0.0
  %2570 = vmatprep.subr.mxu0 0.0
  %2571 = vmatpush1.msra.mxu0 0.0
  %2572 = vmatprep.subr.mxu0 0.0
  %2573 = vmatpush1.msra.mxu0 0.0
  %2574 = vmatprep.subr.mxu0 0.0
  %2575 = vmatpush1.msra.mxu0 0.0
  %2576 = vmatprep.subr.mxu0 0.0
  %2577 = vmatpush1.msra.mxu0 0.0
  %2578 = vmatprep.subr.mxu0 0.0
  %2579 = vmatpush1.msra.mxu0 0.0
  %2580 = vmatprep.subr.mxu0 0.0
  %2581 = vmatpush1.msra.mxu0 0.0
  %2582 = vmatprep.subr.mxu0 0.0
  %2583 = vmatpush1.msra.mxu0 0.0
  %2584 = vmatprep.subr.mxu0 0.0
  %2585 = vmatpush1.msra.mxu0 0.0
  %2586 = vmatprep.subr.mxu0 0.0
  %2587 = vmatpush1.msra.mxu0 0.0
  %2588 = vmatprep.subr.mxu0 0.0
  %2589 = vmatpush1.msra.mxu0 0.0
  %2590 = vmatprep.subr.mxu0 0.0
  %2591 = vmatpush1.msra.mxu0 0.0
  %2592 = vmatprep.subr.mxu0 0.0
  %2593 = vmatpush1.msra.mxu0 0.0
  %2594 = vmatprep.subr.mxu0 0.0
  %2595 = vmatpush1.msra.mxu0 0.0
  %2596 = vmatprep.subr.mxu0 0.0
  %2597 = vmatpush1.msra.mxu0 0.0
  %2598 = vmatprep.subr.mxu0 0.0
  %2599 = vmatpush1.msra.mxu0 0.0
  %2600 = vmatprep.subr.mxu0 0.0
  %2601 = vmatpush1.msra.mxu0 0.0
  %2602 = vmatprep.subr.mxu0 0.0
  %2603 = vmatpush1.msra.mxu0 0.0
  %2604 = vmatprep.mubr.f32.mxu0 0.0
  %2605 = vmatmul.mubr.f32.gmra.mrb[0].mxu0 %v2447
  %v2606 = vpop.f32.mrb[0].mxu0
  %v2607 = vadd.f32 0.0, %v2606
  %v2608 = vpop.f32.mrb[0].mxu0
  %2609 = vmatprep.mubr.f32.mxu0 0.0
  %2610 = vmatmul.mubr.f32.gmra.mrb[0].mxu0 %v2450
  %v2611 = vpop.f32.mrb[0].mxu0
  %v2612 = vadd.f32 0.0, %v2611
  %v2613 = vpop.f32.mrb[0].mxu0
  %2614 = vdwg.mxu0
  %v2615 = vadd.f32 %v2535, %v2607
  %v2616 = vadd.f32 %v2536, %v2612
  %v2617 = vld [vmem:[%s16] sm:$0x1]
  %v2619 = vlaneseq
  %v2620 = vshrl.u32 %v2619, 7
  %v2621 = vsub.s32 0, %v2620
  %v2622 = vrot.slane %v2617, %v2621
  %v2624 = vadd.f32 %v2615, %v2622
  %v2625 = vadd.f32 %v2616, %v2622
  %v2626 = vadd.f32 %v2624, %v2258
  %v2627 = vadd.f32 %v2625, %v2259
  %v2628 = vmax.f32 %v2626, 0.0
  %v2629 = vmax.f32 %v2627, 0.0
  %v2630 = vld [vmem:[%s17] sm:$0xff]
  %v2631 = vld [vmem:[%s17 + $0x8] sm:$0xff]
  %v2632 = vld [vmem:[%s18] sm:$0x1]
  %v2634 = vlaneseq
  %v2635 = vshrl.u32 %v2634, 7
  %v2636 = vsub.s32 0, %v2635
  %v2637 = vrot.slane %v2632, %v2636
  %v2640 = vsel %vm1809, %v2628, 0
  %v2643 = vsel %vm1809, %v2629, 0
  %2645 = vmatprep.subr.mxu0 0.0
  %2646 = vmatpush1.msra.mxu0 %v2630
  %2647 = vmatprep.subr.mxu0 0.0
  %2648 = vmatpush1.msra.mxu0 %v2631
  %2649 = vmatprep.subr.mxu0 0.0
  %2650 = vmatpush1.msra.mxu0 0.0
  %2651 = vmatprep.subr.mxu0 0.0
  %2652 = vmatpush1.msra.mxu0 0.0
  %2653 = vmatprep.subr.mxu0 0.0
  %2654 = vmatpush1.msra.mxu0 0.0
  %2655 = vmatprep.subr.mxu0 0.0
  %2656 = vmatpush1.msra.mxu0 0.0
  %2657 = vmatprep.subr.mxu0 0.0
  %2658 = vmatpush1.msra.mxu0 0.0
  %2659 = vmatprep.subr.mxu0 0.0
  %2660 = vmatpush1.msra.mxu0 0.0
  %2661 = vmatprep.subr.mxu0 0.0
  %2662 = vmatpush1.msra.mxu0 0.0
  %2663 = vmatprep.subr.mxu0 0.0
  %2664 = vmatpush1.msra.mxu0 0.0
  %2665 = vmatprep.subr.mxu0 0.0
  %2666 = vmatpush1.msra.mxu0 0.0
  %2667 = vmatprep.subr.mxu0 0.0
  %2668 = vmatpush1.msra.mxu0 0.0
  %2669 = vmatprep.subr.mxu0 0.0
  %2670 = vmatpush1.msra.mxu0 0.0
  %2671 = vmatprep.subr.mxu0 0.0
  %2672 = vmatpush1.msra.mxu0 0.0
  %2673 = vmatprep.subr.mxu0 0.0
  %2674 = vmatpush1.msra.mxu0 0.0
  %2675 = vmatprep.subr.mxu0 0.0
  %2676 = vmatpush1.msra.mxu0 0.0
  %2677 = vmatprep.subr.mxu0 0.0
  %2678 = vmatpush1.msra.mxu0 0.0
  %2679 = vmatprep.subr.mxu0 0.0
  %2680 = vmatpush1.msra.mxu0 0.0
  %2681 = vmatprep.subr.mxu0 0.0
  %2682 = vmatpush1.msra.mxu0 0.0
  %2683 = vmatprep.subr.mxu0 0.0
  %2684 = vmatpush1.msra.mxu0 0.0
  %2685 = vmatprep.subr.mxu0 0.0
  %2686 = vmatpush1.msra.mxu0 0.0
  %2687 = vmatprep.subr.mxu0 0.0
  %2688 = vmatpush1.msra.mxu0 0.0
  %2689 = vmatprep.subr.mxu0 0.0
  %2690 = vmatpush1.msra.mxu0 0.0
  %2691 = vmatprep.subr.mxu0 0.0
  %2692 = vmatpush1.msra.mxu0 0.0
  %2693 = vmatprep.subr.mxu0 0.0
  %2694 = vmatpush1.msra.mxu0 0.0
  %2695 = vmatprep.subr.mxu0 0.0
  %2696 = vmatpush1.msra.mxu0 0.0
  %2697 = vmatprep.subr.mxu0 0.0
  %2698 = vmatpush1.msra.mxu0 0.0
  %2699 = vmatprep.subr.mxu0 0.0
  %2700 = vmatpush1.msra.mxu0 0.0
  %2701 = vmatprep.subr.mxu0 0.0
  %2702 = vmatpush1.msra.mxu0 0.0
  %2703 = vmatprep.subr.mxu0 0.0
  %2704 = vmatpush1.msra.mxu0 0.0
  %2705 = vmatprep.subr.mxu0 0.0
  %2706 = vmatpush1.msra.mxu0 0.0
  %2707 = vmatprep.subr.mxu0 0.0
  %2708 = vmatpush1.msra.mxu0 0.0
  %2709 = vmatprep.mubr.f32.mxu0 0.0
  %2710 = vmatmul.mubr.f32.gmra.mrb[0].mxu0 %v2640
  %v2711 = vpop.f32.mrb[0].mxu0
  %v2712 = vadd.f32 %v2637, %v2711
  %v2713 = vpop.f32.mrb[0].mxu0
  %2714 = vmatprep.mubr.f32.mxu0 0.0
  %2715 = vmatmul.mubr.f32.gmra.mrb[0].mxu0 %v2643
  %v2716 = vpop.f32.mrb[0].mxu0
  %v2717 = vadd.f32 %v2637, %v2716
  %v2718 = vpop.f32.mrb[0].mxu0
  %2719 = vdwg.mxu0
  %v2720 = vmax.f32 %v2712, 0.0
  %v2721 = vmax.f32 %v2717, 0.0
  %v2722 = vld [vmem:[%s19] sm:$0xff]
  %v2723 = vld [vmem:[%s20] sm:$0x1]
  %v2725 = vlaneseq
  %v2726 = vshrl.u32 %v2725, 7
  %v2727 = vsub.s32 0, %v2726
  %v2728 = vrot.slane %v2723, %v2727
  %vm2730 = vcmask 64512
  %v2732 = vsel %vm2730, %v2720, 0
  %v2735 = vsel %vm2730, %v2721, 0
  %2737 = vmatprep.subr.mxu0 0.0
  %2738 = vmatpush1.msra.mxu0 %v2722
  %2739 = vmatprep.subr.mxu0 0.0
  %2740 = vmatpush1.msra.mxu0 0.0
  %2741 = vmatprep.subr.mxu0 0.0
  %2742 = vmatpush1.msra.mxu0 0.0
  %2743 = vmatprep.subr.mxu0 0.0
  %2744 = vmatpush1.msra.mxu0 0.0
  %2745 = vmatprep.subr.mxu0 0.0
  %2746 = vmatpush1.msra.mxu0 0.0
  %2747 = vmatprep.subr.mxu0 0.0
  %2748 = vmatpush1.msra.mxu0 0.0
  %2749 = vmatprep.subr.mxu0 0.0
  %2750 = vmatpush1.msra.mxu0 0.0
  %2751 = vmatprep.subr.mxu0 0.0
  %2752 = vmatpush1.msra.mxu0 0.0
  %2753 = vmatprep.subr.mxu0 0.0
  %2754 = vmatpush1.msra.mxu0 0.0
  %2755 = vmatprep.subr.mxu0 0.0
  %2756 = vmatpush1.msra.mxu0 0.0
  %2757 = vmatprep.subr.mxu0 0.0
  %2758 = vmatpush1.msra.mxu0 0.0
  %2759 = vmatprep.subr.mxu0 0.0
  %2760 = vmatpush1.msra.mxu0 0.0
  %2761 = vmatprep.subr.mxu0 0.0
  %2762 = vmatpush1.msra.mxu0 0.0
  %2763 = vmatprep.subr.mxu0 0.0
  %2764 = vmatpush1.msra.mxu0 0.0
  %2765 = vmatprep.subr.mxu0 0.0
  %2766 = vmatpush1.msra.mxu0 0.0
  %2767 = vmatprep.subr.mxu0 0.0
  %2768 = vmatpush1.msra.mxu0 0.0
  %2769 = vmatprep.subr.mxu0 0.0
  %2770 = vmatpush1.msra.mxu0 0.0
  %2771 = vmatprep.subr.mxu0 0.0
  %2772 = vmatpush1.msra.mxu0 0.0
  %2773 = vmatprep.subr.mxu0 0.0
  %2774 = vmatpush1.msra.mxu0 0.0
  %2775 = vmatprep.subr.mxu0 0.0
  %2776 = vmatpush1.msra.mxu0 0.0
  %2777 = vmatprep.subr.mxu0 0.0
  %2778 = vmatpush1.msra.mxu0 0.0
  %2779 = vmatprep.subr.mxu0 0.0
  %2780 = vmatpush1.msra.mxu0 0.0
  %2781 = vmatprep.subr.mxu0 0.0
  %2782 = vmatpush1.msra.mxu0 0.0
  %2783 = vmatprep.subr.mxu0 0.0
  %2784 = vmatpush1.msra.mxu0 0.0
  %2785 = vmatprep.subr.mxu0 0.0
  %2786 = vmatpush1.msra.mxu0 0.0
  %2787 = vmatprep.subr.mxu0 0.0
  %2788 = vmatpush1.msra.mxu0 0.0
  %2789 = vmatprep.subr.mxu0 0.0
  %2790 = vmatpush1.msra.mxu0 0.0
  %2791 = vmatprep.subr.mxu0 0.0
  %2792 = vmatpush1.msra.mxu0 0.0
  %2793 = vmatprep.subr.mxu0 0.0
  %2794 = vmatpush1.msra.mxu0 0.0
  %2795 = vmatprep.subr.mxu0 0.0
  %2796 = vmatpush1.msra.mxu0 0.0
  %2797 = vmatprep.subr.mxu0 0.0
  %2798 = vmatpush1.msra.mxu0 0.0
  %2799 = vmatprep.subr.mxu0 0.0
  %2800 = vmatpush1.msra.mxu0 0.0
  %2801 = vmatprep.mubr.f32.mxu0 0.0
  %2802 = vmatmul.mubr.f32.gmra.mrb[0].mxu0 %v2732
  %v2803 = vpop.f32.mrb[0].mxu0
  %v2804 = vadd.f32 %v2728, %v2803
  %v2805 = vpop.f32.mrb[0].mxu0
  %2806 = vmatprep.mubr.f32.mxu0 0.0
  %2807 = vmatmul.mubr.f32.gmra.mrb[0].mxu0 %v2735
  %v2808 = vpop.f32.mrb[0].mxu0
  %v2809 = vadd.f32 %v2728, %v2808
  %v2810 = vpop.f32.mrb[0].mxu0
  %2811 = vdwg.mxu0
  %v2812 = vld [vmem:[%s21] sm:$0xff]
  %v2813 = vld [vmem:[%s21 + $0x8] sm:$0xff]
  %v2814 = vld [vmem:[%s22] sm:$0x1]
  %v2816 = vlaneseq
  %v2817 = vshrl.u32 %v2816, 7
  %v2818 = vsub.s32 0, %v2817
  %v2819 = vrot.slane %v2814, %v2818
  %2821 = vmatprep.subr.mxu0 0.0
  %2822 = vmatpush1.msra.mxu0 %v2812
  %2823 = vmatprep.subr.mxu0 0.0
  %2824 = vmatpush1.msra.mxu0 %v2813
  %2825 = vmatprep.subr.mxu0 0.0
  %2826 = vmatpush1.msra.mxu0 0.0
  %2827 = vmatprep.subr.mxu0 0.0
  %2828 = vmatpush1.msra.mxu0 0.0
  %2829 = vmatprep.subr.mxu0 0.0
  %2830 = vmatpush1.msra.mxu0 0.0
  %2831 = vmatprep.subr.mxu0 0.0
  %2832 = vmatpush1.msra.mxu0 0.0
  %2833 = vmatprep.subr.mxu0 0.0
  %2834 = vmatpush1.msra.mxu0 0.0
  %2835 = vmatprep.subr.mxu0 0.0
  %2836 = vmatpush1.msra.mxu0 0.0
  %2837 = vmatprep.subr.mxu0 0.0
  %2838 = vmatpush1.msra.mxu0 0.0
  %2839 = vmatprep.subr.mxu0 0.0
  %2840 = vmatpush1.msra.mxu0 0.0
  %2841 = vmatprep.subr.mxu0 0.0
  %2842 = vmatpush1.msra.mxu0 0.0
  %2843 = vmatprep.subr.mxu0 0.0
  %2844 = vmatpush1.msra.mxu0 0.0
  %2845 = vmatprep.subr.mxu0 0.0
  %2846 = vmatpush1.msra.mxu0 0.0
  %2847 = vmatprep.subr.mxu0 0.0
  %2848 = vmatpush1.msra.mxu0 0.0
  %2849 = vmatprep.subr.mxu0 0.0
  %2850 = vmatpush1.msra.mxu0 0.0
  %2851 = vmatprep.subr.mxu0 0.0
  %2852 = vmatpush1.msra.mxu0 0.0
  %2853 = vmatprep.subr.mxu0 0.0
  %2854 = vmatpush1.msra.mxu0 0.0
  %2855 = vmatprep.subr.mxu0 0.0
  %2856 = vmatpush1.msra.mxu0 0.0
  %2857 = vmatprep.subr.mxu0 0.0
  %2858 = vmatpush1.msra.mxu0 0.0
  %2859 = vmatprep.subr.mxu0 0.0
  %2860 = vmatpush1.msra.mxu0 0.0
  %2861 = vmatprep.subr.mxu0 0.0
  %2862 = vmatpush1.msra.mxu0 0.0
  %2863 = vmatprep.subr.mxu0 0.0
  %2864 = vmatpush1.msra.mxu0 0.0
  %2865 = vmatprep.subr.mxu0 0.0
  %2866 = vmatpush1.msra.mxu0 0.0
  %2867 = vmatprep.subr.mxu0 0.0
  %2868 = vmatpush1.msra.mxu0 0.0
  %2869 = vmatprep.subr.mxu0 0.0
  %2870 = vmatpush1.msra.mxu0 0.0
  %2871 = vmatprep.subr.mxu0 0.0
  %2872 = vmatpush1.msra.mxu0 0.0
  %2873 = vmatprep.subr.mxu0 0.0
  %2874 = vmatpush1.msra.mxu0 0.0
  %2875 = vmatprep.subr.mxu0 0.0
  %2876 = vmatpush1.msra.mxu0 0.0
  %2877 = vmatprep.subr.mxu0 0.0
  %2878 = vmatpush1.msra.mxu0 0.0
  %2879 = vmatprep.subr.mxu0 0.0
  %2880 = vmatpush1.msra.mxu0 0.0
  %2881 = vmatprep.subr.mxu0 0.0
  %2882 = vmatpush1.msra.mxu0 0.0
  %2883 = vmatprep.subr.mxu0 0.0
  %2884 = vmatpush1.msra.mxu0 0.0
  %2885 = vmatprep.mubr.f32.mxu0 0.0
  %2886 = vmatmul.mubr.f32.gmra.mrb[0].mxu0 %v2640
  %v2887 = vpop.f32.mrb[0].mxu0
  %v2888 = vadd.f32 %v2819, %v2887
  %v2889 = vpop.f32.mrb[0].mxu0
  %2890 = vmatprep.mubr.f32.mxu0 0.0
  %2891 = vmatmul.mubr.f32.gmra.mrb[0].mxu0 %v2643
  %v2892 = vpop.f32.mrb[0].mxu0
  %v2893 = vadd.f32 %v2819, %v2892
  %v2894 = vpop.f32.mrb[0].mxu0
  %2895 = vdwg.mxu0
  %v2896 = vadd.f32 %v2804, %v2888
  %v2897 = vadd.f32 %v2809, %v2893
  %v2898 = vmax.f32 %v2896, 0.0
  %v2899 = vmax.f32 %v2897, 0.0
  %v2900 = vld [vmem:[%s23] sm:$0xff]
  %v2901 = vld [vmem:[#allocation2] sm:$0x1]
  %v2903 = vlaneseq
  %v2904 = vshrl.u32 %v2903, 7
  %v2905 = vsub.s32 0, %v2904
  %v2906 = vrot.slane %v2901, %v2905
  %v2909 = vsel %vm2730, %v2898, 0
  %v2912 = vsel %vm2730, %v2899, 0
  %2914 = vmatprep.subr.mxu0 0.0
  %2915 = vmatpush1.msra.mxu0 %v2900
  %2916 = vmatprep.subr.mxu0 0.0
  %2917 = vmatpush1.msra.mxu0 0.0
  %2918 = vmatprep.subr.mxu0 0.0
  %2919 = vmatpush1.msra.mxu0 0.0
  %2920 = vmatprep.subr.mxu0 0.0
  %2921 = vmatpush1.msra.mxu0 0.0
  %2922 = vmatprep.subr.mxu0 0.0
  %2923 = vmatpush1.msra.mxu0 0.0
  %2924 = vmatprep.subr.mxu0 0.0
  %2925 = vmatpush1.msra.mxu0 0.0
  %2926 = vmatprep.subr.mxu0 0.0
  %2927 = vmatpush1.msra.mxu0 0.0
  %2928 = vmatprep.subr.mxu0 0.0
  %2929 = vmatpush1.msra.mxu0 0.0
  %2930 = vmatprep.subr.mxu0 0.0
  %2931 = vmatpush1.msra.mxu0 0.0
  %2932 = vmatprep.subr.mxu0 0.0
  %2933 = vmatpush1.msra.mxu0 0.0
  %2934 = vmatprep.subr.mxu0 0.0
  %2935 = vmatpush1.msra.mxu0 0.0
  %2936 = vmatprep.subr.mxu0 0.0
  %2937 = vmatpush1.msra.mxu0 0.0
  %2938 = vmatprep.subr.mxu0 0.0
  %2939 = vmatpush1.msra.mxu0 0.0
  %2940 = vmatprep.subr.mxu0 0.0
  %2941 = vmatpush1.msra.mxu0 0.0
  %2942 = vmatprep.subr.mxu0 0.0
  %2943 = vmatpush1.msra.mxu0 0.0
  %2944 = vmatprep.subr.mxu0 0.0
  %2945 = vmatpush1.msra.mxu0 0.0
  %2946 = vmatprep.subr.mxu0 0.0
  %2947 = vmatpush1.msra.mxu0 0.0
  %2948 = vmatprep.subr.mxu0 0.0
  %2949 = vmatpush1.msra.mxu0 0.0
  %2950 = vmatprep.subr.mxu0 0.0
  %2951 = vmatpush1.msra.mxu0 0.0
  %2952 = vmatprep.subr.mxu0 0.0
  %2953 = vmatpush1.msra.mxu0 0.0
  %2954 = vmatprep.subr.mxu0 0.0
  %2955 = vmatpush1.msra.mxu0 0.0
  %2956 = vmatprep.subr.mxu0 0.0
  %2957 = vmatpush1.msra.mxu0 0.0
  %2958 = vmatprep.subr.mxu0 0.0
  %2959 = vmatpush1.msra.mxu0 0.0
  %2960 = vmatprep.subr.mxu0 0.0
  %2961 = vmatpush1.msra.mxu0 0.0
  %2962 = vmatprep.subr.mxu0 0.0
  %2963 = vmatpush1.msra.mxu0 0.0
  %2964 = vmatprep.subr.mxu0 0.0
  %2965 = vmatpush1.msra.mxu0 0.0
  %2966 = vmatprep.subr.mxu0 0.0
  %2967 = vmatpush1.msra.mxu0 0.0
  %2968 = vmatprep.subr.mxu0 0.0
  %2969 = vmatpush1.msra.mxu0 0.0
  %2970 = vmatprep.subr.mxu0 0.0
  %2971 = vmatpush1.msra.mxu0 0.0
  %2972 = vmatprep.subr.mxu0 0.0
  %2973 = vmatpush1.msra.mxu0 0.0
  %2974 = vmatprep.subr.mxu0 0.0
  %2975 = vmatpush1.msra.mxu0 0.0
  %2976 = vmatprep.subr.mxu0 0.0
  %2977 = vmatpush1.msra.mxu0 0.0
  %2978 = vmatprep.mubr.f32.mxu0 0.0
  %2979 = vmatmul.mubr.f32.gmra.mrb[0].mxu0 %v2909
  %v2980 = vpop.f32.mrb[0].mxu0
  %v2981 = vadd.f32 %v2906, %v2980
  %v2982 = vpop.f32.mrb[0].mxu0
  %2983 = vmatprep.mubr.f32.mxu0 0.0
  %2984 = vmatmul.mubr.f32.gmra.mrb[0].mxu0 %v2912
  %v2985 = vpop.f32.mrb[0].mxu0
  %v2986 = vadd.f32 %v2906, %v2985
  %v2987 = vpop.f32.mrb[0].mxu0
  %2988 = vdwg.mxu0
  %vm2989 = vcmask 7168
  %2990 = vst.msk [vmem:[%s25] sm:$0xff] %vm2989, %v2981
  %2991 = vst.msk [vmem:[%s25 + $0x8] sm:$0xff] %vm2989, %v2986
  // Predicated region
  $region102: #{tpu_custom_call.1} parent=0 // pred_check
    _
  $region103: #{tpu_custom_call.1} parent=0 // pred_check_branch
    %2993 = sbr.rel (0) target = $region105
  $region104: #{tpu_custom_call.1} parent=0 // pred_region
    _
  $region105: #{tpu_custom_call.1} parent=0 // pred_fallthru
    _
  // Predicated region
  $region106: #{tpu_custom_call.1} parent=0 // pred_check
    _
  $region107: #{tpu_custom_call.1} parent=0 // pred_check_branch
    %2995 = sbr.rel (0) target = $region109
  $region108: #{tpu_custom_call.1} parent=0 // pred_region
    _
  $region109: #{tpu_custom_call.1} parent=0 // pred_fallthru
    _

</llo_original>
